<compile_context>
chip_gen: v5e
topology: v5e:2x2
jax: 0.10.0
libtpu: 0.0.40
codegen_flags: <defaults>
</compile_context>

<pallas_src>
import math
import functools

import jax
import jax.numpy as jnp
from jax.experimental import pallas as pl
from jax.experimental.pallas import tpu as pltpu

LOG2 = math.log(2.0)


def _ssp(x):
    # shifted_softplus(x) = softplus(x) - log(2)
    return jax.nn.softplus(x) - LOG2


def _dot(a, b):
    # default precision, f32 accumulate (single MXU pass for bf16 operands)
    return jnp.dot(a, b, preferred_element_type=jnp.float32)


def _round_up(x, m):
    return ((x + m - 1) // m) * m


def _pad_rows(a, to):
    if a.shape[0] == to:
        return a
    return jnp.pad(a, ((0, to - a.shape[0]),) + ((0, 0),) * (a.ndim - 1))


def _pad_to(a, shape):
    pads = [(0, s - d) for d, s in zip(a.shape, shape)]
    return jnp.pad(a, pads)


def _vmem_budget():
    """(vmem_limit_bytes, max_edge_tile) derived from the chip's VMEM size."""
    cap = 128 * 1024 * 1024
    try:
        cap = int(getattr(pltpu.get_tpu_info(), "vmem_capacity_bytes", cap))
    except Exception:
        pass
    if cap <= 80 * 1024 * 1024:          # v7x-class: 64 MiB per TensorCore
        return 44 * 1024 * 1024, 512
    return 64 * 1024 * 1024, 1024        # v5e / v6e: 128 MiB


# ----------------------------------------------------------------------------
# Kernel 1: fused SchNet interaction stack, grid = (molecule, layer, edge_tile)
#   - rbf + cosine cutoff + edge mask computed in-kernel (EUP)
#   - h resident in the output block across (layer, edge_tile)
#   - gather/scatter via bf16 one-hot matmuls over the molecule's nodes only
# ----------------------------------------------------------------------------
def _interaction_kernel(h0_ref, radial_ref, emask_ref, row_ref, col_ref, offs_ref,
                        w_in2f_ref, w_f1_ref, b_f1_ref, w_f2_ref, b_f2_ref,
                        w_o1_ref, b_o1_ref, w_o2_ref, b_o2_ref,
                        out_ref, x_scr, m_scr, *, coeff, cutoff):
    l = pl.program_id(1)
    k = pl.program_id(2)
    last_k = pl.num_programs(2) - 1
    Nn = out_ref.shape[0]
    TE = radial_ref.shape[0]

    # h lives in the (resident, per-molecule) output block across all layers
    @pl.when((l == 0) & (k == 0))
    def _():
        out_ref[...] = h0_ref[...]

    # per-layer setup: in2f projection of h, zero the segment-sum accumulator
    @pl.when(k == 0)
    def _():
        x_scr[...] = _dot(out_ref[...], w_in2f_ref[...]).astype(jnp.bfloat16)
        m_scr[...] = jnp.zeros_like(m_scr)

    # fused Gaussian RBF + cosine cutoff (+ edge mask) for this edge tile
    d = radial_ref[...]                                     # [TE, 1]
    em = emask_ref[...]                                     # [TE, 1]
    rbf = jnp.exp(coeff * (d - offs_ref[...]) ** 2)         # [TE, n_rbf]
    dcut = 0.5 * (jnp.cos(d * (math.pi / cutoff)) + 1.0)
    # edge mask MUST stay folded into dcut: padded edges -> x_ij == 0
    dcut = dcut * (d < cutoff).astype(jnp.float32) * em     # [TE, 1]

    # filter network: Dense(n_rbf, HF, ssp) -> Dense(HF, HF), then cutoff
    w = _ssp(_dot(rbf, w_f1_ref[...]) + b_f1_ref[...])
    w = _dot(w, w_f2_ref[...]) + b_f2_ref[...]
    w = w * dcut                                            # [TE, HF]

    # gather x[idx_j] via bf16 one-hot matmul over this molecule's nodes
    col = col_ref[...]                                      # [TE, 1]
    ids_e = jax.lax.broadcasted_iota(jnp.int32, (TE, Nn), 1)
    col_oh = (ids_e == col).astype(jnp.bfloat16)            # [TE, Nn]
    x_j = _dot(col_oh, x_scr[...])                          # [TE, HF] f32
    x_ij = x_j * w

    # scatter-add to idx_i: one-hot built pre-transposed -> plain jnp.dot
    ids_n = jax.lax.broadcasted_iota(jnp.int32, (Nn, TE), 0)
    row_oh_t = (ids_n == row_ref[...]).astype(jnp.bfloat16)   # [Nn, TE]
    m_scr[...] += _dot(row_oh_t, x_ij.astype(jnp.bfloat16))   # [Nn, HF]

    # finalize layer: f2out MLP + residual
    @pl.when(k == last_k)
    def _():
        m = _ssp(_dot(m_scr[...], w_o1_ref[...]) + b_o1_ref[...])
        m = _dot(m, w_o2_ref[...]) + b_o2_ref[...]
        out_ref[...] = out_ref[...] + m


def interaction_stack(h0, radial, emask, row_t, col, offsets, pp,
                      coeff, cutoff, tile_e, vmem_limit):
    B, Nn_pad, HF = h0.shape
    Em_pad = radial.shape[1]
    n_rbf = offsets.shape[1]
    L = pp["w_in2f"].shape[0]
    n_et = Em_pad // tile_e

    mol_node = lambda: pl.BlockSpec((None, Nn_pad, HF), lambda b, l, k: (b, 0, 0))
    edge_col = lambda: pl.BlockSpec((None, tile_e, 1), lambda b, l, k: (b, k, 0))
    w_spec = lambda s: pl.BlockSpec((None,) + s, lambda b, l, k: (l, 0, 0))

    in_specs = [
        mol_node(),                                                  # h0
        edge_col(),                                                  # radial
        edge_col(),                                                  # edge mask
        pl.BlockSpec((None, 1, tile_e), lambda b, l, k: (b, 0, k)),  # local idx_i (pre-T)
        edge_col(),                                                  # local idx_j
        pl.BlockSpec((1, n_rbf), lambda b, l, k: (0, 0)),            # rbf offsets
        w_spec((HF, HF)),                                            # w_in2f
        w_spec((n_rbf, HF)), w_spec((1, HF)),                        # filter dense 1
        w_spec((HF, HF)), w_spec((1, HF)),                           # filter dense 2
        w_spec((HF, HF)), w_spec((1, HF)),                           # f2out dense 1
        w_spec((HF, HF)), w_spec((1, HF)),                           # f2out dense 2
    ]
    out_spec = pl.BlockSpec((None, Nn_pad, HF), lambda b, l, k: (b, 0, 0))

    flops = 2 * L * B * (2 * Em_pad * Nn_pad * HF            # one-hot gather + scatter
                         + Em_pad * (n_rbf * HF + HF * HF)   # filter net
                         + 3 * Nn_pad * HF * HF)             # in2f + f2out
    weight_bytes = 4 * L * B * (4 * HF * HF + n_rbf * HF + 4 * HF)  # re-read per molecule
    edge_bytes = 4 * L * B * Em_pad * 4                      # radial/mask/idx re-read per layer
    h_bytes = 4 * B * Nn_pad * HF * 2
    cost = pl.CostEstimate(
        flops=int(flops),
        transcendentals=int(L * B * Em_pad * (n_rbf + 1 + HF)),
        bytes_accessed=int(weight_bytes + edge_bytes + h_bytes))

    return pl.pallas_call(
        functools.partial(_interaction_kernel, coeff=coeff, cutoff=cutoff),
        grid=(B, L, n_et),
        in_specs=in_specs,
        out_specs=out_spec,
        out_shape=jax.ShapeDtypeStruct((B, Nn_pad, HF), jnp.float32),
        scratch_shapes=[pltpu.VMEM((Nn_pad, HF), jnp.bfloat16),   # x = in2f(h)
                        pltpu.VMEM((Nn_pad, HF), jnp.float32)],   # segment sum
        compiler_params=pltpu.CompilerParams(
            dimension_semantics=("parallel", "arbitrary", "arbitrary"),
            vmem_limit_bytes=vmem_limit),
        cost_estimate=cost,
    )(h0, radial, emask, row_t, col, offsets,
      pp["w_in2f"], pp["w_f1"], pp["b_f1"], pp["w_f2"], pp["b_f2"],
      pp["w_o1"], pp["b_o1"], pp["w_o2"], pp["b_o2"])


# ----------------------------------------------------------------------------
# Kernel 2: group head (atom mask, group segment-sum, decoder MLP, group mask)
#           grid = (group_edge_tile,), accumulator in VMEM scratch
# ----------------------------------------------------------------------------
def _group_head_kernel(h_ref, amask_ref, gsrc_ref, gdst_ref, gvalid_ref,
                       gmask_ref, wd1_ref, bd1_ref, wd2_ref, bd2_ref,
                       out_ref, hm_scr, hc_scr):
    k = pl.program_id(0)
    last_k = pl.num_programs(0) - 1
    N = h_ref.shape[0]
    TG = gsrc_ref.shape[0]

    @pl.when(k == 0)
    def _():
        hm_scr[...] = (h_ref[...] * amask_ref[...]).astype(jnp.bfloat16)
        hc_scr[...] = jnp.zeros_like(hc_scr)

    # gather h[group_adj[0]] (bf16 one-hot), zero out padded group edges
    src = gsrc_ref[...]                               # [TG, 1]
    ids_g = jax.lax.broadcasted_iota(jnp.int32, (TG, N), 1)
    src_oh = (ids_g == src).astype(jnp.bfloat16)      # [TG, N]
    hg = _dot(src_oh, hm_scr[...]) * gvalid_ref[...]  # [TG, HF]

    # scatter-add to group_adj[1] with a pre-transposed one-hot
    ids_n = jax.lax.broadcasted_iota(jnp.int32, (N, TG), 0)
    dst_oh_t = (ids_n == gdst_ref[...]).astype(jnp.bfloat16)   # [N, TG]
    hc_scr[...] += _dot(dst_oh_t, hg.astype(jnp.bfloat16))     # [N, HF]

    # decoder: Dense(HF, HF//2, ssp) -> Dense(HF//2, 1), then group mask
    @pl.when(k == last_k)
    def _():
        y = _ssp(_dot(hc_scr[...], wd1_ref[...]) + bd1_ref[...])
        y = _dot(y, wd2_ref[...]) + bd2_ref[...]      # [N, 1]
        out_ref[...] = y * gmask_ref[...]


def group_head(h, atom_mask, gsrc, gdst_t, gvalid, group_mask, pp,
               tile_g, vmem_limit):
    N_pad, HF = h.shape
    G_pad = gsrc.shape[0]
    n_hid = pp["wd1"].shape[1]
    n_gt = G_pad // tile_g

    in_specs = [
        pl.BlockSpec((N_pad, HF), lambda k: (0, 0)),          # h
        pl.BlockSpec((N_pad, 1), lambda k: (0, 0)),           # atom mask
        pl.BlockSpec((tile_g, 1), lambda k: (k, 0)),          # group src
        pl.BlockSpec((1, tile_g), lambda k: (0, k)),          # group dst (T)
        pl.BlockSpec((tile_g, 1), lambda k: (k, 0)),          # group-edge valid
        pl.BlockSpec((N_pad, 1), lambda k: (0, 0)),           # group mask
        pl.BlockSpec((HF, n_hid), lambda k: (0, 0)),          # wd1
        pl.BlockSpec((1, n_hid), lambda k: (0, 0)),           # bd1
        pl.BlockSpec((n_hid, 1), lambda k: (0, 0)),           # wd2
        pl.BlockSpec((1, 1), lambda k: (0, 0)),               # bd2
    ]
    return pl.pallas_call(
        _group_head_kernel,
        grid=(n_gt,),
        in_specs=in_specs,
        out_specs=pl.BlockSpec((N_pad, 1), lambda k: (0, 0)),
        out_shape=jax.ShapeDtypeStruct((N_pad, 1), jnp.float32),
        scratch_shapes=[pltpu.VMEM((N_pad, HF), jnp.bfloat16),
                        pltpu.VMEM((N_pad, HF), jnp.float32)],
        compiler_params=pltpu.CompilerParams(
            dimension_semantics=("arbitrary",),
            vmem_limit_bytes=vmem_limit),
    )(h, atom_mask, gsrc, gdst_t, gvalid, group_mask,
      pp["wd1"], pp["bd1"], pp["wd2"], pp["bd2"])


# ----------------------------------------------------------------------------
# Parameter packing: stack layers [L, ...] and zero-pad feature dim to 128
# (zero padding is exactly preserved through the ssp MLPs -> same results)
# ----------------------------------------------------------------------------
def prepare_pallas_params(params, n_hf, n_rbf):
    HF = _round_up(n_hf, 128)
    layers = params["layers"]

    def stack(key, shape):
        return jnp.stack([_pad_to(p[key], shape) for p in layers])

    return {
        "hf_pad": HF,
        "embedding": _pad_to(params["embedding"],
                             (params["embedding"].shape[0], HF)),
        "rbf_offsets": params["rbf_offsets"],
        "w_in2f": stack("w_in2f", (HF, HF)),
        "w_f1": stack("w_f1", (n_rbf, HF)),
        "b_f1": stack("b_f1", (1, HF)),
        "w_f2": stack("w_f2", (HF, HF)),
        "b_f2": stack("b_f2", (1, HF)),
        "w_o1": stack("w_o1", (HF, HF)),
        "b_o1": stack("b_o1", (1, HF)),
        "w_o2": stack("w_o2", (HF, HF)),
        "b_o2": stack("b_o2", (1, HF)),
        "wd1": _pad_to(params["wd1"], (HF, params["wd1"].shape[1])),
        "bd1": params["bd1"],
        "wd2": params["wd2"],
        "bd2": params["bd2"],
    }


# ----------------------------------------------------------------------------
# Full SchNet_group forward
# ----------------------------------------------------------------------------
def schnet_group_forward(pp, z, coord, edge_index, n_nodes,
                         atom_mask, edge_mask, group_adj, group_mask,
                         *, cutoff, n_rbf):
    N = z.shape[0]
    E = edge_index.shape[1]
    G = group_adj.shape[1]
    HF = pp["hf_pad"]
    B = N // n_nodes
    Nn_pad = _round_up(n_nodes, 128)
    vmem_limit, max_tile_e = _vmem_budget()

    row = edge_index[0].astype(jnp.int32)
    col = edge_index[1].astype(jnp.int32)

    # glue: pairwise distances (tiny gathers on coord)
    diff = coord[row] - coord[col]
    radial = jnp.sqrt(jnp.sum(diff * diff, axis=1, keepdims=True))   # [E, 1]

    # glue: embedding lookup (padding_idx=0 handled by zeroed table row),
    # laid out per molecule with the node dim padded to 128
    h0 = pp["embedding"][z].reshape(B, n_nodes, HF)
    h0 = jnp.pad(h0, ((0, 0), (0, Nn_pad - n_nodes), (0, 0)))

    # glue: partition edges per molecule (block-diagonal graph structure)
    mol = row // n_nodes
    lrow = (row % n_nodes).astype(jnp.int32)
    lcol = (col % n_nodes).astype(jnp.int32)
    Em_max = max(1, min(E, n_nodes * n_nodes))
    tile_e = min(max_tile_e, _round_up(Em_max, 128))
    Em_pad = _round_up(Em_max, tile_e)

    counts = jnp.bincount(mol, length=B)
    order = jnp.argsort(mol)                              # stable sort by molecule
    starts = (jnp.cumsum(counts) - counts).astype(jnp.int32)
    mol_sorted = mol[order].astype(jnp.int32)
    pos = jnp.arange(E, dtype=jnp.int32) - starts[mol_sorted]
    dest = mol_sorted * Em_pad + pos

    def to_mol(v, dtype):
        flat = jnp.zeros((B * Em_pad, 1), dtype)
        flat = flat.at[dest].set(v[order].reshape(E, 1).astype(dtype), mode="drop")
        return flat.reshape(B, Em_pad, 1)

    radial_pm = to_mol(radial[:, 0], jnp.float32)                     # [B, Em_pad, 1]
    emask_pm = to_mol(edge_mask[:, 0], jnp.float32)                   # padded edges -> 0
    lcol_pm = to_mol(lcol, jnp.int32)                                 # [B, Em_pad, 1]
    lrow_pm = jnp.transpose(to_mol(lrow, jnp.int32), (0, 2, 1))       # [B, 1, Em_pad]

    width = cutoff / (n_rbf - 1)
    coeff = -0.5 / (width * width)

    # Pallas: fused interaction stack (all layers + in-kernel RBF/cutoff)
    h_pm = interaction_stack(h0, radial_pm, emask_pm, lrow_pm, lcol_pm,
                             pp["rbf_offsets"], pp, coeff, cutoff,
                             tile_e, vmem_limit)                      # [B, Nn_pad, HF]
    h = h_pm[:, :n_nodes, :].reshape(N, HF)

    # group-edge padding / tiling (group head kept global; it is cheap)
    N_pad = _round_up(N, 128)
    tile_g = min(max_tile_e, _round_up(max(G, 1), 128))
    G_pad = _round_up(G, tile_g)
    gsrc = jnp.pad(group_adj[0].astype(jnp.int32), (0, G_pad - G)).reshape(G_pad, 1)
    gdst_t = jnp.pad(group_adj[1].astype(jnp.int32), (0, G_pad - G)).reshape(1, G_pad)
    gvalid = (jnp.arange(G_pad) < G).astype(jnp.float32).reshape(G_pad, 1)

    h_p = _pad_rows(h, N_pad)
    amask_p = _pad_rows(atom_mask, N_pad)
    gmask_p = _pad_rows(group_mask, N_pad)

    # Pallas: group head
    gc_pad = group_head(h_p, amask_p, gsrc, gdst_t, gvalid, gmask_p, pp,
                        tile_g, vmem_limit)

    # glue: view(-1, n_nodes) + sum
    gc = gc_pad[:N].reshape(-1, n_nodes)                              # [B, n_nodes]
    pred = jnp.sum(gc, axis=1)                                        # [B]
    return pred, gc


# ----------------------------------------------------------------------------
# Pure-JAX reference (mirrors the PyTorch semantics) for correctness check
# ----------------------------------------------------------------------------
def ref_forward(params, z, coord, edge_index, n_nodes,
                atom_mask, edge_mask, group_adj, group_mask, *, cutoff, n_rbf):
    row, col = edge_index[0], edge_index[1]
    coord_diff = coord[row] - coord[col]
    radial = jnp.sqrt(jnp.sum(coord_diff ** 2, axis=1, keepdims=True))
    h = params["embedding"][z]
    width = cutoff / (n_rbf - 1)
    coeff = -0.5 / (width * width)
    rbf = jnp.exp(coeff * (radial - params["rbf_offsets"]) ** 2) * edge_mask
    dist_cut = 0.5 * (jnp.cos(radial * jnp.pi / cutoff) + 1.0)
    dist_cut = dist_cut * (radial < cutoff).astype(jnp.float32) * edge_mask
    for p in params["layers"]:
        x = h @ p["w_in2f"]
        w = _ssp(rbf @ p["w_f1"] + p["b_f1"]) @ p["w_f2"] + p["b_f2"]
        w = w * dist_cut
        x_ij = x[col] * w
        m = jnp.zeros_like(x).at[row].add(x_ij)
        m = _ssp(m @ p["w_o1"] + p["b_o1"]) @ p["w_o2"] + p["b_o2"]
        h = h + m
    h = h * atom_mask
    hc = jnp.zeros_like(h).at[group_adj[1]].add(h[group_adj[0]])
    gc = _ssp(hc @ params["wd1"] + params["bd1"]) @ params["wd2"] + params["bd2"]
    gc = gc * group_mask
    gc = gc.reshape(-1, n_nodes)
    pred = jnp.sum(gc, axis=1)
    return pred, gc


# ----------------------------------------------------------------------------
# Deterministic parameter init (synthetic; shapes from the module __init__)
# ----------------------------------------------------------------------------
def init_params(key, n_hf, n_rbf, n_interactions, max_z, cutoff):
    keys = jax.random.split(key, 2 + n_interactions)
    emb = 0.1 * jax.random.normal(keys[0], (max_z, n_hf), jnp.float32)
    emb = emb.at[0].set(0.0)  # padding_idx=0
    offsets = jnp.linspace(0.0, cutoff, n_rbf, dtype=jnp.float32)[None, :]
    layers = []
    for li in range(n_interactions):
        lk = jax.random.split(keys[1 + li], 5)
        layers.append({
            "w_in2f": 0.1 * jax.random.normal(lk[0], (n_hf, n_hf), jnp.float32),
            "w_f1": 0.1 * jax.random.normal(lk[1], (n_rbf, n_hf), jnp.float32),
            "b_f1": jnp.zeros((1, n_hf), jnp.float32),
            "w_f2": 0.1 * jax.random.normal(lk[2], (n_hf, n_hf), jnp.float32),
            "b_f2": jnp.zeros((1, n_hf), jnp.float32),
            "w_o1": 0.1 * jax.random.normal(lk[3], (n_hf, n_hf), jnp.float32),
            "b_o1": jnp.zeros((1, n_hf), jnp.float32),
            "w_o2": 0.1 * jax.random.normal(lk[4], (n_hf, n_hf), jnp.float32),
            "b_o2": jnp.zeros((1, n_hf), jnp.float32),
        })
    n_hid = max(1, n_hf // 2)
    dk = jax.random.split(keys[1 + n_interactions], 2)
    return {
        "embedding": emb,
        "rbf_offsets": offsets,
        "layers": layers,
        "wd1": 0.1 * jax.random.normal(dk[0], (n_hf, n_hid), jnp.float32),
        "bd1": jnp.zeros((1, n_hid), jnp.float32),
        "wd2": 0.1 * jax.random.normal(dk[1], (n_hid, 1), jnp.float32),
        "bd2": jnp.zeros((1, 1), jnp.float32),
    }


if __name__ == "__main__":
    key = jax.random.PRNGKey(0)
    B, n_nodes = 2, 8
    N = B * n_nodes
    n_hf, n_rbf = 32, 16
    cutoff = 5.0
    n_interactions = 2
    max_z = 100

    k_p, k_z, k_c = jax.random.split(key, 3)
    params = init_params(k_p, n_hf, n_rbf, n_interactions, max_z, cutoff)
    pparams = prepare_pallas_params(params, n_hf, n_rbf)

    z = jax.random.randint(k_z, (N,), 1, max_z, dtype=jnp.int32)
    coord = 2.0 * jax.random.normal(k_c, (N, 3), jnp.float32)

    # fully-connected edges within each molecule (no self edges)
    rows, cols = [], []
    for b in range(B):
        for i in range(n_nodes):
            for j in range(n_nodes):
                if i != j:
                    rows.append(b * n_nodes + i)
                    cols.append(b * n_nodes + j)
    edge_index = jnp.array([rows, cols], dtype=jnp.int32)       # [2, E]
    E = edge_index.shape[1]

    atom_mask = jnp.ones((N, 1), jnp.float32)
    edge_mask = jnp.ones((E, 1), jnp.float32)

    # each atom contributes to the group anchored at its even-index partner
    g_src = jnp.arange(N, dtype=jnp.int32)
    g_dst = (jnp.arange(N, dtype=jnp.int32) // 2) * 2
    group_adj = jnp.stack([g_src, g_dst], axis=0)               # [2, N]
    group_mask = (jnp.arange(N) % 2 == 0).astype(jnp.float32)[:, None]

    pred, gc = schnet_group_forward(pparams, z, coord, edge_index, n_nodes,
                                    atom_mask, edge_mask, group_adj, group_mask,
                                    cutoff=cutoff, n_rbf=n_rbf)
    jax.block_until_ready((pred, gc))

    pred_ref, gc_ref = ref_forward(params, z, coord, edge_index, n_nodes,
                                   atom_mask, edge_mask, group_adj, group_mask,
                                   cutoff=cutoff, n_rbf=n_rbf)
    assert pred.shape == (B,) and gc.shape == (B, n_nodes)
    assert jnp.allclose(gc, gc_ref, rtol=5e-3, atol=5e-3), "gc mismatch"
    assert jnp.allclose(pred, pred_ref, rtol=5e-3, atol=5e-3), "pred mismatch"
    print("KERNEL_OK")
</pallas_src>

<mosaic_0001>
module attributes {stable_mosaic.version = 11 : i64} {
  func.func @_interaction_kernel(%arg0: i32, %arg1: i32, %arg2: i32, %arg3: memref<1x128x128xf32, #tpu.memory_space<vmem>>, %arg4: memref<1x128x1xf32, #tpu.memory_space<vmem>>, %arg5: memref<1x128x1xf32, #tpu.memory_space<vmem>>, %arg6: memref<1x1x128xi32, #tpu.memory_space<vmem>>, %arg7: memref<1x128x1xi32, #tpu.memory_space<vmem>>, %arg8: memref<1x16xf32, #tpu.memory_space<vmem>>, %arg9: memref<1x128x128xf32, #tpu.memory_space<vmem>>, %arg10: memref<1x16x128xf32, #tpu.memory_space<vmem>>, %arg11: memref<1x1x128xf32, #tpu.memory_space<vmem>>, %arg12: memref<1x128x128xf32, #tpu.memory_space<vmem>>, %arg13: memref<1x1x128xf32, #tpu.memory_space<vmem>>, %arg14: memref<1x128x128xf32, #tpu.memory_space<vmem>>, %arg15: memref<1x1x128xf32, #tpu.memory_space<vmem>>, %arg16: memref<1x128x128xf32, #tpu.memory_space<vmem>>, %arg17: memref<1x1x128xf32, #tpu.memory_space<vmem>>, %arg18: memref<1x128x128xf32, #tpu.memory_space<vmem>>, %arg19: memref<128x128xbf16, #tpu.memory_space<vmem>>, %arg20: memref<128x128xf32, #tpu.memory_space<vmem>>) attributes {dimension_semantics = [#tpu.dimension_semantics<parallel>, #tpu.dimension_semantics<arbitrary>, #tpu.dimension_semantics<arbitrary>], iteration_bounds = array<i64: 2, 2, 1>, scalar_prefetch = 0 : i64, scratch_operands = 2 : i64, tpu.core_type = #tpu.core_type<tc>, window_params = [{transform_indices = @transform_0, window_bounds = array<i64: 1, 128, 128>}, {transform_indices = @transform_1, window_bounds = array<i64: 1, 128, 1>}, {transform_indices = @transform_2, window_bounds = array<i64: 1, 128, 1>}, {transform_indices = @transform_3, window_bounds = array<i64: 1, 1, 128>}, {transform_indices = @transform_4, window_bounds = array<i64: 1, 128, 1>}, {pipeline_mode = #tpu.pipeline_mode<synchronous>, transform_indices = @transform_5, window_bounds = array<i64: 1, 16>}, {transform_indices = @transform_6, window_bounds = array<i64: 1, 128, 128>}, {transform_indices = @transform_7, window_bounds = array<i64: 1, 16, 128>}, {transform_indices = @transform_8, window_bounds = array<i64: 1, 1, 128>}, {transform_indices = @transform_9, window_bounds = array<i64: 1, 128, 128>}, {transform_indices = @transform_10, window_bounds = array<i64: 1, 1, 128>}, {transform_indices = @transform_11, window_bounds = array<i64: 1, 128, 128>}, {transform_indices = @transform_12, window_bounds = array<i64: 1, 1, 128>}, {transform_indices = @transform_13, window_bounds = array<i64: 1, 128, 128>}, {transform_indices = @transform_14, window_bounds = array<i64: 1, 1, 128>}, {transform_indices = @transform_15, window_bounds = array<i64: 1, 128, 128>}]} {
    %c0_i32 = arith.constant 0 : i32
    %0 = arith.cmpi eq, %arg1, %c0_i32 : i32
    %c0_i32_0 = arith.constant 0 : i32
    %1 = arith.cmpi eq, %arg2, %c0_i32_0 : i32
    %2 = arith.andi %0, %1 : i1
    %3 = arith.extui %2 : i1 to i32
    %c0_i32_1 = arith.constant 0 : i32
    %4 = arith.cmpi ne, %3, %c0_i32_1 : i32
    scf.if %4 {
      %c0_48 = arith.constant 0 : index
      %c0_49 = arith.constant 0 : index
      %c0_50 = arith.constant 0 : index
      %92 = vector.load %arg3[%c0_48, %c0_49, %c0_50] : memref<1x128x128xf32, #tpu.memory_space<vmem>>, vector<1x128x128xf32>
      %93 = vector.shape_cast %92 : vector<1x128x128xf32> to vector<128x128xf32>
      %c0_51 = arith.constant 0 : index
      %c0_52 = arith.constant 0 : index
      %c0_53 = arith.constant 0 : index
      %94 = vector.load %arg18[%c0_51, %c0_52, %c0_53] : memref<1x128x128xf32, #tpu.memory_space<vmem>>, vector<1x128x128xf32>
      %95 = vector.shape_cast %94 : vector<1x128x128xf32> to vector<128x128xf32>
      %96 = vector.shape_cast %93 : vector<128x128xf32> to vector<1x128x128xf32>
      tpu.vector_store %arg18[%c0_51, %c0_52, %c0_53], %96 {strides = array<i32>} : memref<1x128x128xf32, #tpu.memory_space<vmem>>, vector<1x128x128xf32>,
    } else {
    }
    %c0_i32_2 = arith.constant 0 : i32
    %5 = arith.cmpi eq, %arg2, %c0_i32_2 : i32
    %6 = arith.extui %5 : i1 to i32
    %c0_i32_3 = arith.constant 0 : i32
    %7 = arith.cmpi ne, %6, %c0_i32_3 : i32
    scf.if %7 {
      %c0_48 = arith.constant 0 : index
      %c0_49 = arith.constant 0 : index
      %c0_50 = arith.constant 0 : index
      %92 = vector.load %arg18[%c0_48, %c0_49, %c0_50] : memref<1x128x128xf32, #tpu.memory_space<vmem>>, vector<1x128x128xf32>
      %93 = vector.shape_cast %92 : vector<1x128x128xf32> to vector<128x128xf32>
      %c0_51 = arith.constant 0 : index
      %c0_52 = arith.constant 0 : index
      %c0_53 = arith.constant 0 : index
      %94 = vector.load %arg9[%c0_51, %c0_52, %c0_53] : memref<1x128x128xf32, #tpu.memory_space<vmem>>, vector<1x128x128xf32>
      %95 = vector.shape_cast %94 : vector<1x128x128xf32> to vector<128x128xf32>
      %cst_54 = arith.constant dense<0.000000e+00> : vector<128x128xf32>
      %96 = tpu.matmul %93, %95, %cst_54 {dimension_numbers = #tpu.dot_dimension_numbers<[1], [0], [0], [1], [0, 0, 1, 1], [], []>} : vector<128x128xf32>, vector<128x128xf32>, vector<128x128xf32> -> vector<128x128xf32>
      %97 = arith.truncf %96 : vector<128x128xf32> to vector<128x128xbf16>
      %c0_55 = arith.constant 0 : index
      %c0_56 = arith.constant 0 : index
      %98 = vector.load %arg19[%c0_55, %c0_56] : memref<128x128xbf16, #tpu.memory_space<vmem>>, vector<128x128xbf16>
      tpu.vector_store %arg19[%c0_55, %c0_56], %97 {strides = array<i32>} : memref<128x128xbf16, #tpu.memory_space<vmem>>, vector<128x128xbf16>,
      %cst_57 = arith.constant 0.000000e+00 : f32
      %99 = vector.broadcast %cst_57 : f32 to vector<128x128xf32>
      %c0_58 = arith.constant 0 : index
      %c0_59 = arith.constant 0 : index
      %100 = vector.load %arg20[%c0_58, %c0_59] : memref<128x128xf32, #tpu.memory_space<vmem>>, vector<128x128xf32>
      tpu.vector_store %arg20[%c0_58, %c0_59], %99 {strides = array<i32>} : memref<128x128xf32, #tpu.memory_space<vmem>>, vector<128x128xf32>,
    } else {
    }
    %c0 = arith.constant 0 : index
    %c0_4 = arith.constant 0 : index
    %c0_5 = arith.constant 0 : index
    %8 = vector.load %arg4[%c0, %c0_4, %c0_5] : memref<1x128x1xf32, #tpu.memory_space<vmem>>, vector<1x128x1xf32>
    %9 = vector.shape_cast %8 : vector<1x128x1xf32> to vector<128x1xf32>
    %c0_6 = arith.constant 0 : index
    %c0_7 = arith.constant 0 : index
    %c0_8 = arith.constant 0 : index
    %10 = vector.load %arg5[%c0_6, %c0_7, %c0_8] : memref<1x128x1xf32, #tpu.memory_space<vmem>>, vector<1x128x1xf32>
    %11 = vector.shape_cast %10 : vector<1x128x1xf32> to vector<128x1xf32>
    %c0_9 = arith.constant 0 : index
    %c0_10 = arith.constant 0 : index
    %12 = vector.load %arg8[%c0_9, %c0_10] : memref<1x16xf32, #tpu.memory_space<vmem>>, vector<1x16xf32>
    %13 = vector.broadcast %9 : vector<128x1xf32> to vector<128x16xf32>
    %14 = vector.broadcast %12 : vector<1x16xf32> to vector<128x16xf32>
    %15 = arith.subf %13, %14 : vector<128x16xf32>
    %16 = arith.mulf %15, %15 : vector<128x16xf32>
    %cst = arith.constant -4.500000e+00 : f32
    %17 = vector.broadcast %cst : f32 to vector<128x16xf32>
    %18 = arith.mulf %17, %16 : vector<128x16xf32>
    %19 = math.exp %18 : vector<128x16xf32>
    %cst_11 = arith.constant 0.628318548 : f32
    %20 = vector.broadcast %cst_11 : f32 to vector<128x1xf32>
    %21 = arith.mulf %9, %20 : vector<128x1xf32>
    %22 = math.cos %21 : vector<128x1xf32>
    %cst_12 = arith.constant 1.000000e+00 : f32
    %23 = vector.broadcast %cst_12 : f32 to vector<128x1xf32>
    %24 = arith.addf %22, %23 : vector<128x1xf32>
    %cst_13 = arith.constant 5.000000e-01 : f32
    %25 = vector.broadcast %cst_13 : f32 to vector<128x1xf32>
    %26 = arith.mulf %25, %24 : vector<128x1xf32>
    %cst_14 = arith.constant 5.000000e+00 : f32
    %27 = vector.broadcast %cst_14 : f32 to vector<128x1xf32>
    %28 = arith.cmpf olt, %9, %27 : vector<128x1xf32>
    %29 = arith.extui %28 : vector<128x1xi1> to vector<128x1xi32>
    %30 = arith.sitofp %29 : vector<128x1xi32> to vector<128x1xf32>
    %31 = arith.mulf %26, %30 : vector<128x1xf32>
    %32 = arith.mulf %31, %11 : vector<128x1xf32>
    %c0_15 = arith.constant 0 : index
    %c0_16 = arith.constant 0 : index
    %c0_17 = arith.constant 0 : index
    %33 = vector.load %arg10[%c0_15, %c0_16, %c0_17] : memref<1x16x128xf32, #tpu.memory_space<vmem>>, vector<1x16x128xf32>
    %34 = vector.shape_cast %33 : vector<1x16x128xf32> to vector<16x128xf32>
    %cst_18 = arith.constant dense<0.000000e+00> : vector<128x128xf32>
    %35 = tpu.matmul %19, %34, %cst_18 {dimension_numbers = #tpu.dot_dimension_numbers<[1], [0], [0], [1], [0, 0, 1, 1], [], []>} : vector<128x16xf32>, vector<16x128xf32>, vector<128x128xf32> -> vector<128x128xf32>
    %c0_19 = arith.constant 0 : index
    %c0_20 = arith.constant 0 : index
    %c0_21 = arith.constant 0 : index
    %36 = vector.load %arg11[%c0_19, %c0_20, %c0_21] : memref<1x1x128xf32, #tpu.memory_space<vmem>>, vector<1x1x128xf32>
    %37 = vector.shape_cast %36 : vector<1x1x128xf32> to vector<1x128xf32>
    %38 = vector.broadcast %37 : vector<1x128xf32> to vector<128x128xf32>
    %39 = arith.addf %35, %38 : vector<128x128xf32>
    %cst_22 = arith.constant 0.000000e+00 : f32
    %40 = vector.broadcast %cst_22 : f32 to vector<128x128xf32>
    %41 = arith.maximumf %39, %40 : vector<128x128xf32>
    %42 = vector.broadcast %cst_22 : f32 to vector<128x128xf32>
    %43 = arith.subf %39, %42 : vector<128x128xf32>
    %44 = arith.cmpf one, %43, %43 : vector<128x128xf32>
    %45 = vector.broadcast %cst_22 : f32 to vector<128x128xf32>
    %46 = arith.addf %39, %45 : vector<128x128xf32>
    %47 = math.absf %43 : vector<128x128xf32>
    %cst_23 = arith.constant 0.000000e+00 : f32
    %48 = vector.broadcast %cst_23 : f32 to vector<128x128xf32>
    %49 = arith.subf %48, %47 : vector<128x128xf32>
    %50 = math.exp %49 : vector<128x128xf32>
    %51 = math.log1p %50 : vector<128x128xf32>
    %52 = arith.addf %41, %51 : vector<128x128xf32>
    %53 = arith.select %44, %46, %52 : vector<128x128xi1>, vector<128x128xf32>
    %cst_24 = arith.constant 0.693147182 : f32
    %54 = vector.broadcast %cst_24 : f32 to vector<128x128xf32>
    %55 = arith.subf %53, %54 : vector<128x128xf32>
    %c0_25 = arith.constant 0 : index
    %c0_26 = arith.constant 0 : index
    %c0_27 = arith.constant 0 : index
    %56 = vector.load %arg12[%c0_25, %c0_26, %c0_27] : memref<1x128x128xf32, #tpu.memory_space<vmem>>, vector<1x128x128xf32>
    %57 = vector.shape_cast %56 : vector<1x128x128xf32> to vector<128x128xf32>
    %cst_28 = arith.constant dense<0.000000e+00> : vector<128x128xf32>
    %58 = tpu.matmul %55, %57, %cst_28 {dimension_numbers = #tpu.dot_dimension_numbers<[1], [0], [0], [1], [0, 0, 1, 1], [], []>} : vector<128x128xf32>, vector<128x128xf32>, vector<128x128xf32> -> vector<128x128xf32>
    %c0_29 = arith.constant 0 : index
    %c0_30 = arith.constant 0 : index
    %c0_31 = arith.constant 0 : index
    %59 = vector.load %arg13[%c0_29, %c0_30, %c0_31] : memref<1x1x128xf32, #tpu.memory_space<vmem>>, vector<1x1x128xf32>
    %60 = vector.shape_cast %59 : vector<1x1x128xf32> to vector<1x128xf32>
    %61 = vector.broadcast %60 : vector<1x128xf32> to vector<128x128xf32>
    %62 = arith.addf %58, %61 : vector<128x128xf32>
    %63 = vector.broadcast %32 : vector<128x1xf32> to vector<128x128xf32>
    %64 = arith.mulf %62, %63 : vector<128x128xf32>
    %c0_32 = arith.constant 0 : index
    %c0_33 = arith.constant 0 : index
    %c0_34 = arith.constant 0 : index
    %65 = vector.load %arg7[%c0_32, %c0_33, %c0_34] : memref<1x128x1xi32, #tpu.memory_space<vmem>>, vector<1x128x1xi32>
    %66 = vector.shape_cast %65 : vector<1x128x1xi32> to vector<128x1xi32>
    %67 = tpu.iota {dimensions = array<i32: 1>} : vector<128x128xi32>
    %68 = vector.broadcast %66 : vector<128x1xi32> to vector<128x128xi32>
    %69 = arith.cmpi eq, %67, %68 : vector<128x128xi32>
    %70 = arith.extui %69 : vector<128x128xi1> to vector<128x128xi32>
    %71 = arith.sitofp %70 : vector<128x128xi32> to vector<128x128xf32>
    %72 = arith.truncf %71 : vector<128x128xf32> to vector<128x128xbf16>
    %c0_35 = arith.constant 0 : index
    %c0_36 = arith.constant 0 : index
    %73 = vector.load %arg19[%c0_35, %c0_36] : memref<128x128xbf16, #tpu.memory_space<vmem>>, vector<128x128xbf16>
    %cst_37 = arith.constant dense<0.000000e+00> : vector<128x128xf32>
    %74 = tpu.matmul %72, %73, %cst_37 {dimension_numbers = #tpu.dot_dimension_numbers<[1], [0], [0], [1], [0, 0, 1, 1], [], []>} : vector<128x128xbf16>, vector<128x128xbf16>, vector<128x128xf32> -> vector<128x128xf32>
    %75 = arith.mulf %74, %64 : vector<128x128xf32>
    %76 = tpu.iota {dimensions = array<i32: 0>} : vector<128x128xi32>
    %c0_38 = arith.constant 0 : index
    %c0_39 = arith.constant 0 : index
    %c0_40 = arith.constant 0 : index
    %77 = vector.load %arg6[%c0_38, %c0_39, %c0_40] : memref<1x1x128xi32, #tpu.memory_space<vmem>>, vector<1x1x128xi32>
    %78 = vector.shape_cast %77 : vector<1x1x128xi32> to vector<1x128xi32>
    %79 = vector.broadcast %78 : vector<1x128xi32> to vector<128x128xi32>
    %80 = arith.cmpi eq, %76, %79 : vector<128x128xi32>
    %81 = arith.extui %80 : vector<128x128xi1> to vector<128x128xi32>
    %82 = arith.sitofp %81 : vector<128x128xi32> to vector<128x128xf32>
    %83 = arith.truncf %82 : vector<128x128xf32> to vector<128x128xbf16>
    %c0_41 = arith.constant 0 : index
    %c0_42 = arith.constant 0 : index
    %84 = vector.load %arg20[%c0_41, %c0_42] : memref<128x128xf32, #tpu.memory_space<vmem>>, vector<128x128xf32>
    %85 = arith.truncf %75 : vector<128x128xf32> to vector<128x128xbf16>
    %cst_43 = arith.constant dense<0.000000e+00> : vector<128x128xf32>
    %86 = tpu.matmul %83, %85, %cst_43 {dimension_numbers = #tpu.dot_dimension_numbers<[1], [0], [0], [1], [0, 0, 1, 1], [], []>} : vector<128x128xbf16>, vector<128x128xbf16>, vector<128x128xf32> -> vector<128x128xf32>
    %87 = arith.addf %84, %86 : vector<128x128xf32>
    %c0_44 = arith.constant 0 : index
    %c0_45 = arith.constant 0 : index
    %88 = vector.load %arg20[%c0_44, %c0_45] : memref<128x128xf32, #tpu.memory_space<vmem>>, vector<128x128xf32>
    tpu.vector_store %arg20[%c0_44, %c0_45], %87 {strides = array<i32>} : memref<128x128xf32, #tpu.memory_space<vmem>>, vector<128x128xf32>,
    %c0_i32_46 = arith.constant 0 : i32
    %89 = arith.cmpi eq, %arg2, %c0_i32_46 : i32
    %90 = arith.extui %89 : i1 to i32
    %c0_i32_47 = arith.constant 0 : i32
    %91 = arith.cmpi ne, %90, %c0_i32_47 : i32
    scf.if %91 {
      %c0_48 = arith.constant 0 : index
      %c0_49 = arith.constant 0 : index
      %92 = vector.load %arg20[%c0_48, %c0_49] : memref<128x128xf32, #tpu.memory_space<vmem>>, vector<128x128xf32>
      %c0_50 = arith.constant 0 : index
      %c0_51 = arith.constant 0 : index
      %c0_52 = arith.constant 0 : index
      %93 = vector.load %arg14[%c0_50, %c0_51, %c0_52] : memref<1x128x128xf32, #tpu.memory_space<vmem>>, vector<1x128x128xf32>
      %94 = vector.shape_cast %93 : vector<1x128x128xf32> to vector<128x128xf32>
      %cst_53 = arith.constant dense<0.000000e+00> : vector<128x128xf32>
      %95 = tpu.matmul %92, %94, %cst_53 {dimension_numbers = #tpu.dot_dimension_numbers<[1], [0], [0], [1], [0, 0, 1, 1], [], []>} : vector<128x128xf32>, vector<128x128xf32>, vector<128x128xf32> -> vector<128x128xf32>
      %c0_54 = arith.constant 0 : index
      %c0_55 = arith.constant 0 : index
      %c0_56 = arith.constant 0 : index
      %96 = vector.load %arg15[%c0_54, %c0_55, %c0_56] : memref<1x1x128xf32, #tpu.memory_space<vmem>>, vector<1x1x128xf32>
      %97 = vector.shape_cast %96 : vector<1x1x128xf32> to vector<1x128xf32>
      %98 = vector.broadcast %97 : vector<1x128xf32> to vector<128x128xf32>
      %99 = arith.addf %95, %98 : vector<128x128xf32>
      %cst_57 = arith.constant 0.000000e+00 : f32
      %100 = vector.broadcast %cst_57 : f32 to vector<128x128xf32>
      %101 = arith.maximumf %99, %100 : vector<128x128xf32>
      %102 = vector.broadcast %cst_57 : f32 to vector<128x128xf32>
      %103 = arith.subf %99, %102 : vector<128x128xf32>
      %104 = arith.cmpf one, %103, %103 : vector<128x128xf32>
      %105 = vector.broadcast %cst_57 : f32 to vector<128x128xf32>
      %106 = arith.addf %99, %105 : vector<128x128xf32>
      %107 = math.absf %103 : vector<128x128xf32>
      %cst_58 = arith.constant 0.000000e+00 : f32
      %108 = vector.broadcast %cst_58 : f32 to vector<128x128xf32>
      %109 = arith.subf %108, %107 : vector<128x128xf32>
      %110 = math.exp %109 : vector<128x128xf32>
      %111 = math.log1p %110 : vector<128x128xf32>
      %112 = arith.addf %101, %111 : vector<128x128xf32>
      %113 = arith.select %104, %106, %112 : vector<128x128xi1>, vector<128x128xf32>
      %cst_59 = arith.constant 0.693147182 : f32
      %114 = vector.broadcast %cst_59 : f32 to vector<128x128xf32>
      %115 = arith.subf %113, %114 : vector<128x128xf32>
      %c0_60 = arith.constant 0 : index
      %c0_61 = arith.constant 0 : index
      %c0_62 = arith.constant 0 : index
      %116 = vector.load %arg16[%c0_60, %c0_61, %c0_62] : memref<1x128x128xf32, #tpu.memory_space<vmem>>, vector<1x128x128xf32>
      %117 = vector.shape_cast %116 : vector<1x128x128xf32> to vector<128x128xf32>
      %cst_63 = arith.constant dense<0.000000e+00> : vector<128x128xf32>
      %118 = tpu.matmul %115, %117, %cst_63 {dimension_numbers = #tpu.dot_dimension_numbers<[1], [0], [0], [1], [0, 0, 1, 1], [], []>} : vector<128x128xf32>, vector<128x128xf32>, vector<128x128xf32> -> vector<128x128xf32>
      %c0_64 = arith.constant 0 : index
      %c0_65 = arith.constant 0 : index
      %c0_66 = arith.constant 0 : index
      %119 = vector.load %arg17[%c0_64, %c0_65, %c0_66] : memref<1x1x128xf32, #tpu.memory_space<vmem>>, vector<1x1x128xf32>
      %120 = vector.shape_cast %119 : vector<1x1x128xf32> to vector<1x128xf32>
      %121 = vector.broadcast %120 : vector<1x128xf32> to vector<128x128xf32>
      %122 = arith.addf %118, %121 : vector<128x128xf32>
      %c0_67 = arith.constant 0 : index
      %c0_68 = arith.constant 0 : index
      %c0_69 = arith.constant 0 : index
      %123 = vector.load %arg18[%c0_67, %c0_68, %c0_69] : memref<1x128x128xf32, #tpu.memory_space<vmem>>, vector<1x128x128xf32>
      %124 = vector.shape_cast %123 : vector<1x128x128xf32> to vector<128x128xf32>
      %125 = arith.addf %124, %122 : vector<128x128xf32>
      %c0_70 = arith.constant 0 : index
      %c0_71 = arith.constant 0 : index
      %c0_72 = arith.constant 0 : index
      %126 = vector.load %arg18[%c0_70, %c0_71, %c0_72] : memref<1x128x128xf32, #tpu.memory_space<vmem>>, vector<1x128x128xf32>
      %127 = vector.shape_cast %126 : vector<1x128x128xf32> to vector<128x128xf32>
      %128 = vector.shape_cast %125 : vector<128x128xf32> to vector<1x128x128xf32>
      tpu.vector_store %arg18[%c0_70, %c0_71, %c0_72], %128 {strides = array<i32>} : memref<1x128x128xf32, #tpu.memory_space<vmem>>, vector<1x128x128xf32>,
    } else {
    }
    return
  }
  func.func @transform_0(%arg0: i32, %arg1: i32, %arg2: i32) -> (i32, i32, i32) {
    %c0_i32 = arith.constant 0 : i32
    %c0_i32_0 = arith.constant 0 : i32
    %c0_i32_1 = arith.constant 0 : i32
    return %arg0, %c0_i32, %c0_i32_0 : i32, i32, i32
  }
  func.func @transform_1(%arg0: i32, %arg1: i32, %arg2: i32) -> (i32, i32, i32) {
    %c0_i32 = arith.constant 0 : i32
    %c0_i32_0 = arith.constant 0 : i32
    return %arg0, %arg2, %c0_i32 : i32, i32, i32
  }
  func.func @transform_2(%arg0: i32, %arg1: i32, %arg2: i32) -> (i32, i32, i32) {
    %c0_i32 = arith.constant 0 : i32
    %c0_i32_0 = arith.constant 0 : i32
    return %arg0, %arg2, %c0_i32 : i32, i32, i32
  }
  func.func @transform_3(%arg0: i32, %arg1: i32, %arg2: i32) -> (i32, i32, i32) {
    %c0_i32 = arith.constant 0 : i32
    %c0_i32_0 = arith.constant 0 : i32
    return %arg0, %c0_i32, %arg2 : i32, i32, i32
  }
  func.func @transform_4(%arg0: i32, %arg1: i32, %arg2: i32) -> (i32, i32, i32) {
    %c0_i32 = arith.constant 0 : i32
    %c0_i32_0 = arith.constant 0 : i32
    return %arg0, %arg2, %c0_i32 : i32, i32, i32
  }
  func.func @transform_5(%arg0: i32, %arg1: i32, %arg2: i32) -> (i32, i32) {
    %c0_i32 = arith.constant 0 : i32
    %c0_i32_0 = arith.constant 0 : i32
    %c0_i32_1 = arith.constant 0 : i32
    return %c0_i32, %c0_i32_0 : i32, i32
  }
  func.func @transform_6(%arg0: i32, %arg1: i32, %arg2: i32) -> (i32, i32, i32) {
    %c0_i32 = arith.constant 0 : i32
    %c0_i32_0 = arith.constant 0 : i32
    %c0_i32_1 = arith.constant 0 : i32
    return %arg1, %c0_i32, %c0_i32_0 : i32, i32, i32
  }
  func.func @transform_7(%arg0: i32, %arg1: i32, %arg2: i32) -> (i32, i32, i32) {
    %c0_i32 = arith.constant 0 : i32
    %c0_i32_0 = arith.constant 0 : i32
    %c0_i32_1 = arith.constant 0 : i32
    return %arg1, %c0_i32, %c0_i32_0 : i32, i32, i32
  }
  func.func @transform_8(%arg0: i32, %arg1: i32, %arg2: i32) -> (i32, i32, i32) {
    %c0_i32 = arith.constant 0 : i32
    %c0_i32_0 = arith.constant 0 : i32
    %c0_i32_1 = arith.constant 0 : i32
    return %arg1, %c0_i32, %c0_i32_0 : i32, i32, i32
  }
  func.func @transform_9(%arg0: i32, %arg1: i32, %arg2: i32) -> (i32, i32, i32) {
    %c0_i32 = arith.constant 0 : i32
    %c0_i32_0 = arith.constant 0 : i32
    %c0_i32_1 = arith.constant 0 : i32
    return %arg1, %c0_i32, %c0_i32_0 : i32, i32, i32
  }
  func.func @transform_10(%arg0: i32, %arg1: i32, %arg2: i32) -> (i32, i32, i32) {
    %c0_i32 = arith.constant 0 : i32
    %c0_i32_0 = arith.constant 0 : i32
    %c0_i32_1 = arith.constant 0 : i32
    return %arg1, %c0_i32, %c0_i32_0 : i32, i32, i32
  }
  func.func @transform_11(%arg0: i32, %arg1: i32, %arg2: i32) -> (i32, i32, i32) {
    %c0_i32 = arith.constant 0 : i32
    %c0_i32_0 = arith.constant 0 : i32
    %c0_i32_1 = arith.constant 0 : i32
    return %arg1, %c0_i32, %c0_i32_0 : i32, i32, i32
  }
  func.func @transform_12(%arg0: i32, %arg1: i32, %arg2: i32) -> (i32, i32, i32) {
    %c0_i32 = arith.constant 0 : i32
    %c0_i32_0 = arith.constant 0 : i32
    %c0_i32_1 = arith.constant 0 : i32
    return %arg1, %c0_i32, %c0_i32_0 : i32, i32, i32
  }
  func.func @transform_13(%arg0: i32, %arg1: i32, %arg2: i32) -> (i32, i32, i32) {
    %c0_i32 = arith.constant 0 : i32
    %c0_i32_0 = arith.constant 0 : i32
    %c0_i32_1 = arith.constant 0 : i32
    return %arg1, %c0_i32, %c0_i32_0 : i32, i32, i32
  }
  func.func @transform_14(%arg0: i32, %arg1: i32, %arg2: i32) -> (i32, i32, i32) {
    %c0_i32 = arith.constant 0 : i32
    %c0_i32_0 = arith.constant 0 : i32
    %c0_i32_1 = arith.constant 0 : i32
    return %arg1, %c0_i32, %c0_i32_0 : i32, i32, i32
  }
  func.func @transform_15(%arg0: i32, %arg1: i32, %arg2: i32) -> (i32, i32, i32) {
    %c0_i32 = arith.constant 0 : i32
    %c0_i32_0 = arith.constant 0 : i32
    %c0_i32_1 = arith.constant 0 : i32
    return %arg0, %c0_i32, %c0_i32_0 : i32, i32, i32
  }
}

</mosaic_0001>

<llo_original>
// kernel: tpu_custom_call.1
$region0: #{tpu_custom_call.1}
  #allocation0 [shape = 'u32[]', space=smem, size = 0x4, offset = 0x4, fixed_abs, tag = 'smem constant byte address 0x4 - core index']
  #allocation1 [shape = 'u32[72,128]{1,0:T(1,128)}', space=vmem, size = 0x9000, scoped, tag = 'internal scratch']
  #allocation2 [shape = 'bf16[128,128]{1,0:T(8,128)(2,1)}', space=vmem, size = 0x8000, scoped, tag = 'scratch operand']
  #allocation3 [shape = 'f32[128,128]{1,0:T(8,128)}', space=vmem, size = 0x10000, scoped, tag = 'scratch operand']
  %s0 = inlined_call_operand.vmem [shape: f32[2,128,128], index: 0, kind: input, shape index: {}]
  %s1 = inlined_call_operand.vmem [shape: f32[2,128,1], index: 1, kind: input, shape index: {}]
  %s2 = inlined_call_operand.vmem [shape: f32[2,128,1], index: 2, kind: input, shape index: {}]
  %s3 = inlined_call_operand.vmem [shape: s32[2,1,128], index: 3, kind: input, shape index: {}]
  %s4 = inlined_call_operand.vmem [shape: s32[2,128,1], index: 4, kind: input, shape index: {}]
  %s5 = inlined_call_operand.hbm [shape: f32[1,16], index: 5, kind: input, shape index: {}]
  %s6 = inlined_call_operand.vmem [shape: f32[2,128,128], index: 6, kind: input, shape index: {}]
  %s7 = inlined_call_operand.hbm [shape: f32[2,16,128], index: 7, kind: input, shape index: {}]
  %s8 = inlined_call_operand.hbm [shape: f32[2,1,128], index: 8, kind: input, shape index: {}]
  %s9 = inlined_call_operand.vmem [shape: f32[2,128,128], index: 9, kind: input, shape index: {}]
  %s10 = inlined_call_operand.vmem [shape: f32[2,1,128], index: 10, kind: input, shape index: {}]
  %s11 = inlined_call_operand.hbm [shape: f32[2,128,128], index: 11, kind: input, shape index: {}]
  %s12 = inlined_call_operand.vmem [shape: f32[2,1,128], index: 12, kind: input, shape index: {}]
  %s13 = inlined_call_operand.hbm [shape: f32[2,128,128], index: 13, kind: input, shape index: {}]
  %s14 = inlined_call_operand.vmem [shape: f32[2,1,128], index: 14, kind: input, shape index: {}]
  %s15 = inlined_call_operand.hbm [shape: f32[2,128,128], index: 15, kind: output, shape index: {}]
  %s16 = sld [smem:[#allocation0]]
  $region125: #{tpu_custom_call.1} parent=0
    _
  %s18 = ssub.s32 1, %s16
  %s19 = scalar_select 0, %s18, %s16
  $region1: #{tpu_custom_call.1} parent=0
    #allocation4 [shape = 'u8[512]{0}', space=vmem, size = 0x400, scoped, tag = 'input window, operand 5, single buffered']
    #allocation5 [shape = 's32[2]{0}', space=sflag, size = 0x8, scoped, tag = 'scoped memory for tpu_custom_call.1']
    #allocation6 [shape = 's32[2]{0}', space=sflag, size = 0x8, scoped, tag = 'scoped memory for tpu_custom_call.1']
    #allocation7 [shape = 'u8[16384]{0}', space=vmem, size = 0x4000, scoped, tag = 'input window, operand 7']
    #allocation8 [shape = 's32[2]{0}', space=sflag, size = 0x8, scoped, tag = 'scoped memory for tpu_custom_call.1']
    #allocation9 [shape = 'u8[1024]{0}', space=vmem, size = 0x400, scoped, tag = 'input window, operand 8']
    #allocation10 [shape = 'u8[131072]{0}', space=vmem, size = 0x20000, scoped, tag = 'input window, operand 11']
    #allocation11 [shape = 's32[2]{0}', space=sflag, size = 0x8, scoped, tag = 'scoped memory for tpu_custom_call.1']
    #allocation12 [shape = 'u8[131072]{0}', space=vmem, size = 0x20000, scoped, tag = 'input window, operand 13']
    #allocation13 [shape = 'u8[131072]{0}', space=vmem, size = 0x20000, scoped, tag = 'output window, operand 0']
    %20 = vsyncpa [#allocation5], 0
    %21 = vsyncpa [#allocation8], 0
    %s22 = scalar_lea.sflag [#allocation8], 1
    %23 = vsyncpa %s22, 0
    %24 = vsyncpa [#allocation11], 0
    %s25 = scalar_lea.sflag [#allocation11], 1
    %26 = vsyncpa %s25, 0
    %27 = vsyncpa [#allocation6], 0
    %s28 = scalar_lea.sflag [#allocation6], 1
    %29 = vsyncpa %s28, 0
    loop: start=0, step=1, limit=6
    $region2: #{tpu_custom_call.1} parent=1 // loop_pre_header
      _
    $region3: #{tpu_custom_call.1} parent=1 // loop_header
      %s31 = sphi 0, %s35
      %p32 = scmp.ge.s32.totalorder %s31, 6
      %s38 = sphi 0, %s57
      %s39 = sphi 0, %s53
      %s40 = sphi 0, %s49
      %s41 = sphi 0, %s38
      %s42 = sphi 0, %s39
      %s43 = sphi 0, %s40
      %s44 = sphi 0, %s41
      %s45 = sphi 0, %s42
      %s46 = sphi 0, %s43
      %s60 = sphi 0, %s62
      %s63 = sphi 0, %s60
      %s64 = sphi 0, %s63
      %s80 = sphi 0, %s64
      %s88 = sphi 0, %s90
      %s91 = sphi 0, %s88
      %s92 = sphi 0, %s91
      %s108 = sphi 0, %s92
      %s116 = sphi 0, %s118
      %s119 = sphi 0, %s116
      %s120 = sphi 0, %s119
      %s136 = sphi 0, %s120
      %s144 = sphi 0, %s146
      %s147 = sphi 0, %s144
      %s148 = sphi 0, %s147
      %s164 = sphi 0, %s148
      %s172 = sphi 0, %s174
      %s175 = sphi 0, %s172
      %s176 = sphi 0, %s175
      %s192 = sphi 0, %s176
      %s196 = sphi 0, %s196
      %s198 = sphi 0, %s196
      %s199 = sphi 0, %s198
      %s213 = sphi 0, %s199
      %s219 = sphi 0, %s221
      %s222 = sphi 0, %s219
      %s223 = sphi 0, %s222
      %s239 = sphi 0, %s223
      %s245 = sphi 0, %s247
      %s248 = sphi 0, %s245
      %s249 = sphi 0, %s248
      %s265 = sphi 0, %s249
      %s271 = sphi 0, %s273
      %s274 = sphi 0, %s271
      %s275 = sphi 0, %s274
      %s291 = sphi 0, %s275
      %s297 = sphi 0, %s299
      %s300 = sphi 0, %s297
      %s301 = sphi 0, %s300
      %s317 = sphi 0, %s301
      %s323 = sphi 0, %s325
      %s326 = sphi 0, %s323
      %s327 = sphi 0, %s326
      %s343 = sphi 0, %s327
      %s349 = sphi 0, %s351
      %s352 = sphi 0, %s349
      %s353 = sphi 0, %s352
      %s369 = sphi 0, %s353
      %s375 = sphi 0, %s377
      %s378 = sphi 0, %s375
      %s379 = sphi 0, %s378
      %s395 = sphi 0, %s379
      %s401 = sphi 0, %s403
      %s404 = sphi 0, %s401
      %s405 = sphi 0, %s404
      %s421 = sphi 0, %s405
      %s427 = sphi 0, %s429
      %s430 = sphi 0, %s427
      %s431 = sphi 0, %s430
      %s447 = sphi 0, %s431
      %s453 = sphi 0, %s455
      %s456 = sphi 0, %s453
      %s457 = sphi 0, %s456
      %s473 = sphi 0, %s457
    $region4: #{tpu_custom_call.1} parent=1 // loop_header_branch
      %34 = sbr.rel (%p32) target = $region8
    $region5: #{tpu_custom_call.1} parent=1 // loop_body
      %s36 = ssub.s32 %s31, 1
      %s37 = ssub.s32 %s31, 2
      %s47 = sadd.s32 1, %s40
      %p48 = scmp.ge.s32.totalorder %s47, 1
      %s49 = scalar_select %p48, 0, %s47
      %s50 = sadd.s32 1, %s39
      %s51 = scalar_select %p48, %s50, %s39
      %p52 = scmp.ge.s32.totalorder %s51, 2
      %s53 = scalar_select %p52, 0, %s51
      %s54 = sadd.s32 1, %s38
      %s55 = scalar_select %p52, %s54, %s38
      %p56 = scmp.ge.s32.totalorder %s55, 2
      %s57 = scalar_select %p56, 0, %s55
      %s58 = ssub.s32 %s38, %s57
      %p59 = scmp.eq.s32.totalorder %s58, 0
      %s61 = sadd.s32 %s60, 1
      %s62 = scalar_select %p59, %s60, %s61
      %p65 = pneg %p59
      %p66 = scmp.eq.s32.totalorder %s31, 3
      %p67 = por %p65, %p66
      %p68 = scmp.ne.s32.totalorder %s60, %s63
      %p69 = scmp.eq.s32.totalorder %s31, 0
      %p70 = por %p68, %p69
      %p71 = scmp.ne.s32.totalorder %s60, %s63
      %p72 = scmp.eq.s32.totalorder %s36, 3
      %p73 = por %p71, %p72
      %p74 = scmp.ne.s32.totalorder %s63, %s64
      %p75 = scmp.eq.s32.totalorder %s36, 0
      %p76 = por %p74, %p75
      %p77 = scmp.ne.s32.totalorder %s63, %s64
      %p78 = scmp.eq.s32.totalorder %s37, 3
      %p79 = por %p77, %p78
      %p81 = scmp.ne.s32.totalorder %s64, %s80
      %p82 = scmp.eq.s32.totalorder %s37, 0
      %p83 = por %p81, %p82
      %s84 = ssub.s32 %s38, %s57
      %s85 = ssub.s32 %s40, %s49
      %s86 = sor.u32 %s84, %s85
      %p87 = scmp.eq.s32.totalorder %s86, 0
      %s89 = sadd.s32 %s88, 1
      %s90 = scalar_select %p87, %s88, %s89
      %p93 = pneg %p87
      %p94 = scmp.eq.s32.totalorder %s31, 3
      %p95 = por %p93, %p94
      %p96 = scmp.ne.s32.totalorder %s88, %s91
      %p97 = scmp.eq.s32.totalorder %s31, 0
      %p98 = por %p96, %p97
      %p99 = scmp.ne.s32.totalorder %s88, %s91
      %p100 = scmp.eq.s32.totalorder %s36, 3
      %p101 = por %p99, %p100
      %p102 = scmp.ne.s32.totalorder %s91, %s92
      %p103 = scmp.eq.s32.totalorder %s36, 0
      %p104 = por %p102, %p103
      %p105 = scmp.ne.s32.totalorder %s91, %s92
      %p106 = scmp.eq.s32.totalorder %s37, 3
      %p107 = por %p105, %p106
      %p109 = scmp.ne.s32.totalorder %s92, %s108
      %p110 = scmp.eq.s32.totalorder %s37, 0
      %p111 = por %p109, %p110
      %s112 = ssub.s32 %s38, %s57
      %s113 = ssub.s32 %s40, %s49
      %s114 = sor.u32 %s112, %s113
      %p115 = scmp.eq.s32.totalorder %s114, 0
      %s117 = sadd.s32 %s116, 1
      %s118 = scalar_select %p115, %s116, %s117
      %p121 = pneg %p115
      %p122 = scmp.eq.s32.totalorder %s31, 3
      %p123 = por %p121, %p122
      %p124 = scmp.ne.s32.totalorder %s116, %s119
      %p125 = scmp.eq.s32.totalorder %s31, 0
      %p126 = por %p124, %p125
      %p127 = scmp.ne.s32.totalorder %s116, %s119
      %p128 = scmp.eq.s32.totalorder %s36, 3
      %p129 = por %p127, %p128
      %p130 = scmp.ne.s32.totalorder %s119, %s120
      %p131 = scmp.eq.s32.totalorder %s36, 0
      %p132 = por %p130, %p131
      %p133 = scmp.ne.s32.totalorder %s119, %s120
      %p134 = scmp.eq.s32.totalorder %s37, 3
      %p135 = por %p133, %p134
      %p137 = scmp.ne.s32.totalorder %s120, %s136
      %p138 = scmp.eq.s32.totalorder %s37, 0
      %p139 = por %p137, %p138
      %s140 = ssub.s32 %s38, %s57
      %s141 = ssub.s32 %s40, %s49
      %s142 = sor.u32 %s140, %s141
      %p143 = scmp.eq.s32.totalorder %s142, 0
      %s145 = sadd.s32 %s144, 1
      %s146 = scalar_select %p143, %s144, %s145
      %p149 = pneg %p143
      %p150 = scmp.eq.s32.totalorder %s31, 3
      %p151 = por %p149, %p150
      %p152 = scmp.ne.s32.totalorder %s144, %s147
      %p153 = scmp.eq.s32.totalorder %s31, 0
      %p154 = por %p152, %p153
      %p155 = scmp.ne.s32.totalorder %s144, %s147
      %p156 = scmp.eq.s32.totalorder %s36, 3
      %p157 = por %p155, %p156
      %p158 = scmp.ne.s32.totalorder %s147, %s148
      %p159 = scmp.eq.s32.totalorder %s36, 0
      %p160 = por %p158, %p159
      %p161 = scmp.ne.s32.totalorder %s147, %s148
      %p162 = scmp.eq.s32.totalorder %s37, 3
      %p163 = por %p161, %p162
      %p165 = scmp.ne.s32.totalorder %s148, %s164
      %p166 = scmp.eq.s32.totalorder %s37, 0
      %p167 = por %p165, %p166
      %s168 = ssub.s32 %s38, %s57
      %s169 = ssub.s32 %s40, %s49
      %s170 = sor.u32 %s168, %s169
      %p171 = scmp.eq.s32.totalorder %s170, 0
      %s173 = sadd.s32 %s172, 1
      %s174 = scalar_select %p171, %s172, %s173
      %p177 = pneg %p171
      %p178 = scmp.eq.s32.totalorder %s31, 3
      %p179 = por %p177, %p178
      %p180 = scmp.ne.s32.totalorder %s172, %s175
      %p181 = scmp.eq.s32.totalorder %s31, 0
      %p182 = por %p180, %p181
      %p183 = scmp.ne.s32.totalorder %s172, %s175
      %p184 = scmp.eq.s32.totalorder %s36, 3
      %p185 = por %p183, %p184
      %p186 = scmp.ne.s32.totalorder %s175, %s176
      %p187 = scmp.eq.s32.totalorder %s36, 0
      %p188 = por %p186, %p187
      %p189 = scmp.ne.s32.totalorder %s175, %s176
      %p190 = scmp.eq.s32.totalorder %s37, 3
      %p191 = por %p189, %p190
      %p193 = scmp.ne.s32.totalorder %s176, %s192
      %p194 = scmp.eq.s32.totalorder %s37, 0
      %p195 = por %p193, %p194
      %s197 = sadd.s32 %s196, 1
      %p200 = scmp.eq.s32.totalorder %s31, 3
      %p201 = scmp.ne.s32.totalorder %s196, %s198
      %p202 = scmp.eq.s32.totalorder %s31, 0
      %p203 = por %p201, %p202
      %p204 = scmp.ne.s32.totalorder %s196, %s198
      %p205 = scmp.eq.s32.totalorder %s36, 3
      %p206 = por %p204, %p205
      %p207 = scmp.ne.s32.totalorder %s198, %s199
      %p208 = scmp.eq.s32.totalorder %s36, 0
      %p209 = por %p207, %p208
      %p210 = scmp.ne.s32.totalorder %s198, %s199
      %p211 = scmp.eq.s32.totalorder %s37, 3
      %p212 = por %p210, %p211
      %p214 = scmp.ne.s32.totalorder %s199, %s213
      %p215 = scmp.eq.s32.totalorder %s37, 0
      %p216 = por %p214, %p215
      %s217 = ssub.s32 %s39, %s53
      %p218 = scmp.eq.s32.totalorder %s217, 0
      %s220 = sadd.s32 %s219, 1
      %s221 = scalar_select %p218, %s219, %s220
      %p224 = pneg %p218
      %p225 = scmp.eq.s32.totalorder %s31, 3
      %p226 = por %p224, %p225
      %p227 = scmp.ne.s32.totalorder %s219, %s222
      %p228 = scmp.eq.s32.totalorder %s31, 0
      %p229 = por %p227, %p228
      %p230 = scmp.ne.s32.totalorder %s219, %s222
      %p231 = scmp.eq.s32.totalorder %s36, 3
      %p232 = por %p230, %p231
      %p233 = scmp.ne.s32.totalorder %s222, %s223
      %p234 = scmp.eq.s32.totalorder %s36, 0
      %p235 = por %p233, %p234
      %p236 = scmp.ne.s32.totalorder %s222, %s223
      %p237 = scmp.eq.s32.totalorder %s37, 3
      %p238 = por %p236, %p237
      %p240 = scmp.ne.s32.totalorder %s223, %s239
      %p241 = scmp.eq.s32.totalorder %s37, 0
      %p242 = por %p240, %p241
      %s243 = ssub.s32 %s39, %s53
      %p244 = scmp.eq.s32.totalorder %s243, 0
      %s246 = sadd.s32 %s245, 1
      %s247 = scalar_select %p244, %s245, %s246
      %p250 = pneg %p244
      %p251 = scmp.eq.s32.totalorder %s31, 3
      %p252 = por %p250, %p251
      %p253 = scmp.ne.s32.totalorder %s245, %s248
      %p254 = scmp.eq.s32.totalorder %s31, 0
      %p255 = por %p253, %p254
      %p256 = scmp.ne.s32.totalorder %s245, %s248
      %p257 = scmp.eq.s32.totalorder %s36, 3
      %p258 = por %p256, %p257
      %p259 = scmp.ne.s32.totalorder %s248, %s249
      %p260 = scmp.eq.s32.totalorder %s36, 0
      %p261 = por %p259, %p260
      %p262 = scmp.ne.s32.totalorder %s248, %s249
      %p263 = scmp.eq.s32.totalorder %s37, 3
      %p264 = por %p262, %p263
      %p266 = scmp.ne.s32.totalorder %s249, %s265
      %p267 = scmp.eq.s32.totalorder %s37, 0
      %p268 = por %p266, %p267
      %s269 = ssub.s32 %s39, %s53
      %p270 = scmp.eq.s32.totalorder %s269, 0
      %s272 = sadd.s32 %s271, 1
      %s273 = scalar_select %p270, %s271, %s272
      %p276 = pneg %p270
      %p277 = scmp.eq.s32.totalorder %s31, 3
      %p278 = por %p276, %p277
      %p279 = scmp.ne.s32.totalorder %s271, %s274
      %p280 = scmp.eq.s32.totalorder %s31, 0
      %p281 = por %p279, %p280
      %p282 = scmp.ne.s32.totalorder %s271, %s274
      %p283 = scmp.eq.s32.totalorder %s36, 3
      %p284 = por %p282, %p283
      %p285 = scmp.ne.s32.totalorder %s274, %s275
      %p286 = scmp.eq.s32.totalorder %s36, 0
      %p287 = por %p285, %p286
      %p288 = scmp.ne.s32.totalorder %s274, %s275
      %p289 = scmp.eq.s32.totalorder %s37, 3
      %p290 = por %p288, %p289
      %p292 = scmp.ne.s32.totalorder %s275, %s291
      %p293 = scmp.eq.s32.totalorder %s37, 0
      %p294 = por %p292, %p293
      %s295 = ssub.s32 %s39, %s53
      %p296 = scmp.eq.s32.totalorder %s295, 0
      %s298 = sadd.s32 %s297, 1
      %s299 = scalar_select %p296, %s297, %s298
      %p302 = pneg %p296
      %p303 = scmp.eq.s32.totalorder %s31, 3
      %p304 = por %p302, %p303
      %p305 = scmp.ne.s32.totalorder %s297, %s300
      %p306 = scmp.eq.s32.totalorder %s31, 0
      %p307 = por %p305, %p306
      %p308 = scmp.ne.s32.totalorder %s297, %s300
      %p309 = scmp.eq.s32.totalorder %s36, 3
      %p310 = por %p308, %p309
      %p311 = scmp.ne.s32.totalorder %s300, %s301
      %p312 = scmp.eq.s32.totalorder %s36, 0
      %p313 = por %p311, %p312
      %p314 = scmp.ne.s32.totalorder %s300, %s301
      %p315 = scmp.eq.s32.totalorder %s37, 3
      %p316 = por %p314, %p315
      %p318 = scmp.ne.s32.totalorder %s301, %s317
      %p319 = scmp.eq.s32.totalorder %s37, 0
      %p320 = por %p318, %p319
      %s321 = ssub.s32 %s39, %s53
      %p322 = scmp.eq.s32.totalorder %s321, 0
      %s324 = sadd.s32 %s323, 1
      %s325 = scalar_select %p322, %s323, %s324
      %p328 = pneg %p322
      %p329 = scmp.eq.s32.totalorder %s31, 3
      %p330 = por %p328, %p329
      %p331 = scmp.ne.s32.totalorder %s323, %s326
      %p332 = scmp.eq.s32.totalorder %s31, 0
      %p333 = por %p331, %p332
      %p334 = scmp.ne.s32.totalorder %s323, %s326
      %p335 = scmp.eq.s32.totalorder %s36, 3
      %p336 = por %p334, %p335
      %p337 = scmp.ne.s32.totalorder %s326, %s327
      %p338 = scmp.eq.s32.totalorder %s36, 0
      %p339 = por %p337, %p338
      %p340 = scmp.ne.s32.totalorder %s326, %s327
      %p341 = scmp.eq.s32.totalorder %s37, 3
      %p342 = por %p340, %p341
      %p344 = scmp.ne.s32.totalorder %s327, %s343
      %p345 = scmp.eq.s32.totalorder %s37, 0
      %p346 = por %p344, %p345
      %s347 = ssub.s32 %s39, %s53
      %p348 = scmp.eq.s32.totalorder %s347, 0
      %s350 = sadd.s32 %s349, 1
      %s351 = scalar_select %p348, %s349, %s350
      %p354 = pneg %p348
      %p355 = scmp.eq.s32.totalorder %s31, 3
      %p356 = por %p354, %p355
      %p357 = scmp.ne.s32.totalorder %s349, %s352
      %p358 = scmp.eq.s32.totalorder %s31, 0
      %p359 = por %p357, %p358
      %p360 = scmp.ne.s32.totalorder %s349, %s352
      %p361 = scmp.eq.s32.totalorder %s36, 3
      %p362 = por %p360, %p361
      %p363 = scmp.ne.s32.totalorder %s352, %s353
      %p364 = scmp.eq.s32.totalorder %s36, 0
      %p365 = por %p363, %p364
      %p366 = scmp.ne.s32.totalorder %s352, %s353
      %p367 = scmp.eq.s32.totalorder %s37, 3
      %p368 = por %p366, %p367
      %p370 = scmp.ne.s32.totalorder %s353, %s369
      %p371 = scmp.eq.s32.totalorder %s37, 0
      %p372 = por %p370, %p371
      %s373 = ssub.s32 %s39, %s53
      %p374 = scmp.eq.s32.totalorder %s373, 0
      %s376 = sadd.s32 %s375, 1
      %s377 = scalar_select %p374, %s375, %s376
      %p380 = pneg %p374
      %p381 = scmp.eq.s32.totalorder %s31, 3
      %p382 = por %p380, %p381
      %p383 = scmp.ne.s32.totalorder %s375, %s378
      %p384 = scmp.eq.s32.totalorder %s31, 0
      %p385 = por %p383, %p384
      %p386 = scmp.ne.s32.totalorder %s375, %s378
      %p387 = scmp.eq.s32.totalorder %s36, 3
      %p388 = por %p386, %p387
      %p389 = scmp.ne.s32.totalorder %s378, %s379
      %p390 = scmp.eq.s32.totalorder %s36, 0
      %p391 = por %p389, %p390
      %p392 = scmp.ne.s32.totalorder %s378, %s379
      %p393 = scmp.eq.s32.totalorder %s37, 3
      %p394 = por %p392, %p393
      %p396 = scmp.ne.s32.totalorder %s379, %s395
      %p397 = scmp.eq.s32.totalorder %s37, 0
      %p398 = por %p396, %p397
      %s399 = ssub.s32 %s39, %s53
      %p400 = scmp.eq.s32.totalorder %s399, 0
      %s402 = sadd.s32 %s401, 1
      %s403 = scalar_select %p400, %s401, %s402
      %p406 = pneg %p400
      %p407 = scmp.eq.s32.totalorder %s31, 3
      %p408 = por %p406, %p407
      %p409 = scmp.ne.s32.totalorder %s401, %s404
      %p410 = scmp.eq.s32.totalorder %s31, 0
      %p411 = por %p409, %p410
      %p412 = scmp.ne.s32.totalorder %s401, %s404
      %p413 = scmp.eq.s32.totalorder %s36, 3
      %p414 = por %p412, %p413
      %p415 = scmp.ne.s32.totalorder %s404, %s405
      %p416 = scmp.eq.s32.totalorder %s36, 0
      %p417 = por %p415, %p416
      %p418 = scmp.ne.s32.totalorder %s404, %s405
      %p419 = scmp.eq.s32.totalorder %s37, 3
      %p420 = por %p418, %p419
      %p422 = scmp.ne.s32.totalorder %s405, %s421
      %p423 = scmp.eq.s32.totalorder %s37, 0
      %p424 = por %p422, %p423
      %s425 = ssub.s32 %s39, %s53
      %p426 = scmp.eq.s32.totalorder %s425, 0
      %s428 = sadd.s32 %s427, 1
      %s429 = scalar_select %p426, %s427, %s428
      %p432 = pneg %p426
      %p433 = scmp.eq.s32.totalorder %s31, 3
      %p434 = por %p432, %p433
      %p435 = scmp.ne.s32.totalorder %s427, %s430
      %p436 = scmp.eq.s32.totalorder %s31, 0
      %p437 = por %p435, %p436
      %p438 = scmp.ne.s32.totalorder %s427, %s430
      %p439 = scmp.eq.s32.totalorder %s36, 3
      %p440 = por %p438, %p439
      %p441 = scmp.ne.s32.totalorder %s430, %s431
      %p442 = scmp.eq.s32.totalorder %s36, 0
      %p443 = por %p441, %p442
      %p444 = scmp.ne.s32.totalorder %s430, %s431
      %p445 = scmp.eq.s32.totalorder %s37, 3
      %p446 = por %p444, %p445
      %p448 = scmp.ne.s32.totalorder %s431, %s447
      %p449 = scmp.eq.s32.totalorder %s37, 0
      %p450 = por %p448, %p449
      %s451 = ssub.s32 %s38, %s57
      %p452 = scmp.eq.s32.totalorder %s451, 0
      %s454 = sadd.s32 %s453, 1
      %s455 = scalar_select %p452, %s453, %s454
      %p458 = pneg %p452
      %p459 = scmp.eq.s32.totalorder %s31, 3
      %p460 = por %p458, %p459
      %p461 = scmp.ne.s32.totalorder %s453, %s456
      %p462 = scmp.eq.s32.totalorder %s31, 0
      %p463 = por %p461, %p462
      %p464 = scmp.ne.s32.totalorder %s453, %s456
      %p465 = scmp.eq.s32.totalorder %s36, 3
      %p466 = por %p464, %p465
      %p467 = scmp.ne.s32.totalorder %s456, %s457
      %p468 = scmp.eq.s32.totalorder %s36, 0
      %p469 = por %p467, %p468
      %p470 = scmp.ne.s32.totalorder %s456, %s457
      %p471 = scmp.eq.s32.totalorder %s37, 3
      %p472 = por %p470, %p471
      %p474 = scmp.ne.s32.totalorder %s457, %s473
      %p475 = scmp.eq.s32.totalorder %s37, 0
      %p476 = por %p474, %p475
      %p477 = scmp.le.s32.totalorder 1, %s31
      %p478 = scmp.lt.s32.totalorder %s31, 5
      %p479 = pnand %p477, %p478
      %p480 = pneg %p479
      // Predicated region
      $region9: #{tpu_custom_call.1} parent=5 // pred_check
        _
      $region10: #{tpu_custom_call.1} parent=5 // pred_check_branch
        %482 = sbr.rel (%p479) target = $region12
      $region11: #{tpu_custom_call.1} parent=5 // pred_region
        %s483 = ssub.s32 %s31, 1
        // Predicated region
        $region13: #{tpu_custom_call.1} parent=11 // pred_check
          %p484 = pneg %p209
        $region14: #{tpu_custom_call.1} parent=11 // pred_check_branch
          %486 = sbr.rel (%p484) target = $region16
        $region15: #{tpu_custom_call.1} parent=11 // pred_region
          %488 = vsyncadd [#allocation5], 0
          %s490 = sshll.u32 %s5, 4
          %s491 = int_to_ptr.hbm [resolvable:$true] %s490
          %s492 = sshll.u32 [#allocation4], 4
          %s493 = int_to_ptr.vmem [resolvable:$true] %s492
          %495 = dma.hbm_to_vmem [thread:$0]  %s491, 16, %s493, [#allocation5]
        $region16: #{tpu_custom_call.1} parent=11 // pred_fallthru
          _
      $region12: #{tpu_custom_call.1} parent=5 // pred_fallthru
        _
      %p496 = scmp.lt.s32.totalorder %s31, 4
      // Predicated region
      $region17: #{tpu_custom_call.1} parent=5 // pred_check
        %p497 = pneg %p496
      $region18: #{tpu_custom_call.1} parent=5 // pred_check_branch
        %499 = sbr.rel (%p497) target = $region20
      $region19: #{tpu_custom_call.1} parent=5 // pred_region
        // Predicated region
        $region21: #{tpu_custom_call.1} parent=19 // pred_check
          %p500 = pneg %p70
        $region22: #{tpu_custom_call.1} parent=19 // pred_check_branch
          %502 = sbr.rel (%p500) target = $region24
        $region23: #{tpu_custom_call.1} parent=19 // pred_region
          %p503 = scmp.lt.s32.totalorder %s38, 1
          %s504 = scalar_select %p503, %s38, 1
          %s505 = smul.addr %s504, 16
          %s506 = smul.addr %s505, 8
          %s507 = scalar_lea.vmem %s0, %s506
        $region24: #{tpu_custom_call.1} parent=19 // pred_fallthru
          _
        // Predicated region
        $region25: #{tpu_custom_call.1} parent=19 // pred_check
          %p508 = pneg %p98
        $region26: #{tpu_custom_call.1} parent=19 // pred_check_branch
          %510 = sbr.rel (%p508) target = $region28
        $region27: #{tpu_custom_call.1} parent=19 // pred_region
          %s511 = smul.u32 16, %s40
          %p512 = scmp.lt.s32.totalorder %s38, 1
          %s513 = scalar_select %p512, %s38, 1
          %p514 = scmp.lt.s32.totalorder %s511, 15
          %s515 = scalar_select %p514, %s511, 15
          %s516 = smul.addr %s513, 16
          %s517 = sadd.s32 %s515, %s516
          %s518 = smul.addr %s517, 8
          %s519 = scalar_lea.vmem %s1, %s518
          %s520 = smul.u32 16, %s40
        $region28: #{tpu_custom_call.1} parent=19 // pred_fallthru
          _
        // Predicated region
        $region29: #{tpu_custom_call.1} parent=19 // pred_check
          %p521 = pneg %p126
        $region30: #{tpu_custom_call.1} parent=19 // pred_check_branch
          %523 = sbr.rel (%p521) target = $region32
        $region31: #{tpu_custom_call.1} parent=19 // pred_region
          %s524 = smul.u32 16, %s40
          %p525 = scmp.lt.s32.totalorder %s38, 1
          %s526 = scalar_select %p525, %s38, 1
          %p527 = scmp.lt.s32.totalorder %s524, 15
          %s528 = scalar_select %p527, %s524, 15
          %s529 = smul.addr %s526, 16
          %s530 = sadd.s32 %s528, %s529
          %s531 = smul.addr %s530, 8
          %s532 = scalar_lea.vmem %s2, %s531
          %s533 = smul.u32 16, %s40
        $region32: #{tpu_custom_call.1} parent=19 // pred_fallthru
          _
        // Predicated region
        $region33: #{tpu_custom_call.1} parent=19 // pred_check
          %p534 = pneg %p154
        $region34: #{tpu_custom_call.1} parent=19 // pred_check_branch
          %536 = sbr.rel (%p534) target = $region36
        $region35: #{tpu_custom_call.1} parent=19 // pred_region
          %p537 = scmp.lt.s32.totalorder %s38, 1
          %s538 = scalar_select %p537, %s38, 1
          %p539 = scmp.lt.s32.totalorder %s40, 0
          %s540 = scalar_select %p539, %s40, 0
          %s541 = sadd.s32 %s540, %s538
          %s542 = scalar_lea.vmem %s3, %s541
        $region36: #{tpu_custom_call.1} parent=19 // pred_fallthru
          _
        // Predicated region
        $region37: #{tpu_custom_call.1} parent=19 // pred_check
          %p543 = pneg %p182
        $region38: #{tpu_custom_call.1} parent=19 // pred_check_branch
          %545 = sbr.rel (%p543) target = $region40
        $region39: #{tpu_custom_call.1} parent=19 // pred_region
          %s546 = smul.u32 16, %s40
          %p547 = scmp.lt.s32.totalorder %s38, 1
          %s548 = scalar_select %p547, %s38, 1
          %p549 = scmp.lt.s32.totalorder %s546, 15
          %s550 = scalar_select %p549, %s546, 15
          %s551 = smul.addr %s548, 16
          %s552 = sadd.s32 %s550, %s551
          %s553 = smul.addr %s552, 8
          %s554 = scalar_lea.vmem %s4, %s553
          %s555 = smul.u32 16, %s40
        $region40: #{tpu_custom_call.1} parent=19 // pred_fallthru
          _
        // Predicated region
        $region41: #{tpu_custom_call.1} parent=19 // pred_check
          %p556 = pneg %p229
        $region42: #{tpu_custom_call.1} parent=19 // pred_check_branch
          %558 = sbr.rel (%p556) target = $region44
        $region43: #{tpu_custom_call.1} parent=19 // pred_region
          %p559 = scmp.lt.s32.totalorder %s39, 1
          %s560 = scalar_select %p559, %s39, 1
          %s561 = smul.addr %s560, 16
          %s562 = smul.addr %s561, 8
          %s563 = scalar_lea.vmem %s6, %s562
        $region44: #{tpu_custom_call.1} parent=19 // pred_fallthru
          _
        // Predicated region
        $region45: #{tpu_custom_call.1} parent=19 // pred_check
          %p564 = pneg %p255
        $region46: #{tpu_custom_call.1} parent=19 // pred_check_branch
          %566 = sbr.rel (%p564) target = $region48
        $region47: #{tpu_custom_call.1} parent=19 // pred_region
          %s567 = sand.u32 %s31, 1
          %s568 = scalar_lea.sflag [#allocation8], %s567
          %s569 = sand.u32 %s245, 1
          %s570 = smul.addr %s569, 16
          %s571 = scalar_lea.vmem [#allocation7], %s570
          %573 = vsyncadd %s568, 0
          %s574 = smul.addr %s39, 2
          %s575 = smul.addr %s574, 8
          %s576 = scalar_lea.hbm %s7, %s575
          %s577 = sshll.u32 %s576, 4
          %s578 = int_to_ptr.hbm [resolvable:$true] %s577
          %s579 = sshll.u32 %s571, 4
          %s580 = int_to_ptr.vmem [resolvable:$true] %s579
          %585 = dma.hbm_to_vmem [thread:$0]  %s578, 256, %s580, %s568, 128, 128, 8
        $region48: #{tpu_custom_call.1} parent=19 // pred_fallthru
          _
        // Predicated region
        $region49: #{tpu_custom_call.1} parent=19 // pred_check
          %p586 = pneg %p281
        $region50: #{tpu_custom_call.1} parent=19 // pred_check_branch
          %588 = sbr.rel (%p586) target = $region52
        $region51: #{tpu_custom_call.1} parent=19 // pred_region
          %s589 = sand.u32 %s31, 1
          %s590 = scalar_lea.sflag [#allocation8], %s589
          %s591 = sand.u32 %s271, 1
          %s592 = scalar_lea.vmem [#allocation9], %s591
          %594 = vsyncadd %s590, 0
          %s595 = scalar_lea.hbm %s8, %s39
          %s597 = sshll.u32 %s595, 4
          %s598 = int_to_ptr.hbm [resolvable:$true] %s597
          %s599 = sshll.u32 %s592, 4
          %s600 = int_to_ptr.vmem [resolvable:$true] %s599
          %602 = dma.hbm_to_vmem [thread:$0]  %s598, 16, %s600, %s590
        $region52: #{tpu_custom_call.1} parent=19 // pred_fallthru
          _
        // Predicated region
        $region53: #{tpu_custom_call.1} parent=19 // pred_check
          %p603 = pneg %p307
        $region54: #{tpu_custom_call.1} parent=19 // pred_check_branch
          %605 = sbr.rel (%p603) target = $region56
        $region55: #{tpu_custom_call.1} parent=19 // pred_region
          %p606 = scmp.lt.s32.totalorder %s39, 1
          %s607 = scalar_select %p606, %s39, 1
          %s608 = smul.addr %s607, 16
          %s609 = smul.addr %s608, 8
          %s610 = scalar_lea.vmem %s9, %s609
        $region56: #{tpu_custom_call.1} parent=19 // pred_fallthru
          _
        // Predicated region
        $region57: #{tpu_custom_call.1} parent=19 // pred_check
          %p611 = pneg %p333
        $region58: #{tpu_custom_call.1} parent=19 // pred_check_branch
          %613 = sbr.rel (%p611) target = $region60
        $region59: #{tpu_custom_call.1} parent=19 // pred_region
          %p614 = scmp.lt.s32.totalorder %s39, 1
          %s615 = scalar_select %p614, %s39, 1
          %s616 = scalar_lea.vmem %s10, %s615
        $region60: #{tpu_custom_call.1} parent=19 // pred_fallthru
          _
        // Predicated region
        $region61: #{tpu_custom_call.1} parent=19 // pred_check
          %p617 = pneg %p359
        $region62: #{tpu_custom_call.1} parent=19 // pred_check_branch
          %619 = sbr.rel (%p617) target = $region64
        $region63: #{tpu_custom_call.1} parent=19 // pred_region
          %s620 = sand.u32 %s31, 1
          %s621 = scalar_lea.sflag [#allocation11], %s620
          %s622 = sand.u32 %s349, 1
          %s623 = smul.addr %s622, 128
          %s624 = scalar_lea.vmem [#allocation10], %s623
          %626 = vsyncadd %s621, 0
          %s627 = smul.addr %s39, 16
          %s628 = smul.addr %s627, 8
          %s629 = scalar_lea.hbm %s11, %s628
          %s630 = sshll.u32 %s629, 4
          %s631 = int_to_ptr.hbm [resolvable:$true] %s630
          %s632 = sshll.u32 %s624, 4
          %s633 = int_to_ptr.vmem [resolvable:$true] %s632
          %638 = dma.hbm_to_vmem [thread:$0]  %s631, 2048, %s633, %s621, 128, 128, 8
        $region64: #{tpu_custom_call.1} parent=19 // pred_fallthru
          _
        // Predicated region
        $region65: #{tpu_custom_call.1} parent=19 // pred_check
          %p639 = pneg %p385
        $region66: #{tpu_custom_call.1} parent=19 // pred_check_branch
          %641 = sbr.rel (%p639) target = $region68
        $region67: #{tpu_custom_call.1} parent=19 // pred_region
          %p642 = scmp.lt.s32.totalorder %s39, 1
          %s643 = scalar_select %p642, %s39, 1
          %s644 = scalar_lea.vmem %s12, %s643
        $region68: #{tpu_custom_call.1} parent=19 // pred_fallthru
          _
        // Predicated region
        $region69: #{tpu_custom_call.1} parent=19 // pred_check
          %p645 = pneg %p411
        $region70: #{tpu_custom_call.1} parent=19 // pred_check_branch
          %647 = sbr.rel (%p645) target = $region72
        $region71: #{tpu_custom_call.1} parent=19 // pred_region
          %s648 = sand.u32 %s31, 1
          %s649 = scalar_lea.sflag [#allocation11], %s648
          %s650 = sand.u32 %s401, 1
          %s651 = smul.addr %s650, 128
          %s652 = scalar_lea.vmem [#allocation12], %s651
          %654 = vsyncadd %s649, 0
          %s655 = smul.addr %s39, 16
          %s656 = smul.addr %s655, 8
          %s657 = scalar_lea.hbm %s13, %s656
          %s658 = sshll.u32 %s657, 4
          %s659 = int_to_ptr.hbm [resolvable:$true] %s658
          %s660 = sshll.u32 %s652, 4
          %s661 = int_to_ptr.vmem [resolvable:$true] %s660
          %666 = dma.hbm_to_vmem [thread:$0]  %s659, 2048, %s661, %s649, 128, 128, 8
        $region72: #{tpu_custom_call.1} parent=19 // pred_fallthru
          _
        // Predicated region
        $region73: #{tpu_custom_call.1} parent=19 // pred_check
          %p667 = pneg %p437
        $region74: #{tpu_custom_call.1} parent=19 // pred_check_branch
          %669 = sbr.rel (%p667) target = $region76
        $region75: #{tpu_custom_call.1} parent=19 // pred_region
          %p670 = scmp.lt.s32.totalorder %s39, 1
          %s671 = scalar_select %p670, %s39, 1
          %s672 = scalar_lea.vmem %s14, %s671
        $region76: #{tpu_custom_call.1} parent=19 // pred_fallthru
          _
      $region20: #{tpu_custom_call.1} parent=5 // pred_fallthru
        _
      %p673 = scmp.le.s32.totalorder 1, %s31
      %p674 = scmp.lt.s32.totalorder %s31, 5
      %p675 = pnand %p673, %p674
      %p676 = pneg %p675
      // Predicated region
      $region77: #{tpu_custom_call.1} parent=5 // pred_check
        _
      $region78: #{tpu_custom_call.1} parent=5 // pred_check_branch
        %678 = sbr.rel (%p675) target = $region80
      $region79: #{tpu_custom_call.1} parent=5 // pred_region
        %s679 = ssub.s32 %s31, 1
        // Predicated region
        $region81: #{tpu_custom_call.1} parent=79 // pred_check
          %p680 = pneg %p209
        $region82: #{tpu_custom_call.1} parent=79 // pred_check_branch
          %682 = sbr.rel (%p680) target = $region84
        $region83: #{tpu_custom_call.1} parent=79 // pred_region
          %684 = dma.done [#allocation5], 16
        $region84: #{tpu_custom_call.1} parent=79 // pred_fallthru
          _
        %s685 = sand.u32 %s36, 1
        %s686 = scalar_lea.sflag [#allocation8], %s685
        %s687 = sand.u32 %s248, 1
        %s688 = smul.addr %s687, 16
        %s689 = scalar_lea.vmem [#allocation7], %s688
        // Predicated region
        $region85: #{tpu_custom_call.1} parent=79 // pred_check
          %p690 = pneg %p261
        $region86: #{tpu_custom_call.1} parent=79 // pred_check_branch
          %692 = sbr.rel (%p690) target = $region88
        $region87: #{tpu_custom_call.1} parent=79 // pred_region
          %694 = dma.done %s686, 256
        $region88: #{tpu_custom_call.1} parent=79 // pred_fallthru
          _
        %s695 = sand.u32 %s36, 1
        %s696 = scalar_lea.sflag [#allocation8], %s695
        %s697 = sand.u32 %s274, 1
        %s698 = scalar_lea.vmem [#allocation9], %s697
        // Predicated region
        $region89: #{tpu_custom_call.1} parent=79 // pred_check
          %p699 = pneg %p287
        $region90: #{tpu_custom_call.1} parent=79 // pred_check_branch
          %701 = sbr.rel (%p699) target = $region92
        $region91: #{tpu_custom_call.1} parent=79 // pred_region
          %703 = dma.done %s696, 16
        $region92: #{tpu_custom_call.1} parent=79 // pred_fallthru
          _
        %s704 = sand.u32 %s36, 1
        %s705 = scalar_lea.sflag [#allocation11], %s704
        %s706 = sand.u32 %s352, 1
        %s707 = smul.addr %s706, 128
        %s708 = scalar_lea.vmem [#allocation10], %s707
        // Predicated region
        $region93: #{tpu_custom_call.1} parent=79 // pred_check
          %p709 = pneg %p365
        $region94: #{tpu_custom_call.1} parent=79 // pred_check_branch
          %711 = sbr.rel (%p709) target = $region96
        $region95: #{tpu_custom_call.1} parent=79 // pred_region
          %713 = dma.done %s705, 2048
        $region96: #{tpu_custom_call.1} parent=79 // pred_fallthru
          _
        %s714 = sand.u32 %s36, 1
        %s715 = scalar_lea.sflag [#allocation11], %s714
        %s716 = sand.u32 %s404, 1
        %s717 = smul.addr %s716, 128
        %s718 = scalar_lea.vmem [#allocation12], %s717
        // Predicated region
        $region97: #{tpu_custom_call.1} parent=79 // pred_check
          %p719 = pneg %p417
        $region98: #{tpu_custom_call.1} parent=79 // pred_check_branch
          %721 = sbr.rel (%p719) target = $region100
        $region99: #{tpu_custom_call.1} parent=79 // pred_region
          %723 = dma.done %s715, 2048
        $region100: #{tpu_custom_call.1} parent=79 // pred_fallthru
          _
        %p724 = scmp.lt.s32.totalorder %s41, 1
        %s725 = scalar_select %p724, %s41, 1
        %s726 = smul.addr %s725, 16
        %s727 = smul.addr %s726, 8
        %s728 = scalar_lea.vmem %s0, %s727
        %p729 = pneg %p76
        %p730 = pneg %p73
        %s731 = smul.u32 16, %s43
        %p732 = scmp.lt.s32.totalorder %s41, 1
        %s733 = scalar_select %p732, %s41, 1
        %p734 = scmp.lt.s32.totalorder %s731, 15
        %s735 = scalar_select %p734, %s731, 15
        %s736 = smul.addr %s733, 16
        %s737 = sadd.s32 %s735, %s736
        %s738 = smul.addr %s737, 8
        %s739 = scalar_lea.vmem %s1, %s738
        %p740 = pneg %p104
        %p741 = pneg %p101
        %s742 = smul.u32 16, %s43
        %p743 = scmp.lt.s32.totalorder %s41, 1
        %s744 = scalar_select %p743, %s41, 1
        %p745 = scmp.lt.s32.totalorder %s742, 15
        %s746 = scalar_select %p745, %s742, 15
        %s747 = smul.addr %s744, 16
        %s748 = sadd.s32 %s746, %s747
        %s749 = smul.addr %s748, 8
        %s750 = scalar_lea.vmem %s2, %s749
        %p751 = pneg %p132
        %p752 = pneg %p129
        %p753 = scmp.lt.s32.totalorder %s41, 1
        %s754 = scalar_select %p753, %s41, 1
        %p755 = scmp.lt.s32.totalorder %s43, 0
        %s756 = scalar_select %p755, %s43, 0
        %s757 = sadd.s32 %s756, %s754
        %s758 = scalar_lea.vmem %s3, %s757
        %p759 = pneg %p160
        %p760 = pneg %p157
        %s761 = smul.u32 16, %s43
        %p762 = scmp.lt.s32.totalorder %s41, 1
        %s763 = scalar_select %p762, %s41, 1
        %p764 = scmp.lt.s32.totalorder %s761, 15
        %s765 = scalar_select %p764, %s761, 15
        %s766 = smul.addr %s763, 16
        %s767 = sadd.s32 %s765, %s766
        %s768 = smul.addr %s767, 8
        %s769 = scalar_lea.vmem %s4, %s768
        %p770 = pneg %p188
        %p771 = pneg %p185
        %p772 = pneg %p209
        %p773 = pneg %p206
        %p774 = scmp.lt.s32.totalorder %s42, 1
        %s775 = scalar_select %p774, %s42, 1
        %s776 = smul.addr %s775, 16
        %s777 = smul.addr %s776, 8
        %s778 = scalar_lea.vmem %s6, %s777
        %p779 = pneg %p235
        %p780 = pneg %p232
        %s781 = sand.u32 %s36, 1
        %s782 = scalar_lea.sflag [#allocation8], %s781
        %s783 = sand.u32 %s248, 1
        %s784 = smul.addr %s783, 16
        %s785 = scalar_lea.vmem [#allocation7], %s784
        %p786 = pneg %p261
        %p787 = pneg %p258
        %s788 = sand.u32 %s36, 1
        %s789 = scalar_lea.sflag [#allocation8], %s788
        %s790 = sand.u32 %s274, 1
        %s791 = scalar_lea.vmem [#allocation9], %s790
        %p792 = pneg %p287
        %p793 = pneg %p284
        %p794 = scmp.lt.s32.totalorder %s42, 1
        %s795 = scalar_select %p794, %s42, 1
        %s796 = smul.addr %s795, 16
        %s797 = smul.addr %s796, 8
        %s798 = scalar_lea.vmem %s9, %s797
        %p799 = pneg %p313
        %p800 = pneg %p310
        %p801 = scmp.lt.s32.totalorder %s42, 1
        %s802 = scalar_select %p801, %s42, 1
        %s803 = scalar_lea.vmem %s10, %s802
        %p804 = pneg %p339
        %p805 = pneg %p336
        %s806 = sand.u32 %s36, 1
        %s807 = scalar_lea.sflag [#allocation11], %s806
        %s808 = sand.u32 %s352, 1
        %s809 = smul.addr %s808, 128
        %s810 = scalar_lea.vmem [#allocation10], %s809
        %p811 = pneg %p365
        %p812 = pneg %p362
        %p813 = scmp.lt.s32.totalorder %s42, 1
        %s814 = scalar_select %p813, %s42, 1
        %s815 = scalar_lea.vmem %s12, %s814
        %p816 = pneg %p391
        %p817 = pneg %p388
        %s818 = sand.u32 %s36, 1
        %s819 = scalar_lea.sflag [#allocation11], %s818
        %s820 = sand.u32 %s404, 1
        %s821 = smul.addr %s820, 128
        %s822 = scalar_lea.vmem [#allocation12], %s821
        %p823 = pneg %p417
        %p824 = pneg %p414
        %p825 = scmp.lt.s32.totalorder %s42, 1
        %s826 = scalar_select %p825, %s42, 1
        %s827 = scalar_lea.vmem %s14, %s826
        %p828 = pneg %p443
        %p829 = pneg %p440
        %p830 = pneg %p469
        %p831 = pneg %p466
        %s832 = sand.u32 %s456, 1
        %s833 = scalar_lea.sflag [#allocation6], %s832
        %s834 = sand.u32 %s456, 1
        %s835 = smul.addr %s834, 128
        %s836 = scalar_lea.vmem [#allocation13], %s835
        %p837 = scmp.lt.s32.totalorder %s41, 1
        %s838 = scalar_select %p837, %s41, 1
        %s839 = smul.addr %s838, 16
        %s840 = smul.addr %s839, 8
        %s841 = scalar_lea.vmem %s0, %s840
        %s842 = smul.u32 16, %s43
        %p843 = scmp.lt.s32.totalorder %s41, 1
        %s844 = scalar_select %p843, %s41, 1
        %p845 = scmp.lt.s32.totalorder %s842, 15
        %s846 = scalar_select %p845, %s842, 15
        %s847 = smul.addr %s844, 16
        %s848 = sadd.s32 %s846, %s847
        %s849 = smul.addr %s848, 8
        %s850 = scalar_lea.vmem %s1, %s849
        %s851 = smul.u32 16, %s43
        %s852 = smul.u32 16, %s43
        %p853 = scmp.lt.s32.totalorder %s41, 1
        %s854 = scalar_select %p853, %s41, 1
        %p855 = scmp.lt.s32.totalorder %s852, 15
        %s856 = scalar_select %p855, %s852, 15
        %s857 = smul.addr %s854, 16
        %s858 = sadd.s32 %s856, %s857
        %s859 = smul.addr %s858, 8
        %s860 = scalar_lea.vmem %s2, %s859
        %s861 = smul.u32 16, %s43
        %p862 = scmp.lt.s32.totalorder %s41, 1
        %s863 = scalar_select %p862, %s41, 1
        %p864 = scmp.lt.s32.totalorder %s43, 0
        %s865 = scalar_select %p864, %s43, 0
        %s866 = sadd.s32 %s865, %s863
        %s867 = scalar_lea.vmem %s3, %s866
        %s868 = smul.u32 16, %s43
        %p869 = scmp.lt.s32.totalorder %s41, 1
        %s870 = scalar_select %p869, %s41, 1
        %p871 = scmp.lt.s32.totalorder %s868, 15
        %s872 = scalar_select %p871, %s868, 15
        %s873 = smul.addr %s870, 16
        %s874 = sadd.s32 %s872, %s873
        %s875 = smul.addr %s874, 8
        %s876 = scalar_lea.vmem %s4, %s875
        %s877 = smul.u32 16, %s43
        %p878 = scmp.lt.s32.totalorder %s42, 1
        %s879 = scalar_select %p878, %s42, 1
        %s880 = smul.addr %s879, 16
        %s881 = smul.addr %s880, 8
        %s882 = scalar_lea.vmem %s6, %s881
        %p883 = scmp.lt.s32.totalorder %s42, 1
        %s884 = scalar_select %p883, %s42, 1
        %s885 = smul.addr %s884, 16
        %s886 = smul.addr %s885, 8
        %s887 = scalar_lea.vmem %s9, %s886
        %p888 = scmp.lt.s32.totalorder %s42, 1
        %s889 = scalar_select %p888, %s42, 1
        %s890 = scalar_lea.vmem %s10, %s889
        %p891 = scmp.lt.s32.totalorder %s42, 1
        %s892 = scalar_select %p891, %s42, 1
        %s893 = scalar_lea.vmem %s12, %s892
        %p894 = scmp.lt.s32.totalorder %s42, 1
        %s895 = scalar_select %p894, %s42, 1
        %s896 = scalar_lea.vmem %s14, %s895
        %p897 = scmp.eq.s32.totalorder %s42, 0
        %p898 = scmp.eq.s32.totalorder %s43, 0
        %p899 = pnand %p897, %p898
        %p900 = pneg %p899
        // Predicated region
        $region101: #{tpu_custom_call.1} parent=79 // pred_check
          _
        $region102: #{tpu_custom_call.1} parent=79 // pred_check_branch
          %902 = sbr.rel (%p899) target = $region104
        $region103: #{tpu_custom_call.1} parent=79 // pred_region
          %v903 = vld [vmem:[%s841] sm:$0xff]
          %v904 = vld [vmem:[%s841 + $0x8] sm:$0xff]
          %v905 = vld [vmem:[%s841 + $0x10] sm:$0xff]
          %v906 = vld [vmem:[%s841 + $0x18] sm:$0xff]
          %v907 = vld [vmem:[%s841 + $0x20] sm:$0xff]
          %v908 = vld [vmem:[%s841 + $0x28] sm:$0xff]
          %v909 = vld [vmem:[%s841 + $0x30] sm:$0xff]
          %v910 = vld [vmem:[%s841 + $0x38] sm:$0xff]
          %v911 = vld [vmem:[%s841 + $0x40] sm:$0xff]
          %v912 = vld [vmem:[%s841 + $0x48] sm:$0xff]
          %v913 = vld [vmem:[%s841 + $0x50] sm:$0xff]
          %v914 = vld [vmem:[%s841 + $0x58] sm:$0xff]
          %v915 = vld [vmem:[%s841 + $0x60] sm:$0xff]
          %v916 = vld [vmem:[%s841 + $0x68] sm:$0xff]
          %v917 = vld [vmem:[%s841 + $0x70] sm:$0xff]
          %v918 = vld [vmem:[%s841 + $0x78] sm:$0xff]
          %919 = vst [vmem:[%s836] sm:$0xff] %v903
          %920 = vst [vmem:[%s836 + $0x8] sm:$0xff] %v904
          %921 = vst [vmem:[%s836 + $0x10] sm:$0xff] %v905
          %922 = vst [vmem:[%s836 + $0x18] sm:$0xff] %v906
          %923 = vst [vmem:[%s836 + $0x20] sm:$0xff] %v907
          %924 = vst [vmem:[%s836 + $0x28] sm:$0xff] %v908
          %925 = vst [vmem:[%s836 + $0x30] sm:$0xff] %v909
          %926 = vst [vmem:[%s836 + $0x38] sm:$0xff] %v910
          %927 = vst [vmem:[%s836 + $0x40] sm:$0xff] %v911
          %928 = vst [vmem:[%s836 + $0x48] sm:$0xff] %v912
          %929 = vst [vmem:[%s836 + $0x50] sm:$0xff] %v913
          %930 = vst [vmem:[%s836 + $0x58] sm:$0xff] %v914
          %931 = vst [vmem:[%s836 + $0x60] sm:$0xff] %v915
          %932 = vst [vmem:[%s836 + $0x68] sm:$0xff] %v916
          %933 = vst [vmem:[%s836 + $0x70] sm:$0xff] %v917
          %934 = vst [vmem:[%s836 + $0x78] sm:$0xff] %v918
        $region104: #{tpu_custom_call.1} parent=79 // pred_fallthru
          _
        // Predicated region
        $region105: #{tpu_custom_call.1} parent=79 // pred_check
          %p935 = pneg %p898
        $region106: #{tpu_custom_call.1} parent=79 // pred_check_branch
          %937 = sbr.rel (%p935) target = $region108
        $region107: #{tpu_custom_call.1} parent=79 // pred_region
          %v938 = vld [vmem:[%s836] sm:$0xff]
          %v939 = vld [vmem:[%s836 + $0x8] sm:$0xff]
          %v940 = vld [vmem:[%s836 + $0x10] sm:$0xff]
          %v941 = vld [vmem:[%s836 + $0x18] sm:$0xff]
          %v942 = vld [vmem:[%s836 + $0x20] sm:$0xff]
          %v943 = vld [vmem:[%s836 + $0x28] sm:$0xff]
          %v944 = vld [vmem:[%s836 + $0x30] sm:$0xff]
          %v945 = vld [vmem:[%s836 + $0x38] sm:$0xff]
          %v946 = vld [vmem:[%s836 + $0x40] sm:$0xff]
          %v947 = vld [vmem:[%s836 + $0x48] sm:$0xff]
          %v948 = vld [vmem:[%s836 + $0x50] sm:$0xff]
          %v949 = vld [vmem:[%s836 + $0x58] sm:$0xff]
          %v950 = vld [vmem:[%s836 + $0x60] sm:$0xff]
          %v951 = vld [vmem:[%s836 + $0x68] sm:$0xff]
          %v952 = vld [vmem:[%s836 + $0x70] sm:$0xff]
          %v953 = vld [vmem:[%s836 + $0x78] sm:$0xff]
          %v954 = vld [vmem:[%s882] sm:$0xff]
          %v955 = vld [vmem:[%s882 + $0x8] sm:$0xff]
          %v956 = vld [vmem:[%s882 + $0x10] sm:$0xff]
          %v957 = vld [vmem:[%s882 + $0x18] sm:$0xff]
          %v958 = vld [vmem:[%s882 + $0x20] sm:$0xff]
          %v959 = vld [vmem:[%s882 + $0x28] sm:$0xff]
          %v960 = vld [vmem:[%s882 + $0x30] sm:$0xff]
          %v961 = vld [vmem:[%s882 + $0x38] sm:$0xff]
          %v962 = vld [vmem:[%s882 + $0x40] sm:$0xff]
          %v963 = vld [vmem:[%s882 + $0x48] sm:$0xff]
          %v964 = vld [vmem:[%s882 + $0x50] sm:$0xff]
          %v965 = vld [vmem:[%s882 + $0x58] sm:$0xff]
          %v966 = vld [vmem:[%s882 + $0x60] sm:$0xff]
          %v967 = vld [vmem:[%s882 + $0x68] sm:$0xff]
          %v968 = vld [vmem:[%s882 + $0x70] sm:$0xff]
          %v969 = vld [vmem:[%s882 + $0x78] sm:$0xff]
          %970 = vmatpush.msra.mxu0 %v969
          %971 = vmatpush.msra.mxu0 %v968
          %972 = vmatpush.msra.mxu0 %v967
          %973 = vmatpush.msra.mxu0 %v966
          %974 = vmatpush.msra.mxu0 %v965
          %975 = vmatpush.msra.mxu0 %v964
          %976 = vmatpush.msra.mxu0 %v963
          %977 = vmatpush.msra.mxu0 %v962
          %978 = vmatpush.msra.mxu0 %v961
          %979 = vmatpush.msra.mxu0 %v960
          %980 = vmatpush.msra.mxu0 %v959
          %981 = vmatpush.msra.mxu0 %v958
          %982 = vmatpush.msra.mxu0 %v957
          %983 = vmatpush.msra.mxu0 %v956
          %984 = vmatpush.msra.mxu0 %v955
          %985 = vmatpush.msra.mxu0 %v954
          %986 = vmatmul.f32.gmra.mxu0 %v938
          %v987 = vpop.f32.mrf.mxu0
          %v988 = vadd.f32 0.0, %v987
          %989 = vmatmul.f32.gmra.mxu0 %v939
          %v990 = vpop.f32.mrf.mxu0
          %v991 = vadd.f32 0.0, %v990
          %992 = vmatmul.f32.gmra.mxu0 %v940
          %v993 = vpop.f32.mrf.mxu0
          %v994 = vadd.f32 0.0, %v993
          %995 = vmatmul.f32.gmra.mxu0 %v941
          %v996 = vpop.f32.mrf.mxu0
          %v997 = vadd.f32 0.0, %v996
          %998 = vmatmul.f32.gmra.mxu0 %v942
          %v999 = vpop.f32.mrf.mxu0
          %v1000 = vadd.f32 0.0, %v999
          %1001 = vmatmul.f32.gmra.mxu0 %v943
          %v1002 = vpop.f32.mrf.mxu0
          %v1003 = vadd.f32 0.0, %v1002
          %1004 = vmatmul.f32.gmra.mxu0 %v944
          %v1005 = vpop.f32.mrf.mxu0
          %v1006 = vadd.f32 0.0, %v1005
          %1007 = vmatmul.f32.gmra.mxu0 %v945
          %v1008 = vpop.f32.mrf.mxu0
          %v1009 = vadd.f32 0.0, %v1008
          %1010 = vmatmul.f32.gmra.mxu0 %v946
          %v1011 = vpop.f32.mrf.mxu0
          %v1012 = vadd.f32 0.0, %v1011
          %1013 = vmatmul.f32.gmra.mxu0 %v947
          %v1014 = vpop.f32.mrf.mxu0
          %v1015 = vadd.f32 0.0, %v1014
          %1016 = vmatmul.f32.gmra.mxu0 %v948
          %v1017 = vpop.f32.mrf.mxu0
          %v1018 = vadd.f32 0.0, %v1017
          %1019 = vmatmul.f32.gmra.mxu0 %v949
          %v1020 = vpop.f32.mrf.mxu0
          %v1021 = vadd.f32 0.0, %v1020
          %1022 = vmatmul.f32.gmra.mxu0 %v950
          %v1023 = vpop.f32.mrf.mxu0
          %v1024 = vadd.f32 0.0, %v1023
          %1025 = vmatmul.f32.gmra.mxu0 %v951
          %v1026 = vpop.f32.mrf.mxu0
          %v1027 = vadd.f32 0.0, %v1026
          %1028 = vmatmul.f32.gmra.mxu0 %v952
          %v1029 = vpop.f32.mrf.mxu0
          %v1030 = vadd.f32 0.0, %v1029
          %1031 = vmatmul.f32.gmra.mxu0 %v953
          %v1032 = vpop.f32.mrf.mxu0
          %v1033 = vadd.f32 0.0, %v1032
          %1034 = vdwg.mxu0
          %v1035 = vpack.c.bf16 %v988, %v988
          %v1036 = vpack.c.bf16 %v991, %v991
          %v1037 = vpack.c.bf16 %v994, %v994
          %v1038 = vpack.c.bf16 %v997, %v997
          %v1039 = vpack.c.bf16 %v1000, %v1000
          %v1040 = vpack.c.bf16 %v1003, %v1003
          %v1041 = vpack.c.bf16 %v1006, %v1006
          %v1042 = vpack.c.bf16 %v1009, %v1009
          %v1043 = vpack.c.bf16 %v1012, %v1012
          %v1044 = vpack.c.bf16 %v1015, %v1015
          %v1045 = vpack.c.bf16 %v1018, %v1018
          %v1046 = vpack.c.bf16 %v1021, %v1021
          %v1047 = vpack.c.bf16 %v1024, %v1024
          %v1048 = vpack.c.bf16 %v1027, %v1027
          %v1049 = vpack.c.bf16 %v1030, %v1030
          %v1050 = vpack.c.bf16 %v1033, %v1033
          %1051 = vst [vmem:[#allocation2] sm:$0xf] %v1035
          %1052 = vst [vmem:[#allocation2 + $0x4] sm:$0xf] %v1036
          %1053 = vst [vmem:[#allocation2 + $0x8] sm:$0xf] %v1037
          %1054 = vst [vmem:[#allocation2 + $0xc] sm:$0xf] %v1038
          %1055 = vst [vmem:[#allocation2 + $0x10] sm:$0xf] %v1039
          %1056 = vst [vmem:[#allocation2 + $0x14] sm:$0xf] %v1040
          %1057 = vst [vmem:[#allocation2 + $0x18] sm:$0xf] %v1041
          %1058 = vst [vmem:[#allocation2 + $0x1c] sm:$0xf] %v1042
          %1059 = vst [vmem:[#allocation2 + $0x20] sm:$0xf] %v1043
          %1060 = vst [vmem:[#allocation2 + $0x24] sm:$0xf] %v1044
          %1061 = vst [vmem:[#allocation2 + $0x28] sm:$0xf] %v1045
          %1062 = vst [vmem:[#allocation2 + $0x2c] sm:$0xf] %v1046
          %1063 = vst [vmem:[#allocation2 + $0x30] sm:$0xf] %v1047
          %1064 = vst [vmem:[#allocation2 + $0x34] sm:$0xf] %v1048
          %1065 = vst [vmem:[#allocation2 + $0x38] sm:$0xf] %v1049
          %1066 = vst [vmem:[#allocation2 + $0x3c] sm:$0xf] %v1050
          %1067 = vst [vmem:[#allocation3] sm:$0xff] 0.0
          %1068 = vst [vmem:[#allocation3 + $0x8] sm:$0xff] 0.0
          %1069 = vst [vmem:[#allocation3 + $0x10] sm:$0xff] 0.0
          %1070 = vst [vmem:[#allocation3 + $0x18] sm:$0xff] 0.0
          %1071 = vst [vmem:[#allocation3 + $0x20] sm:$0xff] 0.0
          %1072 = vst [vmem:[#allocation3 + $0x28] sm:$0xff] 0.0
          %1073 = vst [vmem:[#allocation3 + $0x30] sm:$0xff] 0.0
          %1074 = vst [vmem:[#allocation3 + $0x38] sm:$0xff] 0.0
          %1075 = vst [vmem:[#allocation3 + $0x40] sm:$0xff] 0.0
          %1076 = vst [vmem:[#allocation3 + $0x48] sm:$0xff] 0.0
          %1077 = vst [vmem:[#allocation3 + $0x50] sm:$0xff] 0.0
          %1078 = vst [vmem:[#allocation3 + $0x58] sm:$0xff] 0.0
          %1079 = vst [vmem:[#allocation3 + $0x60] sm:$0xff] 0.0
          %1080 = vst [vmem:[#allocation3 + $0x68] sm:$0xff] 0.0
          %1081 = vst [vmem:[#allocation3 + $0x70] sm:$0xff] 0.0
          %1082 = vst [vmem:[#allocation3 + $0x78] sm:$0xff] 0.0
        $region108: #{tpu_custom_call.1} parent=79 // pred_fallthru
          _
        %v1083 = vld [vmem:[%s850] sm:$0xff]
        %v1084 = vld [vmem:[%s850 + $0x8] sm:$0xff]
        %v1085 = vld [vmem:[%s850 + $0x10] sm:$0xff]
        %v1086 = vld [vmem:[%s850 + $0x18] sm:$0xff]
        %v1087 = vld [vmem:[%s850 + $0x20] sm:$0xff]
        %v1088 = vld [vmem:[%s850 + $0x28] sm:$0xff]
        %v1089 = vld [vmem:[%s850 + $0x30] sm:$0xff]
        %v1090 = vld [vmem:[%s850 + $0x38] sm:$0xff]
        %v1091 = vld [vmem:[%s850 + $0x40] sm:$0xff]
        %v1092 = vld [vmem:[%s850 + $0x48] sm:$0xff]
        %v1093 = vld [vmem:[%s850 + $0x50] sm:$0xff]
        %v1094 = vld [vmem:[%s850 + $0x58] sm:$0xff]
        %v1095 = vld [vmem:[%s850 + $0x60] sm:$0xff]
        %v1096 = vld [vmem:[%s850 + $0x68] sm:$0xff]
        %v1097 = vld [vmem:[%s850 + $0x70] sm:$0xff]
        %v1098 = vld [vmem:[%s850 + $0x78] sm:$0xff]
        %v1099 = vld [vmem:[%s860] sm:$0xff]
        %v1100 = vld [vmem:[%s860 + $0x8] sm:$0xff]
        %v1101 = vld [vmem:[%s860 + $0x10] sm:$0xff]
        %v1102 = vld [vmem:[%s860 + $0x18] sm:$0xff]
        %v1103 = vld [vmem:[%s860 + $0x20] sm:$0xff]
        %v1104 = vld [vmem:[%s860 + $0x28] sm:$0xff]
        %v1105 = vld [vmem:[%s860 + $0x30] sm:$0xff]
        %v1106 = vld [vmem:[%s860 + $0x38] sm:$0xff]
        %v1107 = vld [vmem:[%s860 + $0x40] sm:$0xff]
        %v1108 = vld [vmem:[%s860 + $0x48] sm:$0xff]
        %v1109 = vld [vmem:[%s860 + $0x50] sm:$0xff]
        %v1110 = vld [vmem:[%s860 + $0x58] sm:$0xff]
        %v1111 = vld [vmem:[%s860 + $0x60] sm:$0xff]
        %v1112 = vld [vmem:[%s860 + $0x68] sm:$0xff]
        %v1113 = vld [vmem:[%s860 + $0x70] sm:$0xff]
        %v1114 = vld [vmem:[%s860 + $0x78] sm:$0xff]
        %v1115 = vld [vmem:[#allocation4] sm:$0x1]
        %1117 = vset.pattern.permute.xlu0 0
        %1118 = vperm.xlu0 %1117, %v1083
        %v1119 = vpop.permute.xlu0 %1118
        %1122 = vset.pattern.permute.xlu0 0
        %1123 = vperm.xlu0 %1122, %v1084
        %v1124 = vpop.permute.xlu0 %1123
        %1127 = vset.pattern.permute.xlu0 0
        %1128 = vperm.xlu0 %1127, %v1085
        %v1129 = vpop.permute.xlu0 %1128
        %1132 = vset.pattern.permute.xlu0 0
        %1133 = vperm.xlu0 %1132, %v1086
        %v1134 = vpop.permute.xlu0 %1133
        %1137 = vset.pattern.permute.xlu0 0
        %1138 = vperm.xlu0 %1137, %v1087
        %v1139 = vpop.permute.xlu0 %1138
        %1142 = vset.pattern.permute.xlu0 0
        %1143 = vperm.xlu0 %1142, %v1088
        %v1144 = vpop.permute.xlu0 %1143
        %1147 = vset.pattern.permute.xlu0 0
        %1148 = vperm.xlu0 %1147, %v1089
        %v1149 = vpop.permute.xlu0 %1148
        %1152 = vset.pattern.permute.xlu0 0
        %1153 = vperm.xlu0 %1152, %v1090
        %v1154 = vpop.permute.xlu0 %1153
        %1157 = vset.pattern.permute.xlu0 0
        %1158 = vperm.xlu0 %1157, %v1091
        %v1159 = vpop.permute.xlu0 %1158
        %1162 = vset.pattern.permute.xlu0 0
        %1163 = vperm.xlu0 %1162, %v1092
        %v1164 = vpop.permute.xlu0 %1163
        %1167 = vset.pattern.permute.xlu0 0
        %1168 = vperm.xlu0 %1167, %v1093
        %v1169 = vpop.permute.xlu0 %1168
        %1172 = vset.pattern.permute.xlu0 0
        %1173 = vperm.xlu0 %1172, %v1094
        %v1174 = vpop.permute.xlu0 %1173
        %1177 = vset.pattern.permute.xlu0 0
        %1178 = vperm.xlu0 %1177, %v1095
        %v1179 = vpop.permute.xlu0 %1178
        %1182 = vset.pattern.permute.xlu0 0
        %1183 = vperm.xlu0 %1182, %v1096
        %v1184 = vpop.permute.xlu0 %1183
        %1187 = vset.pattern.permute.xlu0 0
        %1188 = vperm.xlu0 %1187, %v1097
        %v1189 = vpop.permute.xlu0 %1188
        %1192 = vset.pattern.permute.xlu0 0
        %1193 = vperm.xlu0 %1192, %v1098
        %v1194 = vpop.permute.xlu0 %1193
        %v1197 = vperm.slane %v1115, 0
        %v1199 = vsub.f32 %v1119, %v1197
        %v1200 = vsub.f32 %v1124, %v1197
        %v1201 = vsub.f32 %v1129, %v1197
        %v1202 = vsub.f32 %v1134, %v1197
        %v1203 = vsub.f32 %v1139, %v1197
        %v1204 = vsub.f32 %v1144, %v1197
        %v1205 = vsub.f32 %v1149, %v1197
        %v1206 = vsub.f32 %v1154, %v1197
        %v1207 = vsub.f32 %v1159, %v1197
        %v1208 = vsub.f32 %v1164, %v1197
        %v1209 = vsub.f32 %v1169, %v1197
        %v1210 = vsub.f32 %v1174, %v1197
        %v1211 = vsub.f32 %v1179, %v1197
        %v1212 = vsub.f32 %v1184, %v1197
        %v1213 = vsub.f32 %v1189, %v1197
        %v1214 = vsub.f32 %v1194, %v1197
        %v1215 = vmul.f32 %v1199, %v1199
        %v1216 = vmul.f32 %v1200, %v1200
        %v1217 = vmul.f32 %v1201, %v1201
        %v1218 = vmul.f32 %v1202, %v1202
        %v1219 = vmul.f32 %v1203, %v1203
        %v1220 = vmul.f32 %v1204, %v1204
        %v1221 = vmul.f32 %v1205, %v1205
        %v1222 = vmul.f32 %v1206, %v1206
        %v1223 = vmul.f32 %v1207, %v1207
        %v1224 = vmul.f32 %v1208, %v1208
        %v1225 = vmul.f32 %v1209, %v1209
        %v1226 = vmul.f32 %v1210, %v1210
        %v1227 = vmul.f32 %v1211, %v1211
        %v1228 = vmul.f32 %v1212, %v1212
        %v1229 = vmul.f32 %v1213, %v1213
        %v1230 = vmul.f32 %v1214, %v1214
        %v1231 = vmul.f32 %v1215, -4.5
        %v1232 = vmul.f32 %v1216, -4.5
        %v1233 = vmul.f32 %v1217, -4.5
        %v1234 = vmul.f32 %v1218, -4.5
        %v1235 = vmul.f32 %v1219, -4.5
        %v1236 = vmul.f32 %v1220, -4.5
        %v1237 = vmul.f32 %v1221, -4.5
        %v1238 = vmul.f32 %v1222, -4.5
        %v1239 = vmul.f32 %v1223, -4.5
        %v1240 = vmul.f32 %v1224, -4.5
        %v1241 = vmul.f32 %v1225, -4.5
        %v1242 = vmul.f32 %v1226, -4.5
        %v1243 = vmul.f32 %v1227, -4.5
        %v1244 = vmul.f32 %v1228, -4.5
        %v1245 = vmul.f32 %v1229, -4.5
        %v1246 = vmul.f32 %v1230, -4.5
        %v1247 = vmul.f32 %v1231, 1.442695
        %v1248 = vpow.pop %v1247
        %v1249 = vmul.f32 %v1232, 1.442695
        %v1250 = vpow.pop %v1249
        %v1251 = vmul.f32 %v1233, 1.442695
        %v1252 = vpow.pop %v1251
        %v1253 = vmul.f32 %v1234, 1.442695
        %v1254 = vpow.pop %v1253
        %v1255 = vmul.f32 %v1235, 1.442695
        %v1256 = vpow.pop %v1255
        %v1257 = vmul.f32 %v1236, 1.442695
        %v1258 = vpow.pop %v1257
        %v1259 = vmul.f32 %v1237, 1.442695
        %v1260 = vpow.pop %v1259
        %v1261 = vmul.f32 %v1238, 1.442695
        %v1262 = vpow.pop %v1261
        %v1263 = vmul.f32 %v1239, 1.442695
        %v1264 = vpow.pop %v1263
        %v1265 = vmul.f32 %v1240, 1.442695
        %v1266 = vpow.pop %v1265
        %v1267 = vmul.f32 %v1241, 1.442695
        %v1268 = vpow.pop %v1267
        %v1269 = vmul.f32 %v1242, 1.442695
        %v1270 = vpow.pop %v1269
        %v1271 = vmul.f32 %v1243, 1.442695
        %v1272 = vpow.pop %v1271
        %v1273 = vmul.f32 %v1244, 1.442695
        %v1274 = vpow.pop %v1273
        %v1275 = vmul.f32 %v1245, 1.442695
        %v1276 = vpow.pop %v1275
        %v1277 = vmul.f32 %v1246, 1.442695
        %v1278 = vpow.pop %v1277
        %v1279 = vmul.f32 %v1083, 0.62831855
        %v1280 = vmul.f32 %v1084, 0.62831855
        %v1281 = vmul.f32 %v1085, 0.62831855
        %v1282 = vmul.f32 %v1086, 0.62831855
        %v1283 = vmul.f32 %v1087, 0.62831855
        %v1284 = vmul.f32 %v1088, 0.62831855
        %v1285 = vmul.f32 %v1089, 0.62831855
        %v1286 = vmul.f32 %v1090, 0.62831855
        %v1287 = vmul.f32 %v1091, 0.62831855
        %v1288 = vmul.f32 %v1092, 0.62831855
        %v1289 = vmul.f32 %v1093, 0.62831855
        %v1290 = vmul.f32 %v1094, 0.62831855
        %v1291 = vmul.f32 %v1095, 0.62831855
        %v1292 = vmul.f32 %v1096, 0.62831855
        %v1293 = vmul.f32 %v1097, 0.62831855
        %v1294 = vmul.f32 %v1098, 0.62831855
        %v1295 = vand.u32 2147483647, %v1279
        %vm1296 = vcmp.le.f32.partialorder %v1295, 0.7853982
        %vm1297 = vcmp.lt.s32.totalorder %v1279, 0
        %v1298 = vand.u32 %v1279, 2139095040
        %v1299 = vshrl.u32 %v1298, 23
        %v1300 = vsub.s32 %v1299, 127
        %v1301 = vand.u32 2147483647, %v1279
        %v1302 = vand.u32 %v1301, 8388607
        %v1303 = vor.u32 %v1302, 8388608
        %v1304 = vsub.s32 0, %v1303
        %v1305 = vadd.s32 %v1300, 1
        %vm1306 = vcmp.gt.s32.totalorder %v1305, 0
        %v1307 = vsel %vm1306, %v1305, 0
        %v1308 = vshrl.u32 %v1307, 5
        %v1309 = vand.u32 %v1307, 31
        %v1310 = vsub.s32 32, %v1309
        %v1311 = vshrl.u32 683565275, %v1310
        %v1312 = vshll.u32 683565275, %v1309
        %v1313 = vshrl.u32 2475754826, %v1310
        %v1314 = vor.u32 %v1312, %v1313
        %v1315 = vshll.u32 2475754826, %v1309
        %v1316 = vshrl.u32 2131351028, %v1310
        %v1317 = vor.u32 %v1315, %v1316
        %v1318 = vshll.u32 2131351028, %v1309
        %v1319 = vshrl.u32 2102212464, %v1310
        %v1320 = vor.u32 %v1318, %v1319
        %v1321 = vshll.u32 2102212464, %v1309
        %v1322 = vshrl.u32 920167782, %v1310
        %v1323 = vor.u32 %v1321, %v1322
        %v1324 = vshll.u32 920167782, %v1309
        %v1325 = vshrl.u32 1326507024, %v1310
        %v1326 = vor.u32 %v1324, %v1325
        %vm1327 = vcmp.lt.s32.totalorder %v1308, 1
        %vm1328 = vcmp.lt.s32.totalorder %v1308, 2
        %vm1329 = vcmp.lt.s32.totalorder %v1308, 3
        %vm1330 = vcmp.lt.s32.totalorder %v1308, 4
        %v1331 = vsel %vm1327, %v1311, %v1314
        %v1332 = vsel %vm1330, %v1320, 2102212464
        %v1333 = vsel %vm1329, %v1317, %v1332
        %v1334 = vsel %vm1328, %v1331, %v1333
        %v1335 = vsel %vm1327, %v1314, %v1317
        %v1336 = vsel %vm1330, %v1323, 920167782
        %v1337 = vsel %vm1329, %v1320, %v1336
        %v1338 = vsel %vm1328, %v1335, %v1337
        %v1339 = vsel %vm1327, %v1317, %v1320
        %v1340 = vsel %vm1330, %v1326, 1326507024
        %v1341 = vsel %vm1329, %v1323, %v1340
        %v1342 = vsel %vm1328, %v1339, %v1341
        %v1343 = vshll.u32 %v1303, 8
        %v1344 = vand.u32 %v1343, 65535
        %v1345 = vshrl.u32 %v1343, 16
        %v1346 = vand.u32 %v1342, 65535
        %v1347 = vshrl.u32 %v1342, 16
        %v1348 = vmul.u32 %v1344, %v1346
        %v1349 = vmul.u32 %v1344, %v1347
        %v1350 = vmul.u32 %v1345, %v1346
        %v1351 = vmul.u32 %v1345, %v1347
        %v1352 = vshll.u32 %v1349, 16
        %v1353 = vshrl.u32 %v1349, 16
        %v1354 = vshll.u32 %v1350, 16
        %v1355 = vshrl.u32 %v1350, 16
        %vm1356 = vc.u32 %v1348, %v1352
        %v1357 = vsel %vm1356, 1, 0
        %v1358 = vadd.s32 %v1348, %v1352
        %v1359 = vadd.s32 %v1351, %v1357
        %vm1360 = vc.u32 %v1358, %v1354
        %v1361 = vsel %vm1360, 1, 0
        %v1362 = vadd.s32 %v1358, %v1354
        %v1363 = vadd.s32 %v1359, %v1361
        %v1364 = vadd.s32 %v1363, %v1353
        %v1365 = vadd.s32 %v1364, %v1355
        %v1366 = vand.u32 %v1343, 65535
        %v1367 = vshrl.u32 %v1343, 16
        %v1368 = vand.u32 %v1338, 65535
        %v1369 = vshrl.u32 %v1338, 16
        %v1370 = vmul.u32 %v1366, %v1368
        %v1371 = vmul.u32 %v1366, %v1369
        %v1372 = vmul.u32 %v1367, %v1368
        %v1373 = vmul.u32 %v1367, %v1369
        %v1374 = vshll.u32 %v1371, 16
        %v1375 = vshrl.u32 %v1371, 16
        %v1376 = vshll.u32 %v1372, 16
        %v1377 = vshrl.u32 %v1372, 16
        %vm1378 = vc.u32 %v1370, %v1374
        %v1379 = vsel %vm1378, 1, 0
        %v1380 = vadd.s32 %v1370, %v1374
        %v1381 = vadd.s32 %v1373, %v1379
        %vm1382 = vc.u32 %v1380, %v1376
        %v1383 = vsel %vm1382, 1, 0
        %v1384 = vadd.s32 %v1380, %v1376
        %v1385 = vadd.s32 %v1381, %v1383
        %v1386 = vadd.s32 %v1385, %v1375
        %v1387 = vadd.s32 %v1386, %v1377
        %v1388 = vmul.u32 %v1343, %v1334
        %v1389 = vadd.s32 %v1365, %v1384
        %vm1390 = vc.u32 %v1365, %v1384
        %v1391 = vadd.s32 %v1387, 1
        %v1392 = vsel %vm1390, %v1391, %v1387
        %v1393 = vadd.s32 %v1388, %v1392
        %v1394 = vadd.s32 %v1393, 536870912
        %v1395 = vshrl.u32 %v1394, 30
        %v1396 = vshll.u32 %v1395, 30
        %v1397 = vsub.s32 %v1393, %v1396
        %vm1398 = vcmp.lt.s32.totalorder %v1397, 0
        %v1399 = vsub.s32 0, %v1397
        %v1400 = vsel %vm1398, %v1399, %v1397
        %v1401 = vclz %v1400
        %v1402 = vsub.s32 %v1401, 2
        %vm1403 = vcmp.gt.s32.totalorder 0, %v1402
        %v1404 = vsel %vm1403, 0, %v1402
        %v1405 = vsub.s32 32, %v1404
        %v1406 = vshll.u32 %v1397, %v1404
        %v1407 = vshrl.u32 %v1389, %v1405
        %v1408 = vor.u32 %v1406, %v1407
        %v1409 = vsub.s32 4294967266, %v1404
        %v1410 = vadd.s32 %v1409, 127
        %v1411 = vshll.u32 %v1410, 23
        %v1412 = vor.u32 4788187, %v1411
        %v1413 = vand.u32 2147483647, %v1412
        %v1415 = vcvt.s32.f32 %v1408
        %v1416 = vmul.f32 %v1415, %v1413
        %v1417 = vxor.u32 %v1416, 2147483648
        %v1418 = vsel %vm1297, %v1417, %v1416
        %v1419 = vsub.s32 4, %v1395
        %v1420 = vsel %vm1297, %v1419, %v1395
        %v1421 = vsel %vm1296, %v1279, %v1418
        %v1422 = vsel %vm1296, 0, %v1420
        %v1423 = vmul.f32 %v1421, %v1421
        %v1424 = vmul.f32 %v1423, -0.001358992
        %v1425 = vadd.f32 %v1424, 0.041655596
        %v1426 = vmul.f32 %v1423, %v1425
        %v1427 = vadd.f32 %v1426, -0.4999988
        %v1428 = vmul.f32 %v1423, %v1427
        %v1429 = vadd.f32 1.0, %v1428
        %v1430 = vmul.f32 %v1421, %v1421
        %v1431 = vmul.f32 %v1430, -0.00019511016
        %v1432 = vadd.f32 %v1431, 0.008332121
        %v1433 = vmul.f32 %v1430, %v1432
        %v1434 = vadd.f32 %v1433, -0.16666654
        %v1435 = vmul.f32 %v1430, %v1434
        %v1436 = vadd.f32 %v1435, 1.0
        %v1437 = vmul.f32 %v1436, %v1421
        %vm1438 = vweird.f32 %v1279
        %v1439 = vand.u32 %v1422, 3
        %vm1440 = vcmp.lt.s32.totalorder %v1439, 2
        %vm1441 = vcmp.eq.s32.totalorder %v1439, 0
        %v1442 = vxor.u32 %v1437, 2147483648
        %v1443 = vsel %vm1441, %v1429, %v1442
        %vm1444 = vcmp.eq.s32.totalorder %v1439, 2
        %v1445 = vxor.u32 %v1429, 2147483648
        %v1446 = vsel %vm1444, %v1445, %v1437
        %v1447 = vsel %vm1440, %v1443, %v1446
        %v1448 = vsel %vm1438, nan, %v1447
        %v1449 = vand.u32 2147483647, %v1280
        %vm1450 = vcmp.le.f32.partialorder %v1449, 0.7853982
        %vm1451 = vcmp.lt.s32.totalorder %v1280, 0
        %v1452 = vand.u32 %v1280, 2139095040
        %v1453 = vshrl.u32 %v1452, 23
        %v1454 = vsub.s32 %v1453, 127
        %v1455 = vand.u32 2147483647, %v1280
        %v1456 = vand.u32 %v1455, 8388607
        %v1457 = vor.u32 %v1456, 8388608
        %v1458 = vsub.s32 0, %v1457
        %v1459 = vadd.s32 %v1454, 1
        %vm1460 = vcmp.gt.s32.totalorder %v1459, 0
        %v1461 = vsel %vm1460, %v1459, 0
        %v1462 = vshrl.u32 %v1461, 5
        %v1463 = vand.u32 %v1461, 31
        %v1464 = vsub.s32 32, %v1463
        %v1465 = vshrl.u32 683565275, %v1464
        %v1466 = vshll.u32 683565275, %v1463
        %v1467 = vshrl.u32 2475754826, %v1464
        %v1468 = vor.u32 %v1466, %v1467
        %v1469 = vshll.u32 2475754826, %v1463
        %v1470 = vshrl.u32 2131351028, %v1464
        %v1471 = vor.u32 %v1469, %v1470
        %v1472 = vshll.u32 2131351028, %v1463
        %v1473 = vshrl.u32 2102212464, %v1464
        %v1474 = vor.u32 %v1472, %v1473
        %v1475 = vshll.u32 2102212464, %v1463
        %v1476 = vshrl.u32 920167782, %v1464
        %v1477 = vor.u32 %v1475, %v1476
        %v1478 = vshll.u32 920167782, %v1463
        %v1479 = vshrl.u32 1326507024, %v1464
        %v1480 = vor.u32 %v1478, %v1479
        %vm1481 = vcmp.lt.s32.totalorder %v1462, 1
        %vm1482 = vcmp.lt.s32.totalorder %v1462, 2
        %vm1483 = vcmp.lt.s32.totalorder %v1462, 3
        %vm1484 = vcmp.lt.s32.totalorder %v1462, 4
        %v1485 = vsel %vm1481, %v1465, %v1468
        %v1486 = vsel %vm1484, %v1474, 2102212464
        %v1487 = vsel %vm1483, %v1471, %v1486
        %v1488 = vsel %vm1482, %v1485, %v1487
        %v1489 = vsel %vm1481, %v1468, %v1471
        %v1490 = vsel %vm1484, %v1477, 920167782
        %v1491 = vsel %vm1483, %v1474, %v1490
        %v1492 = vsel %vm1482, %v1489, %v1491
        %v1493 = vsel %vm1481, %v1471, %v1474
        %v1494 = vsel %vm1484, %v1480, 1326507024
        %v1495 = vsel %vm1483, %v1477, %v1494
        %v1496 = vsel %vm1482, %v1493, %v1495
        %v1497 = vshll.u32 %v1457, 8
        %v1498 = vand.u32 %v1497, 65535
        %v1499 = vshrl.u32 %v1497, 16
        %v1500 = vand.u32 %v1496, 65535
        %v1501 = vshrl.u32 %v1496, 16
        %v1502 = vmul.u32 %v1498, %v1500
        %v1503 = vmul.u32 %v1498, %v1501
        %v1504 = vmul.u32 %v1499, %v1500
        %v1505 = vmul.u32 %v1499, %v1501
        %v1506 = vshll.u32 %v1503, 16
        %v1507 = vshrl.u32 %v1503, 16
        %v1508 = vshll.u32 %v1504, 16
        %v1509 = vshrl.u32 %v1504, 16
        %vm1510 = vc.u32 %v1502, %v1506
        %v1511 = vsel %vm1510, 1, 0
        %v1512 = vadd.s32 %v1502, %v1506
        %v1513 = vadd.s32 %v1505, %v1511
        %vm1514 = vc.u32 %v1512, %v1508
        %v1515 = vsel %vm1514, 1, 0
        %v1516 = vadd.s32 %v1512, %v1508
        %v1517 = vadd.s32 %v1513, %v1515
        %v1518 = vadd.s32 %v1517, %v1507
        %v1519 = vadd.s32 %v1518, %v1509
        %v1520 = vand.u32 %v1497, 65535
        %v1521 = vshrl.u32 %v1497, 16
        %v1522 = vand.u32 %v1492, 65535
        %v1523 = vshrl.u32 %v1492, 16
        %v1524 = vmul.u32 %v1520, %v1522
        %v1525 = vmul.u32 %v1520, %v1523
        %v1526 = vmul.u32 %v1521, %v1522
        %v1527 = vmul.u32 %v1521, %v1523
        %v1528 = vshll.u32 %v1525, 16
        %v1529 = vshrl.u32 %v1525, 16
        %v1530 = vshll.u32 %v1526, 16
        %v1531 = vshrl.u32 %v1526, 16
        %vm1532 = vc.u32 %v1524, %v1528
        %v1533 = vsel %vm1532, 1, 0
        %v1534 = vadd.s32 %v1524, %v1528
        %v1535 = vadd.s32 %v1527, %v1533
        %vm1536 = vc.u32 %v1534, %v1530
        %v1537 = vsel %vm1536, 1, 0
        %v1538 = vadd.s32 %v1534, %v1530
        %v1539 = vadd.s32 %v1535, %v1537
        %v1540 = vadd.s32 %v1539, %v1529
        %v1541 = vadd.s32 %v1540, %v1531
        %v1542 = vmul.u32 %v1497, %v1488
        %v1543 = vadd.s32 %v1519, %v1538
        %vm1544 = vc.u32 %v1519, %v1538
        %v1545 = vadd.s32 %v1541, 1
        %v1546 = vsel %vm1544, %v1545, %v1541
        %v1547 = vadd.s32 %v1542, %v1546
        %v1548 = vadd.s32 %v1547, 536870912
        %v1549 = vshrl.u32 %v1548, 30
        %v1550 = vshll.u32 %v1549, 30
        %v1551 = vsub.s32 %v1547, %v1550
        %vm1552 = vcmp.lt.s32.totalorder %v1551, 0
        %v1553 = vsub.s32 0, %v1551
        %v1554 = vsel %vm1552, %v1553, %v1551
        %v1555 = vclz %v1554
        %v1556 = vsub.s32 %v1555, 2
        %vm1557 = vcmp.gt.s32.totalorder 0, %v1556
        %v1558 = vsel %vm1557, 0, %v1556
        %v1559 = vsub.s32 32, %v1558
        %v1560 = vshll.u32 %v1551, %v1558
        %v1561 = vshrl.u32 %v1543, %v1559
        %v1562 = vor.u32 %v1560, %v1561
        %v1563 = vsub.s32 4294967266, %v1558
        %v1564 = vadd.s32 %v1563, 127
        %v1565 = vshll.u32 %v1564, 23
        %v1566 = vor.u32 4788187, %v1565
        %v1567 = vand.u32 2147483647, %v1566
        %v1569 = vcvt.s32.f32 %v1562
        %v1570 = vmul.f32 %v1569, %v1567
        %v1571 = vxor.u32 %v1570, 2147483648
        %v1572 = vsel %vm1451, %v1571, %v1570
        %v1573 = vsub.s32 4, %v1549
        %v1574 = vsel %vm1451, %v1573, %v1549
        %v1575 = vsel %vm1450, %v1280, %v1572
        %v1576 = vsel %vm1450, 0, %v1574
        %v1577 = vmul.f32 %v1575, %v1575
        %v1578 = vmul.f32 %v1577, -0.001358992
        %v1579 = vadd.f32 %v1578, 0.041655596
        %v1580 = vmul.f32 %v1577, %v1579
        %v1581 = vadd.f32 %v1580, -0.4999988
        %v1582 = vmul.f32 %v1577, %v1581
        %v1583 = vadd.f32 1.0, %v1582
        %v1584 = vmul.f32 %v1575, %v1575
        %v1585 = vmul.f32 %v1584, -0.00019511016
        %v1586 = vadd.f32 %v1585, 0.008332121
        %v1587 = vmul.f32 %v1584, %v1586
        %v1588 = vadd.f32 %v1587, -0.16666654
        %v1589 = vmul.f32 %v1584, %v1588
        %v1590 = vadd.f32 %v1589, 1.0
        %v1591 = vmul.f32 %v1590, %v1575
        %vm1592 = vweird.f32 %v1280
        %v1593 = vand.u32 %v1576, 3
        %vm1594 = vcmp.lt.s32.totalorder %v1593, 2
        %vm1595 = vcmp.eq.s32.totalorder %v1593, 0
        %v1596 = vxor.u32 %v1591, 2147483648
        %v1597 = vsel %vm1595, %v1583, %v1596
        %vm1598 = vcmp.eq.s32.totalorder %v1593, 2
        %v1599 = vxor.u32 %v1583, 2147483648
        %v1600 = vsel %vm1598, %v1599, %v1591
        %v1601 = vsel %vm1594, %v1597, %v1600
        %v1602 = vsel %vm1592, nan, %v1601
        %v1603 = vand.u32 2147483647, %v1281
        %vm1604 = vcmp.le.f32.partialorder %v1603, 0.7853982
        %vm1605 = vcmp.lt.s32.totalorder %v1281, 0
        %v1606 = vand.u32 %v1281, 2139095040
        %v1607 = vshrl.u32 %v1606, 23
        %v1608 = vsub.s32 %v1607, 127
        %v1609 = vand.u32 2147483647, %v1281
        %v1610 = vand.u32 %v1609, 8388607
        %v1611 = vor.u32 %v1610, 8388608
        %v1612 = vsub.s32 0, %v1611
        %v1613 = vadd.s32 %v1608, 1
        %vm1614 = vcmp.gt.s32.totalorder %v1613, 0
        %v1615 = vsel %vm1614, %v1613, 0
        %v1616 = vshrl.u32 %v1615, 5
        %v1617 = vand.u32 %v1615, 31
        %v1618 = vsub.s32 32, %v1617
        %v1619 = vshrl.u32 683565275, %v1618
        %v1620 = vshll.u32 683565275, %v1617
        %v1621 = vshrl.u32 2475754826, %v1618
        %v1622 = vor.u32 %v1620, %v1621
        %v1623 = vshll.u32 2475754826, %v1617
        %v1624 = vshrl.u32 2131351028, %v1618
        %v1625 = vor.u32 %v1623, %v1624
        %v1626 = vshll.u32 2131351028, %v1617
        %v1627 = vshrl.u32 2102212464, %v1618
        %v1628 = vor.u32 %v1626, %v1627
        %v1629 = vshll.u32 2102212464, %v1617
        %v1630 = vshrl.u32 920167782, %v1618
        %v1631 = vor.u32 %v1629, %v1630
        %v1632 = vshll.u32 920167782, %v1617
        %v1633 = vshrl.u32 1326507024, %v1618
        %v1634 = vor.u32 %v1632, %v1633
        %vm1635 = vcmp.lt.s32.totalorder %v1616, 1
        %vm1636 = vcmp.lt.s32.totalorder %v1616, 2
        %vm1637 = vcmp.lt.s32.totalorder %v1616, 3
        %vm1638 = vcmp.lt.s32.totalorder %v1616, 4
        %v1639 = vsel %vm1635, %v1619, %v1622
        %v1640 = vsel %vm1638, %v1628, 2102212464
        %v1641 = vsel %vm1637, %v1625, %v1640
        %v1642 = vsel %vm1636, %v1639, %v1641
        %v1643 = vsel %vm1635, %v1622, %v1625
        %v1644 = vsel %vm1638, %v1631, 920167782
        %v1645 = vsel %vm1637, %v1628, %v1644
        %v1646 = vsel %vm1636, %v1643, %v1645
        %v1647 = vsel %vm1635, %v1625, %v1628
        %v1648 = vsel %vm1638, %v1634, 1326507024
        %v1649 = vsel %vm1637, %v1631, %v1648
        %v1650 = vsel %vm1636, %v1647, %v1649
        %v1651 = vshll.u32 %v1611, 8
        %v1652 = vand.u32 %v1651, 65535
        %v1653 = vshrl.u32 %v1651, 16
        %v1654 = vand.u32 %v1650, 65535
        %v1655 = vshrl.u32 %v1650, 16
        %v1656 = vmul.u32 %v1652, %v1654
        %v1657 = vmul.u32 %v1652, %v1655
        %v1658 = vmul.u32 %v1653, %v1654
        %v1659 = vmul.u32 %v1653, %v1655
        %v1660 = vshll.u32 %v1657, 16
        %v1661 = vshrl.u32 %v1657, 16
        %v1662 = vshll.u32 %v1658, 16
        %v1663 = vshrl.u32 %v1658, 16
        %vm1664 = vc.u32 %v1656, %v1660
        %v1665 = vsel %vm1664, 1, 0
        %v1666 = vadd.s32 %v1656, %v1660
        %v1667 = vadd.s32 %v1659, %v1665
        %vm1668 = vc.u32 %v1666, %v1662
        %v1669 = vsel %vm1668, 1, 0
        %v1670 = vadd.s32 %v1666, %v1662
        %v1671 = vadd.s32 %v1667, %v1669
        %v1672 = vadd.s32 %v1671, %v1661
        %v1673 = vadd.s32 %v1672, %v1663
        %v1674 = vand.u32 %v1651, 65535
        %v1675 = vshrl.u32 %v1651, 16
        %v1676 = vand.u32 %v1646, 65535
        %v1677 = vshrl.u32 %v1646, 16
        %v1678 = vmul.u32 %v1674, %v1676
        %v1679 = vmul.u32 %v1674, %v1677
        %v1680 = vmul.u32 %v1675, %v1676
        %v1681 = vmul.u32 %v1675, %v1677
        %v1682 = vshll.u32 %v1679, 16
        %v1683 = vshrl.u32 %v1679, 16
        %v1684 = vshll.u32 %v1680, 16
        %v1685 = vshrl.u32 %v1680, 16
        %vm1686 = vc.u32 %v1678, %v1682
        %v1687 = vsel %vm1686, 1, 0
        %v1688 = vadd.s32 %v1678, %v1682
        %v1689 = vadd.s32 %v1681, %v1687
        %vm1690 = vc.u32 %v1688, %v1684
        %v1691 = vsel %vm1690, 1, 0
        %v1692 = vadd.s32 %v1688, %v1684
        %v1693 = vadd.s32 %v1689, %v1691
        %v1694 = vadd.s32 %v1693, %v1683
        %v1695 = vadd.s32 %v1694, %v1685
        %v1696 = vmul.u32 %v1651, %v1642
        %v1697 = vadd.s32 %v1673, %v1692
        %vm1698 = vc.u32 %v1673, %v1692
        %v1699 = vadd.s32 %v1695, 1
        %v1700 = vsel %vm1698, %v1699, %v1695
        %v1701 = vadd.s32 %v1696, %v1700
        %v1702 = vadd.s32 %v1701, 536870912
        %v1703 = vshrl.u32 %v1702, 30
        %v1704 = vshll.u32 %v1703, 30
        %v1705 = vsub.s32 %v1701, %v1704
        %vm1706 = vcmp.lt.s32.totalorder %v1705, 0
        %v1707 = vsub.s32 0, %v1705
        %v1708 = vsel %vm1706, %v1707, %v1705
        %v1709 = vclz %v1708
        %v1710 = vsub.s32 %v1709, 2
        %vm1711 = vcmp.gt.s32.totalorder 0, %v1710
        %v1712 = vsel %vm1711, 0, %v1710
        %v1713 = vsub.s32 32, %v1712
        %v1714 = vshll.u32 %v1705, %v1712
        %v1715 = vshrl.u32 %v1697, %v1713
        %v1716 = vor.u32 %v1714, %v1715
        %v1717 = vsub.s32 4294967266, %v1712
        %v1718 = vadd.s32 %v1717, 127
        %v1719 = vshll.u32 %v1718, 23
        %v1720 = vor.u32 4788187, %v1719
        %v1721 = vand.u32 2147483647, %v1720
        %v1723 = vcvt.s32.f32 %v1716
        %v1724 = vmul.f32 %v1723, %v1721
        %v1725 = vxor.u32 %v1724, 2147483648
        %v1726 = vsel %vm1605, %v1725, %v1724
        %v1727 = vsub.s32 4, %v1703
        %v1728 = vsel %vm1605, %v1727, %v1703
        %v1729 = vsel %vm1604, %v1281, %v1726
        %v1730 = vsel %vm1604, 0, %v1728
        %v1731 = vmul.f32 %v1729, %v1729
        %v1732 = vmul.f32 %v1731, -0.001358992
        %v1733 = vadd.f32 %v1732, 0.041655596
        %v1734 = vmul.f32 %v1731, %v1733
        %v1735 = vadd.f32 %v1734, -0.4999988
        %v1736 = vmul.f32 %v1731, %v1735
        %v1737 = vadd.f32 1.0, %v1736
        %v1738 = vmul.f32 %v1729, %v1729
        %v1739 = vmul.f32 %v1738, -0.00019511016
        %v1740 = vadd.f32 %v1739, 0.008332121
        %v1741 = vmul.f32 %v1738, %v1740
        %v1742 = vadd.f32 %v1741, -0.16666654
        %v1743 = vmul.f32 %v1738, %v1742
        %v1744 = vadd.f32 %v1743, 1.0
        %v1745 = vmul.f32 %v1744, %v1729
        %vm1746 = vweird.f32 %v1281
        %v1747 = vand.u32 %v1730, 3
        %vm1748 = vcmp.lt.s32.totalorder %v1747, 2
        %vm1749 = vcmp.eq.s32.totalorder %v1747, 0
        %v1750 = vxor.u32 %v1745, 2147483648
        %v1751 = vsel %vm1749, %v1737, %v1750
        %vm1752 = vcmp.eq.s32.totalorder %v1747, 2
        %v1753 = vxor.u32 %v1737, 2147483648
        %v1754 = vsel %vm1752, %v1753, %v1745
        %v1755 = vsel %vm1748, %v1751, %v1754
        %v1756 = vsel %vm1746, nan, %v1755
        %v1757 = vand.u32 2147483647, %v1282
        %vm1758 = vcmp.le.f32.partialorder %v1757, 0.7853982
        %vm1759 = vcmp.lt.s32.totalorder %v1282, 0
        %v1760 = vand.u32 %v1282, 2139095040
        %v1761 = vshrl.u32 %v1760, 23
        %v1762 = vsub.s32 %v1761, 127
        %v1763 = vand.u32 2147483647, %v1282
        %v1764 = vand.u32 %v1763, 8388607
        %v1765 = vor.u32 %v1764, 8388608
        %v1766 = vsub.s32 0, %v1765
        %v1767 = vadd.s32 %v1762, 1
        %vm1768 = vcmp.gt.s32.totalorder %v1767, 0
        %v1769 = vsel %vm1768, %v1767, 0
        %v1770 = vshrl.u32 %v1769, 5
        %v1771 = vand.u32 %v1769, 31
        %v1772 = vsub.s32 32, %v1771
        %v1773 = vshrl.u32 683565275, %v1772
        %v1774 = vshll.u32 683565275, %v1771
        %v1775 = vshrl.u32 2475754826, %v1772
        %v1776 = vor.u32 %v1774, %v1775
        %v1777 = vshll.u32 2475754826, %v1771
        %v1778 = vshrl.u32 2131351028, %v1772
        %v1779 = vor.u32 %v1777, %v1778
        %v1780 = vshll.u32 2131351028, %v1771
        %v1781 = vshrl.u32 2102212464, %v1772
        %v1782 = vor.u32 %v1780, %v1781
        %v1783 = vshll.u32 2102212464, %v1771
        %v1784 = vshrl.u32 920167782, %v1772
        %v1785 = vor.u32 %v1783, %v1784
        %v1786 = vshll.u32 920167782, %v1771
        %v1787 = vshrl.u32 1326507024, %v1772
        %v1788 = vor.u32 %v1786, %v1787
        %vm1789 = vcmp.lt.s32.totalorder %v1770, 1
        %vm1790 = vcmp.lt.s32.totalorder %v1770, 2
        %vm1791 = vcmp.lt.s32.totalorder %v1770, 3
        %vm1792 = vcmp.lt.s32.totalorder %v1770, 4
        %v1793 = vsel %vm1789, %v1773, %v1776
        %v1794 = vsel %vm1792, %v1782, 2102212464
        %v1795 = vsel %vm1791, %v1779, %v1794
        %v1796 = vsel %vm1790, %v1793, %v1795
        %v1797 = vsel %vm1789, %v1776, %v1779
        %v1798 = vsel %vm1792, %v1785, 920167782
        %v1799 = vsel %vm1791, %v1782, %v1798
        %v1800 = vsel %vm1790, %v1797, %v1799
        %v1801 = vsel %vm1789, %v1779, %v1782
        %v1802 = vsel %vm1792, %v1788, 1326507024
        %v1803 = vsel %vm1791, %v1785, %v1802
        %v1804 = vsel %vm1790, %v1801, %v1803
        %v1805 = vshll.u32 %v1765, 8
        %v1806 = vand.u32 %v1805, 65535
        %v1807 = vshrl.u32 %v1805, 16
        %v1808 = vand.u32 %v1804, 65535
        %v1809 = vshrl.u32 %v1804, 16
        %v1810 = vmul.u32 %v1806, %v1808
        %v1811 = vmul.u32 %v1806, %v1809
        %v1812 = vmul.u32 %v1807, %v1808
        %v1813 = vmul.u32 %v1807, %v1809
        %v1814 = vshll.u32 %v1811, 16
        %v1815 = vshrl.u32 %v1811, 16
        %v1816 = vshll.u32 %v1812, 16
        %v1817 = vshrl.u32 %v1812, 16
        %vm1818 = vc.u32 %v1810, %v1814
        %v1819 = vsel %vm1818, 1, 0
        %v1820 = vadd.s32 %v1810, %v1814
        %v1821 = vadd.s32 %v1813, %v1819
        %vm1822 = vc.u32 %v1820, %v1816
        %v1823 = vsel %vm1822, 1, 0
        %v1824 = vadd.s32 %v1820, %v1816
        %v1825 = vadd.s32 %v1821, %v1823
        %v1826 = vadd.s32 %v1825, %v1815
        %v1827 = vadd.s32 %v1826, %v1817
        %v1828 = vand.u32 %v1805, 65535
        %v1829 = vshrl.u32 %v1805, 16
        %v1830 = vand.u32 %v1800, 65535
        %v1831 = vshrl.u32 %v1800, 16
        %v1832 = vmul.u32 %v1828, %v1830
        %v1833 = vmul.u32 %v1828, %v1831
        %v1834 = vmul.u32 %v1829, %v1830
        %v1835 = vmul.u32 %v1829, %v1831
        %v1836 = vshll.u32 %v1833, 16
        %v1837 = vshrl.u32 %v1833, 16
        %v1838 = vshll.u32 %v1834, 16
        %v1839 = vshrl.u32 %v1834, 16
        %vm1840 = vc.u32 %v1832, %v1836
        %v1841 = vsel %vm1840, 1, 0
        %v1842 = vadd.s32 %v1832, %v1836
        %v1843 = vadd.s32 %v1835, %v1841
        %vm1844 = vc.u32 %v1842, %v1838
        %v1845 = vsel %vm1844, 1, 0
        %v1846 = vadd.s32 %v1842, %v1838
        %v1847 = vadd.s32 %v1843, %v1845
        %v1848 = vadd.s32 %v1847, %v1837
        %v1849 = vadd.s32 %v1848, %v1839
        %v1850 = vmul.u32 %v1805, %v1796
        %v1851 = vadd.s32 %v1827, %v1846
        %vm1852 = vc.u32 %v1827, %v1846
        %v1853 = vadd.s32 %v1849, 1
        %v1854 = vsel %vm1852, %v1853, %v1849
        %v1855 = vadd.s32 %v1850, %v1854
        %v1856 = vadd.s32 %v1855, 536870912
        %v1857 = vshrl.u32 %v1856, 30
        %v1858 = vshll.u32 %v1857, 30
        %v1859 = vsub.s32 %v1855, %v1858
        %vm1860 = vcmp.lt.s32.totalorder %v1859, 0
        %v1861 = vsub.s32 0, %v1859
        %v1862 = vsel %vm1860, %v1861, %v1859
        %v1863 = vclz %v1862
        %v1864 = vsub.s32 %v1863, 2
        %vm1865 = vcmp.gt.s32.totalorder 0, %v1864
        %v1866 = vsel %vm1865, 0, %v1864
        %v1867 = vsub.s32 32, %v1866
        %v1868 = vshll.u32 %v1859, %v1866
        %v1869 = vshrl.u32 %v1851, %v1867
        %v1870 = vor.u32 %v1868, %v1869
        %v1871 = vsub.s32 4294967266, %v1866
        %v1872 = vadd.s32 %v1871, 127
        %v1873 = vshll.u32 %v1872, 23
        %v1874 = vor.u32 4788187, %v1873
        %v1875 = vand.u32 2147483647, %v1874
        %v1877 = vcvt.s32.f32 %v1870
        %v1878 = vmul.f32 %v1877, %v1875
        %v1879 = vxor.u32 %v1878, 2147483648
        %v1880 = vsel %vm1759, %v1879, %v1878
        %v1881 = vsub.s32 4, %v1857
        %v1882 = vsel %vm1759, %v1881, %v1857
        %v1883 = vsel %vm1758, %v1282, %v1880
        %v1884 = vsel %vm1758, 0, %v1882
        %v1885 = vmul.f32 %v1883, %v1883
        %v1886 = vmul.f32 %v1885, -0.001358992
        %v1887 = vadd.f32 %v1886, 0.041655596
        %v1888 = vmul.f32 %v1885, %v1887
        %v1889 = vadd.f32 %v1888, -0.4999988
        %v1890 = vmul.f32 %v1885, %v1889
        %v1891 = vadd.f32 1.0, %v1890
        %v1892 = vmul.f32 %v1883, %v1883
        %v1893 = vmul.f32 %v1892, -0.00019511016
        %v1894 = vadd.f32 %v1893, 0.008332121
        %v1895 = vmul.f32 %v1892, %v1894
        %v1896 = vadd.f32 %v1895, -0.16666654
        %v1897 = vmul.f32 %v1892, %v1896
        %v1898 = vadd.f32 %v1897, 1.0
        %v1899 = vmul.f32 %v1898, %v1883
        %vm1900 = vweird.f32 %v1282
        %v1901 = vand.u32 %v1884, 3
        %vm1902 = vcmp.lt.s32.totalorder %v1901, 2
        %vm1903 = vcmp.eq.s32.totalorder %v1901, 0
        %v1904 = vxor.u32 %v1899, 2147483648
        %v1905 = vsel %vm1903, %v1891, %v1904
        %vm1906 = vcmp.eq.s32.totalorder %v1901, 2
        %v1907 = vxor.u32 %v1891, 2147483648
        %v1908 = vsel %vm1906, %v1907, %v1899
        %v1909 = vsel %vm1902, %v1905, %v1908
        %v1910 = vsel %vm1900, nan, %v1909
        %v1911 = vand.u32 2147483647, %v1283
        %vm1912 = vcmp.le.f32.partialorder %v1911, 0.7853982
        %vm1913 = vcmp.lt.s32.totalorder %v1283, 0
        %v1914 = vand.u32 %v1283, 2139095040
        %v1915 = vshrl.u32 %v1914, 23
        %v1916 = vsub.s32 %v1915, 127
        %v1917 = vand.u32 2147483647, %v1283
        %v1918 = vand.u32 %v1917, 8388607
        %v1919 = vor.u32 %v1918, 8388608
        %v1920 = vsub.s32 0, %v1919
        %v1921 = vadd.s32 %v1916, 1
        %vm1922 = vcmp.gt.s32.totalorder %v1921, 0
        %v1923 = vsel %vm1922, %v1921, 0
        %v1924 = vshrl.u32 %v1923, 5
        %v1925 = vand.u32 %v1923, 31
        %v1926 = vsub.s32 32, %v1925
        %v1927 = vshrl.u32 683565275, %v1926
        %v1928 = vshll.u32 683565275, %v1925
        %v1929 = vshrl.u32 2475754826, %v1926
        %v1930 = vor.u32 %v1928, %v1929
        %v1931 = vshll.u32 2475754826, %v1925
        %v1932 = vshrl.u32 2131351028, %v1926
        %v1933 = vor.u32 %v1931, %v1932
        %v1934 = vshll.u32 2131351028, %v1925
        %v1935 = vshrl.u32 2102212464, %v1926
        %v1936 = vor.u32 %v1934, %v1935
        %v1937 = vshll.u32 2102212464, %v1925
        %v1938 = vshrl.u32 920167782, %v1926
        %v1939 = vor.u32 %v1937, %v1938
        %v1940 = vshll.u32 920167782, %v1925
        %v1941 = vshrl.u32 1326507024, %v1926
        %v1942 = vor.u32 %v1940, %v1941
        %vm1943 = vcmp.lt.s32.totalorder %v1924, 1
        %vm1944 = vcmp.lt.s32.totalorder %v1924, 2
        %vm1945 = vcmp.lt.s32.totalorder %v1924, 3
        %vm1946 = vcmp.lt.s32.totalorder %v1924, 4
        %v1947 = vsel %vm1943, %v1927, %v1930
        %v1948 = vsel %vm1946, %v1936, 2102212464
        %v1949 = vsel %vm1945, %v1933, %v1948
        %v1950 = vsel %vm1944, %v1947, %v1949
        %v1951 = vsel %vm1943, %v1930, %v1933
        %v1952 = vsel %vm1946, %v1939, 920167782
        %v1953 = vsel %vm1945, %v1936, %v1952
        %v1954 = vsel %vm1944, %v1951, %v1953
        %v1955 = vsel %vm1943, %v1933, %v1936
        %v1956 = vsel %vm1946, %v1942, 1326507024
        %v1957 = vsel %vm1945, %v1939, %v1956
        %v1958 = vsel %vm1944, %v1955, %v1957
        %v1959 = vshll.u32 %v1919, 8
        %v1960 = vand.u32 %v1959, 65535
        %v1961 = vshrl.u32 %v1959, 16
        %v1962 = vand.u32 %v1958, 65535
        %v1963 = vshrl.u32 %v1958, 16
        %v1964 = vmul.u32 %v1960, %v1962
        %v1965 = vmul.u32 %v1960, %v1963
        %v1966 = vmul.u32 %v1961, %v1962
        %v1967 = vmul.u32 %v1961, %v1963
        %v1968 = vshll.u32 %v1965, 16
        %v1969 = vshrl.u32 %v1965, 16
        %v1970 = vshll.u32 %v1966, 16
        %v1971 = vshrl.u32 %v1966, 16
        %vm1972 = vc.u32 %v1964, %v1968
        %v1973 = vsel %vm1972, 1, 0
        %v1974 = vadd.s32 %v1964, %v1968
        %v1975 = vadd.s32 %v1967, %v1973
        %vm1976 = vc.u32 %v1974, %v1970
        %v1977 = vsel %vm1976, 1, 0
        %v1978 = vadd.s32 %v1974, %v1970
        %v1979 = vadd.s32 %v1975, %v1977
        %v1980 = vadd.s32 %v1979, %v1969
        %v1981 = vadd.s32 %v1980, %v1971
        %v1982 = vand.u32 %v1959, 65535
        %v1983 = vshrl.u32 %v1959, 16
        %v1984 = vand.u32 %v1954, 65535
        %v1985 = vshrl.u32 %v1954, 16
        %v1986 = vmul.u32 %v1982, %v1984
        %v1987 = vmul.u32 %v1982, %v1985
        %v1988 = vmul.u32 %v1983, %v1984
        %v1989 = vmul.u32 %v1983, %v1985
        %v1990 = vshll.u32 %v1987, 16
        %v1991 = vshrl.u32 %v1987, 16
        %v1992 = vshll.u32 %v1988, 16
        %v1993 = vshrl.u32 %v1988, 16
        %vm1994 = vc.u32 %v1986, %v1990
        %v1995 = vsel %vm1994, 1, 0
        %v1996 = vadd.s32 %v1986, %v1990
        %v1997 = vadd.s32 %v1989, %v1995
        %vm1998 = vc.u32 %v1996, %v1992
        %v1999 = vsel %vm1998, 1, 0
        %v2000 = vadd.s32 %v1996, %v1992
        %v2001 = vadd.s32 %v1997, %v1999
        %v2002 = vadd.s32 %v2001, %v1991
        %v2003 = vadd.s32 %v2002, %v1993
        %v2004 = vmul.u32 %v1959, %v1950
        %v2005 = vadd.s32 %v1981, %v2000
        %vm2006 = vc.u32 %v1981, %v2000
        %v2007 = vadd.s32 %v2003, 1
        %v2008 = vsel %vm2006, %v2007, %v2003
        %v2009 = vadd.s32 %v2004, %v2008
        %v2010 = vadd.s32 %v2009, 536870912
        %v2011 = vshrl.u32 %v2010, 30
        %v2012 = vshll.u32 %v2011, 30
        %v2013 = vsub.s32 %v2009, %v2012
        %vm2014 = vcmp.lt.s32.totalorder %v2013, 0
        %v2015 = vsub.s32 0, %v2013
        %v2016 = vsel %vm2014, %v2015, %v2013
        %v2017 = vclz %v2016
        %v2018 = vsub.s32 %v2017, 2
        %vm2019 = vcmp.gt.s32.totalorder 0, %v2018
        %v2020 = vsel %vm2019, 0, %v2018
        %v2021 = vsub.s32 32, %v2020
        %v2022 = vshll.u32 %v2013, %v2020
        %v2023 = vshrl.u32 %v2005, %v2021
        %v2024 = vor.u32 %v2022, %v2023
        %v2025 = vsub.s32 4294967266, %v2020
        %v2026 = vadd.s32 %v2025, 127
        %v2027 = vshll.u32 %v2026, 23
        %v2028 = vor.u32 4788187, %v2027
        %v2029 = vand.u32 2147483647, %v2028
        %v2031 = vcvt.s32.f32 %v2024
        %v2032 = vmul.f32 %v2031, %v2029
        %v2033 = vxor.u32 %v2032, 2147483648
        %v2034 = vsel %vm1913, %v2033, %v2032
        %v2035 = vsub.s32 4, %v2011
        %v2036 = vsel %vm1913, %v2035, %v2011
        %v2037 = vsel %vm1912, %v1283, %v2034
        %v2038 = vsel %vm1912, 0, %v2036
        %v2039 = vmul.f32 %v2037, %v2037
        %v2040 = vmul.f32 %v2039, -0.001358992
        %v2041 = vadd.f32 %v2040, 0.041655596
        %v2042 = vmul.f32 %v2039, %v2041
        %v2043 = vadd.f32 %v2042, -0.4999988
        %v2044 = vmul.f32 %v2039, %v2043
        %v2045 = vadd.f32 1.0, %v2044
        %v2046 = vmul.f32 %v2037, %v2037
        %v2047 = vmul.f32 %v2046, -0.00019511016
        %v2048 = vadd.f32 %v2047, 0.008332121
        %v2049 = vmul.f32 %v2046, %v2048
        %v2050 = vadd.f32 %v2049, -0.16666654
        %v2051 = vmul.f32 %v2046, %v2050
        %v2052 = vadd.f32 %v2051, 1.0
        %v2053 = vmul.f32 %v2052, %v2037
        %vm2054 = vweird.f32 %v1283
        %v2055 = vand.u32 %v2038, 3
        %vm2056 = vcmp.lt.s32.totalorder %v2055, 2
        %vm2057 = vcmp.eq.s32.totalorder %v2055, 0
        %v2058 = vxor.u32 %v2053, 2147483648
        %v2059 = vsel %vm2057, %v2045, %v2058
        %vm2060 = vcmp.eq.s32.totalorder %v2055, 2
        %v2061 = vxor.u32 %v2045, 2147483648
        %v2062 = vsel %vm2060, %v2061, %v2053
        %v2063 = vsel %vm2056, %v2059, %v2062
        %v2064 = vsel %vm2054, nan, %v2063
        %v2065 = vand.u32 2147483647, %v1284
        %vm2066 = vcmp.le.f32.partialorder %v2065, 0.7853982
        %vm2067 = vcmp.lt.s32.totalorder %v1284, 0
        %v2068 = vand.u32 %v1284, 2139095040
        %v2069 = vshrl.u32 %v2068, 23
        %v2070 = vsub.s32 %v2069, 127
        %v2071 = vand.u32 2147483647, %v1284
        %v2072 = vand.u32 %v2071, 8388607
        %v2073 = vor.u32 %v2072, 8388608
        %v2074 = vsub.s32 0, %v2073
        %v2075 = vadd.s32 %v2070, 1
        %vm2076 = vcmp.gt.s32.totalorder %v2075, 0
        %v2077 = vsel %vm2076, %v2075, 0
        %v2078 = vshrl.u32 %v2077, 5
        %v2079 = vand.u32 %v2077, 31
        %v2080 = vsub.s32 32, %v2079
        %v2081 = vshrl.u32 683565275, %v2080
        %v2082 = vshll.u32 683565275, %v2079
        %v2083 = vshrl.u32 2475754826, %v2080
        %v2084 = vor.u32 %v2082, %v2083
        %v2085 = vshll.u32 2475754826, %v2079
        %v2086 = vshrl.u32 2131351028, %v2080
        %v2087 = vor.u32 %v2085, %v2086
        %v2088 = vshll.u32 2131351028, %v2079
        %v2089 = vshrl.u32 2102212464, %v2080
        %v2090 = vor.u32 %v2088, %v2089
        %v2091 = vshll.u32 2102212464, %v2079
        %v2092 = vshrl.u32 920167782, %v2080
        %v2093 = vor.u32 %v2091, %v2092
        %v2094 = vshll.u32 920167782, %v2079
        %v2095 = vshrl.u32 1326507024, %v2080
        %v2096 = vor.u32 %v2094, %v2095
        %vm2097 = vcmp.lt.s32.totalorder %v2078, 1
        %vm2098 = vcmp.lt.s32.totalorder %v2078, 2
        %vm2099 = vcmp.lt.s32.totalorder %v2078, 3
        %vm2100 = vcmp.lt.s32.totalorder %v2078, 4
        %v2101 = vsel %vm2097, %v2081, %v2084
        %v2102 = vsel %vm2100, %v2090, 2102212464
        %v2103 = vsel %vm2099, %v2087, %v2102
        %v2104 = vsel %vm2098, %v2101, %v2103
        %v2105 = vsel %vm2097, %v2084, %v2087
        %v2106 = vsel %vm2100, %v2093, 920167782
        %v2107 = vsel %vm2099, %v2090, %v2106
        %v2108 = vsel %vm2098, %v2105, %v2107
        %v2109 = vsel %vm2097, %v2087, %v2090
        %v2110 = vsel %vm2100, %v2096, 1326507024
        %v2111 = vsel %vm2099, %v2093, %v2110
        %v2112 = vsel %vm2098, %v2109, %v2111
        %v2113 = vshll.u32 %v2073, 8
        %v2114 = vand.u32 %v2113, 65535
        %v2115 = vshrl.u32 %v2113, 16
        %v2116 = vand.u32 %v2112, 65535
        %v2117 = vshrl.u32 %v2112, 16
        %v2118 = vmul.u32 %v2114, %v2116
        %v2119 = vmul.u32 %v2114, %v2117
        %v2120 = vmul.u32 %v2115, %v2116
        %v2121 = vmul.u32 %v2115, %v2117
        %v2122 = vshll.u32 %v2119, 16
        %v2123 = vshrl.u32 %v2119, 16
        %v2124 = vshll.u32 %v2120, 16
        %v2125 = vshrl.u32 %v2120, 16
        %vm2126 = vc.u32 %v2118, %v2122
        %v2127 = vsel %vm2126, 1, 0
        %v2128 = vadd.s32 %v2118, %v2122
        %v2129 = vadd.s32 %v2121, %v2127
        %vm2130 = vc.u32 %v2128, %v2124
        %v2131 = vsel %vm2130, 1, 0
        %v2132 = vadd.s32 %v2128, %v2124
        %v2133 = vadd.s32 %v2129, %v2131
        %v2134 = vadd.s32 %v2133, %v2123
        %v2135 = vadd.s32 %v2134, %v2125
        %v2136 = vand.u32 %v2113, 65535
        %v2137 = vshrl.u32 %v2113, 16
        %v2138 = vand.u32 %v2108, 65535
        %v2139 = vshrl.u32 %v2108, 16
        %v2140 = vmul.u32 %v2136, %v2138
        %v2141 = vmul.u32 %v2136, %v2139
        %v2142 = vmul.u32 %v2137, %v2138
        %v2143 = vmul.u32 %v2137, %v2139
        %v2144 = vshll.u32 %v2141, 16
        %v2145 = vshrl.u32 %v2141, 16
        %v2146 = vshll.u32 %v2142, 16
        %v2147 = vshrl.u32 %v2142, 16
        %vm2148 = vc.u32 %v2140, %v2144
        %v2149 = vsel %vm2148, 1, 0
        %v2150 = vadd.s32 %v2140, %v2144
        %v2151 = vadd.s32 %v2143, %v2149
        %vm2152 = vc.u32 %v2150, %v2146
        %v2153 = vsel %vm2152, 1, 0
        %v2154 = vadd.s32 %v2150, %v2146
        %v2155 = vadd.s32 %v2151, %v2153
        %v2156 = vadd.s32 %v2155, %v2145
        %v2157 = vadd.s32 %v2156, %v2147
        %v2158 = vmul.u32 %v2113, %v2104
        %v2159 = vadd.s32 %v2135, %v2154
        %vm2160 = vc.u32 %v2135, %v2154
        %v2161 = vadd.s32 %v2157, 1
        %v2162 = vsel %vm2160, %v2161, %v2157
        %v2163 = vadd.s32 %v2158, %v2162
        %v2164 = vadd.s32 %v2163, 536870912
        %v2165 = vshrl.u32 %v2164, 30
        %v2166 = vshll.u32 %v2165, 30
        %v2167 = vsub.s32 %v2163, %v2166
        %vm2168 = vcmp.lt.s32.totalorder %v2167, 0
        %v2169 = vsub.s32 0, %v2167
        %v2170 = vsel %vm2168, %v2169, %v2167
        %v2171 = vclz %v2170
        %v2172 = vsub.s32 %v2171, 2
        %vm2173 = vcmp.gt.s32.totalorder 0, %v2172
        %v2174 = vsel %vm2173, 0, %v2172
        %v2175 = vsub.s32 32, %v2174
        %v2176 = vshll.u32 %v2167, %v2174
        %v2177 = vshrl.u32 %v2159, %v2175
        %v2178 = vor.u32 %v2176, %v2177
        %v2179 = vsub.s32 4294967266, %v2174
        %v2180 = vadd.s32 %v2179, 127
        %v2181 = vshll.u32 %v2180, 23
        %v2182 = vor.u32 4788187, %v2181
        %v2183 = vand.u32 2147483647, %v2182
        %v2185 = vcvt.s32.f32 %v2178
        %v2186 = vmul.f32 %v2185, %v2183
        %v2187 = vxor.u32 %v2186, 2147483648
        %v2188 = vsel %vm2067, %v2187, %v2186
        %v2189 = vsub.s32 4, %v2165
        %v2190 = vsel %vm2067, %v2189, %v2165
        %v2191 = vsel %vm2066, %v1284, %v2188
        %v2192 = vsel %vm2066, 0, %v2190
        %v2193 = vmul.f32 %v2191, %v2191
        %v2194 = vmul.f32 %v2193, -0.001358992
        %v2195 = vadd.f32 %v2194, 0.041655596
        %v2196 = vmul.f32 %v2193, %v2195
        %v2197 = vadd.f32 %v2196, -0.4999988
        %v2198 = vmul.f32 %v2193, %v2197
        %v2199 = vadd.f32 1.0, %v2198
        %v2200 = vmul.f32 %v2191, %v2191
        %v2201 = vmul.f32 %v2200, -0.00019511016
        %v2202 = vadd.f32 %v2201, 0.008332121
        %v2203 = vmul.f32 %v2200, %v2202
        %v2204 = vadd.f32 %v2203, -0.16666654
        %v2205 = vmul.f32 %v2200, %v2204
        %v2206 = vadd.f32 %v2205, 1.0
        %v2207 = vmul.f32 %v2206, %v2191
        %vm2208 = vweird.f32 %v1284
        %v2209 = vand.u32 %v2192, 3
        %vm2210 = vcmp.lt.s32.totalorder %v2209, 2
        %vm2211 = vcmp.eq.s32.totalorder %v2209, 0
        %v2212 = vxor.u32 %v2207, 2147483648
        %v2213 = vsel %vm2211, %v2199, %v2212
        %vm2214 = vcmp.eq.s32.totalorder %v2209, 2
        %v2215 = vxor.u32 %v2199, 2147483648
        %v2216 = vsel %vm2214, %v2215, %v2207
        %v2217 = vsel %vm2210, %v2213, %v2216
        %v2218 = vsel %vm2208, nan, %v2217
        %v2219 = vand.u32 2147483647, %v1285
        %vm2220 = vcmp.le.f32.partialorder %v2219, 0.7853982
        %vm2221 = vcmp.lt.s32.totalorder %v1285, 0
        %v2222 = vand.u32 %v1285, 2139095040
        %v2223 = vshrl.u32 %v2222, 23
        %v2224 = vsub.s32 %v2223, 127
        %v2225 = vand.u32 2147483647, %v1285
        %v2226 = vand.u32 %v2225, 8388607
        %v2227 = vor.u32 %v2226, 8388608
        %v2228 = vsub.s32 0, %v2227
        %v2229 = vadd.s32 %v2224, 1
        %vm2230 = vcmp.gt.s32.totalorder %v2229, 0
        %v2231 = vsel %vm2230, %v2229, 0
        %v2232 = vshrl.u32 %v2231, 5
        %v2233 = vand.u32 %v2231, 31
        %v2234 = vsub.s32 32, %v2233
        %v2235 = vshrl.u32 683565275, %v2234
        %v2236 = vshll.u32 683565275, %v2233
        %v2237 = vshrl.u32 2475754826, %v2234
        %v2238 = vor.u32 %v2236, %v2237
        %v2239 = vshll.u32 2475754826, %v2233
        %v2240 = vshrl.u32 2131351028, %v2234
        %v2241 = vor.u32 %v2239, %v2240
        %v2242 = vshll.u32 2131351028, %v2233
        %v2243 = vshrl.u32 2102212464, %v2234
        %v2244 = vor.u32 %v2242, %v2243
        %v2245 = vshll.u32 2102212464, %v2233
        %v2246 = vshrl.u32 920167782, %v2234
        %v2247 = vor.u32 %v2245, %v2246
        %v2248 = vshll.u32 920167782, %v2233
        %v2249 = vshrl.u32 1326507024, %v2234
        %v2250 = vor.u32 %v2248, %v2249
        %vm2251 = vcmp.lt.s32.totalorder %v2232, 1
        %vm2252 = vcmp.lt.s32.totalorder %v2232, 2
        %vm2253 = vcmp.lt.s32.totalorder %v2232, 3
        %vm2254 = vcmp.lt.s32.totalorder %v2232, 4
        %v2255 = vsel %vm2251, %v2235, %v2238
        %v2256 = vsel %vm2254, %v2244, 2102212464
        %v2257 = vsel %vm2253, %v2241, %v2256
        %v2258 = vsel %vm2252, %v2255, %v2257
        %v2259 = vsel %vm2251, %v2238, %v2241
        %v2260 = vsel %vm2254, %v2247, 920167782
        %v2261 = vsel %vm2253, %v2244, %v2260
        %v2262 = vsel %vm2252, %v2259, %v2261
        %v2263 = vsel %vm2251, %v2241, %v2244
        %v2264 = vsel %vm2254, %v2250, 1326507024
        %v2265 = vsel %vm2253, %v2247, %v2264
        %v2266 = vsel %vm2252, %v2263, %v2265
        %v2267 = vshll.u32 %v2227, 8
        %v2268 = vand.u32 %v2267, 65535
        %v2269 = vshrl.u32 %v2267, 16
        %v2270 = vand.u32 %v2266, 65535
        %v2271 = vshrl.u32 %v2266, 16
        %v2272 = vmul.u32 %v2268, %v2270
        %v2273 = vmul.u32 %v2268, %v2271
        %v2274 = vmul.u32 %v2269, %v2270
        %v2275 = vmul.u32 %v2269, %v2271
        %v2276 = vshll.u32 %v2273, 16
        %v2277 = vshrl.u32 %v2273, 16
        %v2278 = vshll.u32 %v2274, 16
        %v2279 = vshrl.u32 %v2274, 16
        %vm2280 = vc.u32 %v2272, %v2276
        %v2281 = vsel %vm2280, 1, 0
        %v2282 = vadd.s32 %v2272, %v2276
        %v2283 = vadd.s32 %v2275, %v2281
        %vm2284 = vc.u32 %v2282, %v2278
        %v2285 = vsel %vm2284, 1, 0
        %v2286 = vadd.s32 %v2282, %v2278
        %v2287 = vadd.s32 %v2283, %v2285
        %v2288 = vadd.s32 %v2287, %v2277
        %v2289 = vadd.s32 %v2288, %v2279
        %v2290 = vand.u32 %v2267, 65535
        %v2291 = vshrl.u32 %v2267, 16
        %v2292 = vand.u32 %v2262, 65535
        %v2293 = vshrl.u32 %v2262, 16
        %v2294 = vmul.u32 %v2290, %v2292
        %v2295 = vmul.u32 %v2290, %v2293
        %v2296 = vmul.u32 %v2291, %v2292
        %v2297 = vmul.u32 %v2291, %v2293
        %v2298 = vshll.u32 %v2295, 16
        %v2299 = vshrl.u32 %v2295, 16
        %v2300 = vshll.u32 %v2296, 16
        %v2301 = vshrl.u32 %v2296, 16
        %vm2302 = vc.u32 %v2294, %v2298
        %v2303 = vsel %vm2302, 1, 0
        %v2304 = vadd.s32 %v2294, %v2298
        %v2305 = vadd.s32 %v2297, %v2303
        %vm2306 = vc.u32 %v2304, %v2300
        %v2307 = vsel %vm2306, 1, 0
        %v2308 = vadd.s32 %v2304, %v2300
        %v2309 = vadd.s32 %v2305, %v2307
        %v2310 = vadd.s32 %v2309, %v2299
        %v2311 = vadd.s32 %v2310, %v2301
        %v2312 = vmul.u32 %v2267, %v2258
        %v2313 = vadd.s32 %v2289, %v2308
        %vm2314 = vc.u32 %v2289, %v2308
        %v2315 = vadd.s32 %v2311, 1
        %v2316 = vsel %vm2314, %v2315, %v2311
        %v2317 = vadd.s32 %v2312, %v2316
        %v2318 = vadd.s32 %v2317, 536870912
        %v2319 = vshrl.u32 %v2318, 30
        %v2320 = vshll.u32 %v2319, 30
        %v2321 = vsub.s32 %v2317, %v2320
        %vm2322 = vcmp.lt.s32.totalorder %v2321, 0
        %v2323 = vsub.s32 0, %v2321
        %v2324 = vsel %vm2322, %v2323, %v2321
        %v2325 = vclz %v2324
        %v2326 = vsub.s32 %v2325, 2
        %vm2327 = vcmp.gt.s32.totalorder 0, %v2326
        %v2328 = vsel %vm2327, 0, %v2326
        %v2329 = vsub.s32 32, %v2328
        %v2330 = vshll.u32 %v2321, %v2328
        %v2331 = vshrl.u32 %v2313, %v2329
        %v2332 = vor.u32 %v2330, %v2331
        %v2333 = vsub.s32 4294967266, %v2328
        %v2334 = vadd.s32 %v2333, 127
        %v2335 = vshll.u32 %v2334, 23
        %v2336 = vor.u32 4788187, %v2335
        %v2337 = vand.u32 2147483647, %v2336
        %v2339 = vcvt.s32.f32 %v2332
        %v2340 = vmul.f32 %v2339, %v2337
        %v2341 = vxor.u32 %v2340, 2147483648
        %v2342 = vsel %vm2221, %v2341, %v2340
        %v2343 = vsub.s32 4, %v2319
        %v2344 = vsel %vm2221, %v2343, %v2319
        %v2345 = vsel %vm2220, %v1285, %v2342
        %v2346 = vsel %vm2220, 0, %v2344
        %v2347 = vmul.f32 %v2345, %v2345
        %v2348 = vmul.f32 %v2347, -0.001358992
        %v2349 = vadd.f32 %v2348, 0.041655596
        %v2350 = vmul.f32 %v2347, %v2349
        %v2351 = vadd.f32 %v2350, -0.4999988
        %v2352 = vmul.f32 %v2347, %v2351
        %v2353 = vadd.f32 1.0, %v2352
        %v2354 = vmul.f32 %v2345, %v2345
        %v2355 = vmul.f32 %v2354, -0.00019511016
        %v2356 = vadd.f32 %v2355, 0.008332121
        %v2357 = vmul.f32 %v2354, %v2356
        %v2358 = vadd.f32 %v2357, -0.16666654
        %v2359 = vmul.f32 %v2354, %v2358
        %v2360 = vadd.f32 %v2359, 1.0
        %v2361 = vmul.f32 %v2360, %v2345
        %vm2362 = vweird.f32 %v1285
        %v2363 = vand.u32 %v2346, 3
        %vm2364 = vcmp.lt.s32.totalorder %v2363, 2
        %vm2365 = vcmp.eq.s32.totalorder %v2363, 0
        %v2366 = vxor.u32 %v2361, 2147483648
        %v2367 = vsel %vm2365, %v2353, %v2366
        %vm2368 = vcmp.eq.s32.totalorder %v2363, 2
        %v2369 = vxor.u32 %v2353, 2147483648
        %v2370 = vsel %vm2368, %v2369, %v2361
        %v2371 = vsel %vm2364, %v2367, %v2370
        %v2372 = vsel %vm2362, nan, %v2371
        %v2373 = vand.u32 2147483647, %v1286
        %vm2374 = vcmp.le.f32.partialorder %v2373, 0.7853982
        %vm2375 = vcmp.lt.s32.totalorder %v1286, 0
        %v2376 = vand.u32 %v1286, 2139095040
        %v2377 = vshrl.u32 %v2376, 23
        %v2378 = vsub.s32 %v2377, 127
        %v2379 = vand.u32 2147483647, %v1286
        %v2380 = vand.u32 %v2379, 8388607
        %v2381 = vor.u32 %v2380, 8388608
        %v2382 = vsub.s32 0, %v2381
        %v2383 = vadd.s32 %v2378, 1
        %vm2384 = vcmp.gt.s32.totalorder %v2383, 0
        %v2385 = vsel %vm2384, %v2383, 0
        %v2386 = vshrl.u32 %v2385, 5
        %v2387 = vand.u32 %v2385, 31
        %v2388 = vsub.s32 32, %v2387
        %v2389 = vshrl.u32 683565275, %v2388
        %v2390 = vshll.u32 683565275, %v2387
        %v2391 = vshrl.u32 2475754826, %v2388
        %v2392 = vor.u32 %v2390, %v2391
        %v2393 = vshll.u32 2475754826, %v2387
        %v2394 = vshrl.u32 2131351028, %v2388
        %v2395 = vor.u32 %v2393, %v2394
        %v2396 = vshll.u32 2131351028, %v2387
        %v2397 = vshrl.u32 2102212464, %v2388
        %v2398 = vor.u32 %v2396, %v2397
        %v2399 = vshll.u32 2102212464, %v2387
        %v2400 = vshrl.u32 920167782, %v2388
        %v2401 = vor.u32 %v2399, %v2400
        %v2402 = vshll.u32 920167782, %v2387
        %v2403 = vshrl.u32 1326507024, %v2388
        %v2404 = vor.u32 %v2402, %v2403
        %vm2405 = vcmp.lt.s32.totalorder %v2386, 1
        %vm2406 = vcmp.lt.s32.totalorder %v2386, 2
        %vm2407 = vcmp.lt.s32.totalorder %v2386, 3
        %vm2408 = vcmp.lt.s32.totalorder %v2386, 4
        %v2409 = vsel %vm2405, %v2389, %v2392
        %v2410 = vsel %vm2408, %v2398, 2102212464
        %v2411 = vsel %vm2407, %v2395, %v2410
        %v2412 = vsel %vm2406, %v2409, %v2411
        %v2413 = vsel %vm2405, %v2392, %v2395
        %v2414 = vsel %vm2408, %v2401, 920167782
        %v2415 = vsel %vm2407, %v2398, %v2414
        %v2416 = vsel %vm2406, %v2413, %v2415
        %v2417 = vsel %vm2405, %v2395, %v2398
        %v2418 = vsel %vm2408, %v2404, 1326507024
        %v2419 = vsel %vm2407, %v2401, %v2418
        %v2420 = vsel %vm2406, %v2417, %v2419
        %v2421 = vshll.u32 %v2381, 8
        %v2422 = vand.u32 %v2421, 65535
        %v2423 = vshrl.u32 %v2421, 16
        %v2424 = vand.u32 %v2420, 65535
        %v2425 = vshrl.u32 %v2420, 16
        %v2426 = vmul.u32 %v2422, %v2424
        %v2427 = vmul.u32 %v2422, %v2425
        %v2428 = vmul.u32 %v2423, %v2424
        %v2429 = vmul.u32 %v2423, %v2425
        %v2430 = vshll.u32 %v2427, 16
        %v2431 = vshrl.u32 %v2427, 16
        %v2432 = vshll.u32 %v2428, 16
        %v2433 = vshrl.u32 %v2428, 16
        %vm2434 = vc.u32 %v2426, %v2430
        %v2435 = vsel %vm2434, 1, 0
        %v2436 = vadd.s32 %v2426, %v2430
        %v2437 = vadd.s32 %v2429, %v2435
        %vm2438 = vc.u32 %v2436, %v2432
        %v2439 = vsel %vm2438, 1, 0
        %v2440 = vadd.s32 %v2436, %v2432
        %v2441 = vadd.s32 %v2437, %v2439
        %v2442 = vadd.s32 %v2441, %v2431
        %v2443 = vadd.s32 %v2442, %v2433
        %v2444 = vand.u32 %v2421, 65535
        %v2445 = vshrl.u32 %v2421, 16
        %v2446 = vand.u32 %v2416, 65535
        %v2447 = vshrl.u32 %v2416, 16
        %v2448 = vmul.u32 %v2444, %v2446
        %v2449 = vmul.u32 %v2444, %v2447
        %v2450 = vmul.u32 %v2445, %v2446
        %v2451 = vmul.u32 %v2445, %v2447
        %v2452 = vshll.u32 %v2449, 16
        %v2453 = vshrl.u32 %v2449, 16
        %v2454 = vshll.u32 %v2450, 16
        %v2455 = vshrl.u32 %v2450, 16
        %vm2456 = vc.u32 %v2448, %v2452
        %v2457 = vsel %vm2456, 1, 0
        %v2458 = vadd.s32 %v2448, %v2452
        %v2459 = vadd.s32 %v2451, %v2457
        %vm2460 = vc.u32 %v2458, %v2454
        %v2461 = vsel %vm2460, 1, 0
        %v2462 = vadd.s32 %v2458, %v2454
        %v2463 = vadd.s32 %v2459, %v2461
        %v2464 = vadd.s32 %v2463, %v2453
        %v2465 = vadd.s32 %v2464, %v2455
        %v2466 = vmul.u32 %v2421, %v2412
        %v2467 = vadd.s32 %v2443, %v2462
        %vm2468 = vc.u32 %v2443, %v2462
        %v2469 = vadd.s32 %v2465, 1
        %v2470 = vsel %vm2468, %v2469, %v2465
        %v2471 = vadd.s32 %v2466, %v2470
        %v2472 = vadd.s32 %v2471, 536870912
        %v2473 = vshrl.u32 %v2472, 30
        %v2474 = vshll.u32 %v2473, 30
        %v2475 = vsub.s32 %v2471, %v2474
        %vm2476 = vcmp.lt.s32.totalorder %v2475, 0
        %v2477 = vsub.s32 0, %v2475
        %v2478 = vsel %vm2476, %v2477, %v2475
        %v2479 = vclz %v2478
        %v2480 = vsub.s32 %v2479, 2
        %vm2481 = vcmp.gt.s32.totalorder 0, %v2480
        %v2482 = vsel %vm2481, 0, %v2480
        %v2483 = vsub.s32 32, %v2482
        %v2484 = vshll.u32 %v2475, %v2482
        %v2485 = vshrl.u32 %v2467, %v2483
        %v2486 = vor.u32 %v2484, %v2485
        %v2487 = vsub.s32 4294967266, %v2482
        %v2488 = vadd.s32 %v2487, 127
        %v2489 = vshll.u32 %v2488, 23
        %v2490 = vor.u32 4788187, %v2489
        %v2491 = vand.u32 2147483647, %v2490
        %v2493 = vcvt.s32.f32 %v2486
        %v2494 = vmul.f32 %v2493, %v2491
        %v2495 = vxor.u32 %v2494, 2147483648
        %v2496 = vsel %vm2375, %v2495, %v2494
        %v2497 = vsub.s32 4, %v2473
        %v2498 = vsel %vm2375, %v2497, %v2473
        %v2499 = vsel %vm2374, %v1286, %v2496
        %v2500 = vsel %vm2374, 0, %v2498
        %v2501 = vmul.f32 %v2499, %v2499
        %v2502 = vmul.f32 %v2501, -0.001358992
        %v2503 = vadd.f32 %v2502, 0.041655596
        %v2504 = vmul.f32 %v2501, %v2503
        %v2505 = vadd.f32 %v2504, -0.4999988
        %v2506 = vmul.f32 %v2501, %v2505
        %v2507 = vadd.f32 1.0, %v2506
        %v2508 = vmul.f32 %v2499, %v2499
        %v2509 = vmul.f32 %v2508, -0.00019511016
        %v2510 = vadd.f32 %v2509, 0.008332121
        %v2511 = vmul.f32 %v2508, %v2510
        %v2512 = vadd.f32 %v2511, -0.16666654
        %v2513 = vmul.f32 %v2508, %v2512
        %v2514 = vadd.f32 %v2513, 1.0
        %v2515 = vmul.f32 %v2514, %v2499
        %vm2516 = vweird.f32 %v1286
        %v2517 = vand.u32 %v2500, 3
        %vm2518 = vcmp.lt.s32.totalorder %v2517, 2
        %vm2519 = vcmp.eq.s32.totalorder %v2517, 0
        %v2520 = vxor.u32 %v2515, 2147483648
        %v2521 = vsel %vm2519, %v2507, %v2520
        %vm2522 = vcmp.eq.s32.totalorder %v2517, 2
        %v2523 = vxor.u32 %v2507, 2147483648
        %v2524 = vsel %vm2522, %v2523, %v2515
        %v2525 = vsel %vm2518, %v2521, %v2524
        %v2526 = vsel %vm2516, nan, %v2525
        %v2527 = vand.u32 2147483647, %v1287
        %vm2528 = vcmp.le.f32.partialorder %v2527, 0.7853982
        %vm2529 = vcmp.lt.s32.totalorder %v1287, 0
        %v2530 = vand.u32 %v1287, 2139095040
        %v2531 = vshrl.u32 %v2530, 23
        %v2532 = vsub.s32 %v2531, 127
        %v2533 = vand.u32 2147483647, %v1287
        %v2534 = vand.u32 %v2533, 8388607
        %v2535 = vor.u32 %v2534, 8388608
        %v2536 = vsub.s32 0, %v2535
        %v2537 = vadd.s32 %v2532, 1
        %vm2538 = vcmp.gt.s32.totalorder %v2537, 0
        %v2539 = vsel %vm2538, %v2537, 0
        %v2540 = vshrl.u32 %v2539, 5
        %v2541 = vand.u32 %v2539, 31
        %v2542 = vsub.s32 32, %v2541
        %v2543 = vshrl.u32 683565275, %v2542
        %v2544 = vshll.u32 683565275, %v2541
        %v2545 = vshrl.u32 2475754826, %v2542
        %v2546 = vor.u32 %v2544, %v2545
        %v2547 = vshll.u32 2475754826, %v2541
        %v2548 = vshrl.u32 2131351028, %v2542
        %v2549 = vor.u32 %v2547, %v2548
        %v2550 = vshll.u32 2131351028, %v2541
        %v2551 = vshrl.u32 2102212464, %v2542
        %v2552 = vor.u32 %v2550, %v2551
        %v2553 = vshll.u32 2102212464, %v2541
        %v2554 = vshrl.u32 920167782, %v2542
        %v2555 = vor.u32 %v2553, %v2554
        %v2556 = vshll.u32 920167782, %v2541
        %v2557 = vshrl.u32 1326507024, %v2542
        %v2558 = vor.u32 %v2556, %v2557
        %vm2559 = vcmp.lt.s32.totalorder %v2540, 1
        %vm2560 = vcmp.lt.s32.totalorder %v2540, 2
        %vm2561 = vcmp.lt.s32.totalorder %v2540, 3
        %vm2562 = vcmp.lt.s32.totalorder %v2540, 4
        %v2563 = vsel %vm2559, %v2543, %v2546
        %v2564 = vsel %vm2562, %v2552, 2102212464
        %v2565 = vsel %vm2561, %v2549, %v2564
        %v2566 = vsel %vm2560, %v2563, %v2565
        %v2567 = vsel %vm2559, %v2546, %v2549
        %v2568 = vsel %vm2562, %v2555, 920167782
        %v2569 = vsel %vm2561, %v2552, %v2568
        %v2570 = vsel %vm2560, %v2567, %v2569
        %v2571 = vsel %vm2559, %v2549, %v2552
        %v2572 = vsel %vm2562, %v2558, 1326507024
        %v2573 = vsel %vm2561, %v2555, %v2572
        %v2574 = vsel %vm2560, %v2571, %v2573
        %v2575 = vshll.u32 %v2535, 8
        %v2576 = vand.u32 %v2575, 65535
        %v2577 = vshrl.u32 %v2575, 16
        %v2578 = vand.u32 %v2574, 65535
        %v2579 = vshrl.u32 %v2574, 16
        %v2580 = vmul.u32 %v2576, %v2578
        %v2581 = vmul.u32 %v2576, %v2579
        %v2582 = vmul.u32 %v2577, %v2578
        %v2583 = vmul.u32 %v2577, %v2579
        %v2584 = vshll.u32 %v2581, 16
        %v2585 = vshrl.u32 %v2581, 16
        %v2586 = vshll.u32 %v2582, 16
        %v2587 = vshrl.u32 %v2582, 16
        %vm2588 = vc.u32 %v2580, %v2584
        %v2589 = vsel %vm2588, 1, 0
        %v2590 = vadd.s32 %v2580, %v2584
        %v2591 = vadd.s32 %v2583, %v2589
        %vm2592 = vc.u32 %v2590, %v2586
        %v2593 = vsel %vm2592, 1, 0
        %v2594 = vadd.s32 %v2590, %v2586
        %v2595 = vadd.s32 %v2591, %v2593
        %v2596 = vadd.s32 %v2595, %v2585
        %v2597 = vadd.s32 %v2596, %v2587
        %v2598 = vand.u32 %v2575, 65535
        %v2599 = vshrl.u32 %v2575, 16
        %v2600 = vand.u32 %v2570, 65535
        %v2601 = vshrl.u32 %v2570, 16
        %v2602 = vmul.u32 %v2598, %v2600
        %v2603 = vmul.u32 %v2598, %v2601
        %v2604 = vmul.u32 %v2599, %v2600
        %v2605 = vmul.u32 %v2599, %v2601
        %v2606 = vshll.u32 %v2603, 16
        %v2607 = vshrl.u32 %v2603, 16
        %v2608 = vshll.u32 %v2604, 16
        %v2609 = vshrl.u32 %v2604, 16
        %vm2610 = vc.u32 %v2602, %v2606
        %v2611 = vsel %vm2610, 1, 0
        %v2612 = vadd.s32 %v2602, %v2606
        %v2613 = vadd.s32 %v2605, %v2611
        %vm2614 = vc.u32 %v2612, %v2608
        %v2615 = vsel %vm2614, 1, 0
        %v2616 = vadd.s32 %v2612, %v2608
        %v2617 = vadd.s32 %v2613, %v2615
        %v2618 = vadd.s32 %v2617, %v2607
        %v2619 = vadd.s32 %v2618, %v2609
        %v2620 = vmul.u32 %v2575, %v2566
        %v2621 = vadd.s32 %v2597, %v2616
        %vm2622 = vc.u32 %v2597, %v2616
        %v2623 = vadd.s32 %v2619, 1
        %v2624 = vsel %vm2622, %v2623, %v2619
        %v2625 = vadd.s32 %v2620, %v2624
        %v2626 = vadd.s32 %v2625, 536870912
        %v2627 = vshrl.u32 %v2626, 30
        %v2628 = vshll.u32 %v2627, 30
        %v2629 = vsub.s32 %v2625, %v2628
        %vm2630 = vcmp.lt.s32.totalorder %v2629, 0
        %v2631 = vsub.s32 0, %v2629
        %v2632 = vsel %vm2630, %v2631, %v2629
        %v2633 = vclz %v2632
        %v2634 = vsub.s32 %v2633, 2
        %vm2635 = vcmp.gt.s32.totalorder 0, %v2634
        %v2636 = vsel %vm2635, 0, %v2634
        %v2637 = vsub.s32 32, %v2636
        %v2638 = vshll.u32 %v2629, %v2636
        %v2639 = vshrl.u32 %v2621, %v2637
        %v2640 = vor.u32 %v2638, %v2639
        %v2641 = vsub.s32 4294967266, %v2636
        %v2642 = vadd.s32 %v2641, 127
        %v2643 = vshll.u32 %v2642, 23
        %v2644 = vor.u32 4788187, %v2643
        %v2645 = vand.u32 2147483647, %v2644
        %v2647 = vcvt.s32.f32 %v2640
        %v2648 = vmul.f32 %v2647, %v2645
        %v2649 = vxor.u32 %v2648, 2147483648
        %v2650 = vsel %vm2529, %v2649, %v2648
        %v2651 = vsub.s32 4, %v2627
        %v2652 = vsel %vm2529, %v2651, %v2627
        %v2653 = vsel %vm2528, %v1287, %v2650
        %v2654 = vsel %vm2528, 0, %v2652
        %v2655 = vmul.f32 %v2653, %v2653
        %v2656 = vmul.f32 %v2655, -0.001358992
        %v2657 = vadd.f32 %v2656, 0.041655596
        %v2658 = vmul.f32 %v2655, %v2657
        %v2659 = vadd.f32 %v2658, -0.4999988
        %v2660 = vmul.f32 %v2655, %v2659
        %v2661 = vadd.f32 1.0, %v2660
        %v2662 = vmul.f32 %v2653, %v2653
        %v2663 = vmul.f32 %v2662, -0.00019511016
        %v2664 = vadd.f32 %v2663, 0.008332121
        %v2665 = vmul.f32 %v2662, %v2664
        %v2666 = vadd.f32 %v2665, -0.16666654
        %v2667 = vmul.f32 %v2662, %v2666
        %v2668 = vadd.f32 %v2667, 1.0
        %v2669 = vmul.f32 %v2668, %v2653
        %vm2670 = vweird.f32 %v1287
        %v2671 = vand.u32 %v2654, 3
        %vm2672 = vcmp.lt.s32.totalorder %v2671, 2
        %vm2673 = vcmp.eq.s32.totalorder %v2671, 0
        %v2674 = vxor.u32 %v2669, 2147483648
        %v2675 = vsel %vm2673, %v2661, %v2674
        %vm2676 = vcmp.eq.s32.totalorder %v2671, 2
        %v2677 = vxor.u32 %v2661, 2147483648
        %v2678 = vsel %vm2676, %v2677, %v2669
        %v2679 = vsel %vm2672, %v2675, %v2678
        %v2680 = vsel %vm2670, nan, %v2679
        %v2681 = vand.u32 2147483647, %v1288
        %vm2682 = vcmp.le.f32.partialorder %v2681, 0.7853982
        %vm2683 = vcmp.lt.s32.totalorder %v1288, 0
        %v2684 = vand.u32 %v1288, 2139095040
        %v2685 = vshrl.u32 %v2684, 23
        %v2686 = vsub.s32 %v2685, 127
        %v2687 = vand.u32 2147483647, %v1288
        %v2688 = vand.u32 %v2687, 8388607
        %v2689 = vor.u32 %v2688, 8388608
        %v2690 = vsub.s32 0, %v2689
        %v2691 = vadd.s32 %v2686, 1
        %vm2692 = vcmp.gt.s32.totalorder %v2691, 0
        %v2693 = vsel %vm2692, %v2691, 0
        %v2694 = vshrl.u32 %v2693, 5
        %v2695 = vand.u32 %v2693, 31
        %v2696 = vsub.s32 32, %v2695
        %v2697 = vshrl.u32 683565275, %v2696
        %v2698 = vshll.u32 683565275, %v2695
        %v2699 = vshrl.u32 2475754826, %v2696
        %v2700 = vor.u32 %v2698, %v2699
        %v2701 = vshll.u32 2475754826, %v2695
        %v2702 = vshrl.u32 2131351028, %v2696
        %v2703 = vor.u32 %v2701, %v2702
        %v2704 = vshll.u32 2131351028, %v2695
        %v2705 = vshrl.u32 2102212464, %v2696
        %v2706 = vor.u32 %v2704, %v2705
        %v2707 = vshll.u32 2102212464, %v2695
        %v2708 = vshrl.u32 920167782, %v2696
        %v2709 = vor.u32 %v2707, %v2708
        %v2710 = vshll.u32 920167782, %v2695
        %v2711 = vshrl.u32 1326507024, %v2696
        %v2712 = vor.u32 %v2710, %v2711
        %vm2713 = vcmp.lt.s32.totalorder %v2694, 1
        %vm2714 = vcmp.lt.s32.totalorder %v2694, 2
        %vm2715 = vcmp.lt.s32.totalorder %v2694, 3
        %vm2716 = vcmp.lt.s32.totalorder %v2694, 4
        %v2717 = vsel %vm2713, %v2697, %v2700
        %v2718 = vsel %vm2716, %v2706, 2102212464
        %v2719 = vsel %vm2715, %v2703, %v2718
        %v2720 = vsel %vm2714, %v2717, %v2719
        %v2721 = vsel %vm2713, %v2700, %v2703
        %v2722 = vsel %vm2716, %v2709, 920167782
        %v2723 = vsel %vm2715, %v2706, %v2722
        %v2724 = vsel %vm2714, %v2721, %v2723
        %v2725 = vsel %vm2713, %v2703, %v2706
        %v2726 = vsel %vm2716, %v2712, 1326507024
        %v2727 = vsel %vm2715, %v2709, %v2726
        %v2728 = vsel %vm2714, %v2725, %v2727
        %v2729 = vshll.u32 %v2689, 8
        %v2730 = vand.u32 %v2729, 65535
        %v2731 = vshrl.u32 %v2729, 16
        %v2732 = vand.u32 %v2728, 65535
        %v2733 = vshrl.u32 %v2728, 16
        %v2734 = vmul.u32 %v2730, %v2732
        %v2735 = vmul.u32 %v2730, %v2733
        %v2736 = vmul.u32 %v2731, %v2732
        %v2737 = vmul.u32 %v2731, %v2733
        %v2738 = vshll.u32 %v2735, 16
        %v2739 = vshrl.u32 %v2735, 16
        %v2740 = vshll.u32 %v2736, 16
        %v2741 = vshrl.u32 %v2736, 16
        %vm2742 = vc.u32 %v2734, %v2738
        %v2743 = vsel %vm2742, 1, 0
        %v2744 = vadd.s32 %v2734, %v2738
        %v2745 = vadd.s32 %v2737, %v2743
        %vm2746 = vc.u32 %v2744, %v2740
        %v2747 = vsel %vm2746, 1, 0
        %v2748 = vadd.s32 %v2744, %v2740
        %v2749 = vadd.s32 %v2745, %v2747
        %v2750 = vadd.s32 %v2749, %v2739
        %v2751 = vadd.s32 %v2750, %v2741
        %v2752 = vand.u32 %v2729, 65535
        %v2753 = vshrl.u32 %v2729, 16
        %v2754 = vand.u32 %v2724, 65535
        %v2755 = vshrl.u32 %v2724, 16
        %v2756 = vmul.u32 %v2752, %v2754
        %v2757 = vmul.u32 %v2752, %v2755
        %v2758 = vmul.u32 %v2753, %v2754
        %v2759 = vmul.u32 %v2753, %v2755
        %v2760 = vshll.u32 %v2757, 16
        %v2761 = vshrl.u32 %v2757, 16
        %v2762 = vshll.u32 %v2758, 16
        %v2763 = vshrl.u32 %v2758, 16
        %vm2764 = vc.u32 %v2756, %v2760
        %v2765 = vsel %vm2764, 1, 0
        %v2766 = vadd.s32 %v2756, %v2760
        %v2767 = vadd.s32 %v2759, %v2765
        %vm2768 = vc.u32 %v2766, %v2762
        %v2769 = vsel %vm2768, 1, 0
        %v2770 = vadd.s32 %v2766, %v2762
        %v2771 = vadd.s32 %v2767, %v2769
        %v2772 = vadd.s32 %v2771, %v2761
        %v2773 = vadd.s32 %v2772, %v2763
        %v2774 = vmul.u32 %v2729, %v2720
        %v2775 = vadd.s32 %v2751, %v2770
        %vm2776 = vc.u32 %v2751, %v2770
        %v2777 = vadd.s32 %v2773, 1
        %v2778 = vsel %vm2776, %v2777, %v2773
        %v2779 = vadd.s32 %v2774, %v2778
        %v2780 = vadd.s32 %v2779, 536870912
        %v2781 = vshrl.u32 %v2780, 30
        %v2782 = vshll.u32 %v2781, 30
        %v2783 = vsub.s32 %v2779, %v2782
        %vm2784 = vcmp.lt.s32.totalorder %v2783, 0
        %v2785 = vsub.s32 0, %v2783
        %v2786 = vsel %vm2784, %v2785, %v2783
        %v2787 = vclz %v2786
        %v2788 = vsub.s32 %v2787, 2
        %vm2789 = vcmp.gt.s32.totalorder 0, %v2788
        %v2790 = vsel %vm2789, 0, %v2788
        %v2791 = vsub.s32 32, %v2790
        %v2792 = vshll.u32 %v2783, %v2790
        %v2793 = vshrl.u32 %v2775, %v2791
        %v2794 = vor.u32 %v2792, %v2793
        %v2795 = vsub.s32 4294967266, %v2790
        %v2796 = vadd.s32 %v2795, 127
        %v2797 = vshll.u32 %v2796, 23
        %v2798 = vor.u32 4788187, %v2797
        %v2799 = vand.u32 2147483647, %v2798
        %v2801 = vcvt.s32.f32 %v2794
        %v2802 = vmul.f32 %v2801, %v2799
        %v2803 = vxor.u32 %v2802, 2147483648
        %v2804 = vsel %vm2683, %v2803, %v2802
        %v2805 = vsub.s32 4, %v2781
        %v2806 = vsel %vm2683, %v2805, %v2781
        %v2807 = vsel %vm2682, %v1288, %v2804
        %v2808 = vsel %vm2682, 0, %v2806
        %v2809 = vmul.f32 %v2807, %v2807
        %v2810 = vmul.f32 %v2809, -0.001358992
        %v2811 = vadd.f32 %v2810, 0.041655596
        %v2812 = vmul.f32 %v2809, %v2811
        %v2813 = vadd.f32 %v2812, -0.4999988
        %v2814 = vmul.f32 %v2809, %v2813
        %v2815 = vadd.f32 1.0, %v2814
        %v2816 = vmul.f32 %v2807, %v2807
        %v2817 = vmul.f32 %v2816, -0.00019511016
        %v2818 = vadd.f32 %v2817, 0.008332121
        %v2819 = vmul.f32 %v2816, %v2818
        %v2820 = vadd.f32 %v2819, -0.16666654
        %v2821 = vmul.f32 %v2816, %v2820
        %v2822 = vadd.f32 %v2821, 1.0
        %v2823 = vmul.f32 %v2822, %v2807
        %vm2824 = vweird.f32 %v1288
        %v2825 = vand.u32 %v2808, 3
        %vm2826 = vcmp.lt.s32.totalorder %v2825, 2
        %vm2827 = vcmp.eq.s32.totalorder %v2825, 0
        %v2828 = vxor.u32 %v2823, 2147483648
        %v2829 = vsel %vm2827, %v2815, %v2828
        %vm2830 = vcmp.eq.s32.totalorder %v2825, 2
        %v2831 = vxor.u32 %v2815, 2147483648
        %v2832 = vsel %vm2830, %v2831, %v2823
        %v2833 = vsel %vm2826, %v2829, %v2832
        %v2834 = vsel %vm2824, nan, %v2833
        %v2835 = vand.u32 2147483647, %v1289
        %vm2836 = vcmp.le.f32.partialorder %v2835, 0.7853982
        %vm2837 = vcmp.lt.s32.totalorder %v1289, 0
        %v2838 = vand.u32 %v1289, 2139095040
        %v2839 = vshrl.u32 %v2838, 23
        %v2840 = vsub.s32 %v2839, 127
        %v2841 = vand.u32 2147483647, %v1289
        %v2842 = vand.u32 %v2841, 8388607
        %v2843 = vor.u32 %v2842, 8388608
        %v2844 = vsub.s32 0, %v2843
        %v2845 = vadd.s32 %v2840, 1
        %vm2846 = vcmp.gt.s32.totalorder %v2845, 0
        %v2847 = vsel %vm2846, %v2845, 0
        %v2848 = vshrl.u32 %v2847, 5
        %v2849 = vand.u32 %v2847, 31
        %v2850 = vsub.s32 32, %v2849
        %v2851 = vshrl.u32 683565275, %v2850
        %v2852 = vshll.u32 683565275, %v2849
        %v2853 = vshrl.u32 2475754826, %v2850
        %v2854 = vor.u32 %v2852, %v2853
        %v2855 = vshll.u32 2475754826, %v2849
        %v2856 = vshrl.u32 2131351028, %v2850
        %v2857 = vor.u32 %v2855, %v2856
        %v2858 = vshll.u32 2131351028, %v2849
        %v2859 = vshrl.u32 2102212464, %v2850
        %v2860 = vor.u32 %v2858, %v2859
        %v2861 = vshll.u32 2102212464, %v2849
        %v2862 = vshrl.u32 920167782, %v2850
        %v2863 = vor.u32 %v2861, %v2862
        %v2864 = vshll.u32 920167782, %v2849
        %v2865 = vshrl.u32 1326507024, %v2850
        %v2866 = vor.u32 %v2864, %v2865
        %vm2867 = vcmp.lt.s32.totalorder %v2848, 1
        %vm2868 = vcmp.lt.s32.totalorder %v2848, 2
        %vm2869 = vcmp.lt.s32.totalorder %v2848, 3
        %vm2870 = vcmp.lt.s32.totalorder %v2848, 4
        %v2871 = vsel %vm2867, %v2851, %v2854
        %v2872 = vsel %vm2870, %v2860, 2102212464
        %v2873 = vsel %vm2869, %v2857, %v2872
        %v2874 = vsel %vm2868, %v2871, %v2873
        %v2875 = vsel %vm2867, %v2854, %v2857
        %v2876 = vsel %vm2870, %v2863, 920167782
        %v2877 = vsel %vm2869, %v2860, %v2876
        %v2878 = vsel %vm2868, %v2875, %v2877
        %v2879 = vsel %vm2867, %v2857, %v2860
        %v2880 = vsel %vm2870, %v2866, 1326507024
        %v2881 = vsel %vm2869, %v2863, %v2880
        %v2882 = vsel %vm2868, %v2879, %v2881
        %v2883 = vshll.u32 %v2843, 8
        %v2884 = vand.u32 %v2883, 65535
        %v2885 = vshrl.u32 %v2883, 16
        %v2886 = vand.u32 %v2882, 65535
        %v2887 = vshrl.u32 %v2882, 16
        %v2888 = vmul.u32 %v2884, %v2886
        %v2889 = vmul.u32 %v2884, %v2887
        %v2890 = vmul.u32 %v2885, %v2886
        %v2891 = vmul.u32 %v2885, %v2887
        %v2892 = vshll.u32 %v2889, 16
        %v2893 = vshrl.u32 %v2889, 16
        %v2894 = vshll.u32 %v2890, 16
        %v2895 = vshrl.u32 %v2890, 16
        %vm2896 = vc.u32 %v2888, %v2892
        %v2897 = vsel %vm2896, 1, 0
        %v2898 = vadd.s32 %v2888, %v2892
        %v2899 = vadd.s32 %v2891, %v2897
        %vm2900 = vc.u32 %v2898, %v2894
        %v2901 = vsel %vm2900, 1, 0
        %v2902 = vadd.s32 %v2898, %v2894
        %v2903 = vadd.s32 %v2899, %v2901
        %v2904 = vadd.s32 %v2903, %v2893
        %v2905 = vadd.s32 %v2904, %v2895
        %v2906 = vand.u32 %v2883, 65535
        %v2907 = vshrl.u32 %v2883, 16
        %v2908 = vand.u32 %v2878, 65535
        %v2909 = vshrl.u32 %v2878, 16
        %v2910 = vmul.u32 %v2906, %v2908
        %v2911 = vmul.u32 %v2906, %v2909
        %v2912 = vmul.u32 %v2907, %v2908
        %v2913 = vmul.u32 %v2907, %v2909
        %v2914 = vshll.u32 %v2911, 16
        %v2915 = vshrl.u32 %v2911, 16
        %v2916 = vshll.u32 %v2912, 16
        %v2917 = vshrl.u32 %v2912, 16
        %vm2918 = vc.u32 %v2910, %v2914
        %v2919 = vsel %vm2918, 1, 0
        %v2920 = vadd.s32 %v2910, %v2914
        %v2921 = vadd.s32 %v2913, %v2919
        %vm2922 = vc.u32 %v2920, %v2916
        %v2923 = vsel %vm2922, 1, 0
        %v2924 = vadd.s32 %v2920, %v2916
        %v2925 = vadd.s32 %v2921, %v2923
        %v2926 = vadd.s32 %v2925, %v2915
        %v2927 = vadd.s32 %v2926, %v2917
        %v2928 = vmul.u32 %v2883, %v2874
        %v2929 = vadd.s32 %v2905, %v2924
        %vm2930 = vc.u32 %v2905, %v2924
        %v2931 = vadd.s32 %v2927, 1
        %v2932 = vsel %vm2930, %v2931, %v2927
        %v2933 = vadd.s32 %v2928, %v2932
        %v2934 = vadd.s32 %v2933, 536870912
        %v2935 = vshrl.u32 %v2934, 30
        %v2936 = vshll.u32 %v2935, 30
        %v2937 = vsub.s32 %v2933, %v2936
        %vm2938 = vcmp.lt.s32.totalorder %v2937, 0
        %v2939 = vsub.s32 0, %v2937
        %v2940 = vsel %vm2938, %v2939, %v2937
        %v2941 = vclz %v2940
        %v2942 = vsub.s32 %v2941, 2
        %vm2943 = vcmp.gt.s32.totalorder 0, %v2942
        %v2944 = vsel %vm2943, 0, %v2942
        %v2945 = vsub.s32 32, %v2944
        %v2946 = vshll.u32 %v2937, %v2944
        %v2947 = vshrl.u32 %v2929, %v2945
        %v2948 = vor.u32 %v2946, %v2947
        %v2949 = vsub.s32 4294967266, %v2944
        %v2950 = vadd.s32 %v2949, 127
        %v2951 = vshll.u32 %v2950, 23
        %v2952 = vor.u32 4788187, %v2951
        %v2953 = vand.u32 2147483647, %v2952
        %v2955 = vcvt.s32.f32 %v2948
        %v2956 = vmul.f32 %v2955, %v2953
        %v2957 = vxor.u32 %v2956, 2147483648
        %v2958 = vsel %vm2837, %v2957, %v2956
        %v2959 = vsub.s32 4, %v2935
        %v2960 = vsel %vm2837, %v2959, %v2935
        %v2961 = vsel %vm2836, %v1289, %v2958
        %v2962 = vsel %vm2836, 0, %v2960
        %v2963 = vmul.f32 %v2961, %v2961
        %v2964 = vmul.f32 %v2963, -0.001358992
        %v2965 = vadd.f32 %v2964, 0.041655596
        %v2966 = vmul.f32 %v2963, %v2965
        %v2967 = vadd.f32 %v2966, -0.4999988
        %v2968 = vmul.f32 %v2963, %v2967
        %v2969 = vadd.f32 1.0, %v2968
        %v2970 = vmul.f32 %v2961, %v2961
        %v2971 = vmul.f32 %v2970, -0.00019511016
        %v2972 = vadd.f32 %v2971, 0.008332121
        %v2973 = vmul.f32 %v2970, %v2972
        %v2974 = vadd.f32 %v2973, -0.16666654
        %v2975 = vmul.f32 %v2970, %v2974
        %v2976 = vadd.f32 %v2975, 1.0
        %v2977 = vmul.f32 %v2976, %v2961
        %vm2978 = vweird.f32 %v1289
        %v2979 = vand.u32 %v2962, 3
        %vm2980 = vcmp.lt.s32.totalorder %v2979, 2
        %vm2981 = vcmp.eq.s32.totalorder %v2979, 0
        %v2982 = vxor.u32 %v2977, 2147483648
        %v2983 = vsel %vm2981, %v2969, %v2982
        %vm2984 = vcmp.eq.s32.totalorder %v2979, 2
        %v2985 = vxor.u32 %v2969, 2147483648
        %v2986 = vsel %vm2984, %v2985, %v2977
        %v2987 = vsel %vm2980, %v2983, %v2986
        %v2988 = vsel %vm2978, nan, %v2987
        %v2989 = vand.u32 2147483647, %v1290
        %vm2990 = vcmp.le.f32.partialorder %v2989, 0.7853982
        %vm2991 = vcmp.lt.s32.totalorder %v1290, 0
        %v2992 = vand.u32 %v1290, 2139095040
        %v2993 = vshrl.u32 %v2992, 23
        %v2994 = vsub.s32 %v2993, 127
        %v2995 = vand.u32 2147483647, %v1290
        %v2996 = vand.u32 %v2995, 8388607
        %v2997 = vor.u32 %v2996, 8388608
        %v2998 = vsub.s32 0, %v2997
        %v2999 = vadd.s32 %v2994, 1
        %vm3000 = vcmp.gt.s32.totalorder %v2999, 0
        %v3001 = vsel %vm3000, %v2999, 0
        %v3002 = vshrl.u32 %v3001, 5
        %v3003 = vand.u32 %v3001, 31
        %v3004 = vsub.s32 32, %v3003
        %v3005 = vshrl.u32 683565275, %v3004
        %v3006 = vshll.u32 683565275, %v3003
        %v3007 = vshrl.u32 2475754826, %v3004
        %v3008 = vor.u32 %v3006, %v3007
        %v3009 = vshll.u32 2475754826, %v3003
        %v3010 = vshrl.u32 2131351028, %v3004
        %v3011 = vor.u32 %v3009, %v3010
        %v3012 = vshll.u32 2131351028, %v3003
        %v3013 = vshrl.u32 2102212464, %v3004
        %v3014 = vor.u32 %v3012, %v3013
        %v3015 = vshll.u32 2102212464, %v3003
        %v3016 = vshrl.u32 920167782, %v3004
        %v3017 = vor.u32 %v3015, %v3016
        %v3018 = vshll.u32 920167782, %v3003
        %v3019 = vshrl.u32 1326507024, %v3004
        %v3020 = vor.u32 %v3018, %v3019
        %vm3021 = vcmp.lt.s32.totalorder %v3002, 1
        %vm3022 = vcmp.lt.s32.totalorder %v3002, 2
        %vm3023 = vcmp.lt.s32.totalorder %v3002, 3
        %vm3024 = vcmp.lt.s32.totalorder %v3002, 4
        %v3025 = vsel %vm3021, %v3005, %v3008
        %v3026 = vsel %vm3024, %v3014, 2102212464
        %v3027 = vsel %vm3023, %v3011, %v3026
        %v3028 = vsel %vm3022, %v3025, %v3027
        %v3029 = vsel %vm3021, %v3008, %v3011
        %v3030 = vsel %vm3024, %v3017, 920167782
        %v3031 = vsel %vm3023, %v3014, %v3030
        %v3032 = vsel %vm3022, %v3029, %v3031
        %v3033 = vsel %vm3021, %v3011, %v3014
        %v3034 = vsel %vm3024, %v3020, 1326507024
        %v3035 = vsel %vm3023, %v3017, %v3034
        %v3036 = vsel %vm3022, %v3033, %v3035
        %v3037 = vshll.u32 %v2997, 8
        %v3038 = vand.u32 %v3037, 65535
        %v3039 = vshrl.u32 %v3037, 16
        %v3040 = vand.u32 %v3036, 65535
        %v3041 = vshrl.u32 %v3036, 16
        %v3042 = vmul.u32 %v3038, %v3040
        %v3043 = vmul.u32 %v3038, %v3041
        %v3044 = vmul.u32 %v3039, %v3040
        %v3045 = vmul.u32 %v3039, %v3041
        %v3046 = vshll.u32 %v3043, 16
        %v3047 = vshrl.u32 %v3043, 16
        %v3048 = vshll.u32 %v3044, 16
        %v3049 = vshrl.u32 %v3044, 16
        %vm3050 = vc.u32 %v3042, %v3046
        %v3051 = vsel %vm3050, 1, 0
        %v3052 = vadd.s32 %v3042, %v3046
        %v3053 = vadd.s32 %v3045, %v3051
        %vm3054 = vc.u32 %v3052, %v3048
        %v3055 = vsel %vm3054, 1, 0
        %v3056 = vadd.s32 %v3052, %v3048
        %v3057 = vadd.s32 %v3053, %v3055
        %v3058 = vadd.s32 %v3057, %v3047
        %v3059 = vadd.s32 %v3058, %v3049
        %v3060 = vand.u32 %v3037, 65535
        %v3061 = vshrl.u32 %v3037, 16
        %v3062 = vand.u32 %v3032, 65535
        %v3063 = vshrl.u32 %v3032, 16
        %v3064 = vmul.u32 %v3060, %v3062
        %v3065 = vmul.u32 %v3060, %v3063
        %v3066 = vmul.u32 %v3061, %v3062
        %v3067 = vmul.u32 %v3061, %v3063
        %v3068 = vshll.u32 %v3065, 16
        %v3069 = vshrl.u32 %v3065, 16
        %v3070 = vshll.u32 %v3066, 16
        %v3071 = vshrl.u32 %v3066, 16
        %vm3072 = vc.u32 %v3064, %v3068
        %v3073 = vsel %vm3072, 1, 0
        %v3074 = vadd.s32 %v3064, %v3068
        %v3075 = vadd.s32 %v3067, %v3073
        %vm3076 = vc.u32 %v3074, %v3070
        %v3077 = vsel %vm3076, 1, 0
        %v3078 = vadd.s32 %v3074, %v3070
        %v3079 = vadd.s32 %v3075, %v3077
        %v3080 = vadd.s32 %v3079, %v3069
        %v3081 = vadd.s32 %v3080, %v3071
        %v3082 = vmul.u32 %v3037, %v3028
        %v3083 = vadd.s32 %v3059, %v3078
        %vm3084 = vc.u32 %v3059, %v3078
        %v3085 = vadd.s32 %v3081, 1
        %v3086 = vsel %vm3084, %v3085, %v3081
        %v3087 = vadd.s32 %v3082, %v3086
        %v3088 = vadd.s32 %v3087, 536870912
        %v3089 = vshrl.u32 %v3088, 30
        %v3090 = vshll.u32 %v3089, 30
        %v3091 = vsub.s32 %v3087, %v3090
        %vm3092 = vcmp.lt.s32.totalorder %v3091, 0
        %v3093 = vsub.s32 0, %v3091
        %v3094 = vsel %vm3092, %v3093, %v3091
        %v3095 = vclz %v3094
        %v3096 = vsub.s32 %v3095, 2
        %vm3097 = vcmp.gt.s32.totalorder 0, %v3096
        %v3098 = vsel %vm3097, 0, %v3096
        %v3099 = vsub.s32 32, %v3098
        %v3100 = vshll.u32 %v3091, %v3098
        %v3101 = vshrl.u32 %v3083, %v3099
        %v3102 = vor.u32 %v3100, %v3101
        %v3103 = vsub.s32 4294967266, %v3098
        %v3104 = vadd.s32 %v3103, 127
        %v3105 = vshll.u32 %v3104, 23
        %v3106 = vor.u32 4788187, %v3105
        %v3107 = vand.u32 2147483647, %v3106
        %v3109 = vcvt.s32.f32 %v3102
        %v3110 = vmul.f32 %v3109, %v3107
        %v3111 = vxor.u32 %v3110, 2147483648
        %v3112 = vsel %vm2991, %v3111, %v3110
        %v3113 = vsub.s32 4, %v3089
        %v3114 = vsel %vm2991, %v3113, %v3089
        %v3115 = vsel %vm2990, %v1290, %v3112
        %v3116 = vsel %vm2990, 0, %v3114
        %v3117 = vmul.f32 %v3115, %v3115
        %v3118 = vmul.f32 %v3117, -0.001358992
        %v3119 = vadd.f32 %v3118, 0.041655596
        %v3120 = vmul.f32 %v3117, %v3119
        %v3121 = vadd.f32 %v3120, -0.4999988
        %v3122 = vmul.f32 %v3117, %v3121
        %v3123 = vadd.f32 1.0, %v3122
        %v3124 = vmul.f32 %v3115, %v3115
        %v3125 = vmul.f32 %v3124, -0.00019511016
        %v3126 = vadd.f32 %v3125, 0.008332121
        %v3127 = vmul.f32 %v3124, %v3126
        %v3128 = vadd.f32 %v3127, -0.16666654
        %v3129 = vmul.f32 %v3124, %v3128
        %v3130 = vadd.f32 %v3129, 1.0
        %v3131 = vmul.f32 %v3130, %v3115
        %vm3132 = vweird.f32 %v1290
        %v3133 = vand.u32 %v3116, 3
        %vm3134 = vcmp.lt.s32.totalorder %v3133, 2
        %vm3135 = vcmp.eq.s32.totalorder %v3133, 0
        %v3136 = vxor.u32 %v3131, 2147483648
        %v3137 = vsel %vm3135, %v3123, %v3136
        %vm3138 = vcmp.eq.s32.totalorder %v3133, 2
        %v3139 = vxor.u32 %v3123, 2147483648
        %v3140 = vsel %vm3138, %v3139, %v3131
        %v3141 = vsel %vm3134, %v3137, %v3140
        %v3142 = vsel %vm3132, nan, %v3141
        %v3143 = vand.u32 2147483647, %v1291
        %vm3144 = vcmp.le.f32.partialorder %v3143, 0.7853982
        %vm3145 = vcmp.lt.s32.totalorder %v1291, 0
        %v3146 = vand.u32 %v1291, 2139095040
        %v3147 = vshrl.u32 %v3146, 23
        %v3148 = vsub.s32 %v3147, 127
        %v3149 = vand.u32 2147483647, %v1291
        %v3150 = vand.u32 %v3149, 8388607
        %v3151 = vor.u32 %v3150, 8388608
        %v3152 = vsub.s32 0, %v3151
        %v3153 = vadd.s32 %v3148, 1
        %vm3154 = vcmp.gt.s32.totalorder %v3153, 0
        %v3155 = vsel %vm3154, %v3153, 0
        %v3156 = vshrl.u32 %v3155, 5
        %v3157 = vand.u32 %v3155, 31
        %v3158 = vsub.s32 32, %v3157
        %v3159 = vshrl.u32 683565275, %v3158
        %v3160 = vshll.u32 683565275, %v3157
        %v3161 = vshrl.u32 2475754826, %v3158
        %v3162 = vor.u32 %v3160, %v3161
        %v3163 = vshll.u32 2475754826, %v3157
        %v3164 = vshrl.u32 2131351028, %v3158
        %v3165 = vor.u32 %v3163, %v3164
        %v3166 = vshll.u32 2131351028, %v3157
        %v3167 = vshrl.u32 2102212464, %v3158
        %v3168 = vor.u32 %v3166, %v3167
        %v3169 = vshll.u32 2102212464, %v3157
        %v3170 = vshrl.u32 920167782, %v3158
        %v3171 = vor.u32 %v3169, %v3170
        %v3172 = vshll.u32 920167782, %v3157
        %v3173 = vshrl.u32 1326507024, %v3158
        %v3174 = vor.u32 %v3172, %v3173
        %vm3175 = vcmp.lt.s32.totalorder %v3156, 1
        %vm3176 = vcmp.lt.s32.totalorder %v3156, 2
        %vm3177 = vcmp.lt.s32.totalorder %v3156, 3
        %vm3178 = vcmp.lt.s32.totalorder %v3156, 4
        %v3179 = vsel %vm3175, %v3159, %v3162
        %v3180 = vsel %vm3178, %v3168, 2102212464
        %v3181 = vsel %vm3177, %v3165, %v3180
        %v3182 = vsel %vm3176, %v3179, %v3181
        %v3183 = vsel %vm3175, %v3162, %v3165
        %v3184 = vsel %vm3178, %v3171, 920167782
        %v3185 = vsel %vm3177, %v3168, %v3184
        %v3186 = vsel %vm3176, %v3183, %v3185
        %v3187 = vsel %vm3175, %v3165, %v3168
        %v3188 = vsel %vm3178, %v3174, 1326507024
        %v3189 = vsel %vm3177, %v3171, %v3188
        %v3190 = vsel %vm3176, %v3187, %v3189
        %v3191 = vshll.u32 %v3151, 8
        %v3192 = vand.u32 %v3191, 65535
        %v3193 = vshrl.u32 %v3191, 16
        %v3194 = vand.u32 %v3190, 65535
        %v3195 = vshrl.u32 %v3190, 16
        %v3196 = vmul.u32 %v3192, %v3194
        %v3197 = vmul.u32 %v3192, %v3195
        %v3198 = vmul.u32 %v3193, %v3194
        %v3199 = vmul.u32 %v3193, %v3195
        %v3200 = vshll.u32 %v3197, 16
        %v3201 = vshrl.u32 %v3197, 16
        %v3202 = vshll.u32 %v3198, 16
        %v3203 = vshrl.u32 %v3198, 16
        %vm3204 = vc.u32 %v3196, %v3200
        %v3205 = vsel %vm3204, 1, 0
        %v3206 = vadd.s32 %v3196, %v3200
        %v3207 = vadd.s32 %v3199, %v3205
        %vm3208 = vc.u32 %v3206, %v3202
        %v3209 = vsel %vm3208, 1, 0
        %v3210 = vadd.s32 %v3206, %v3202
        %v3211 = vadd.s32 %v3207, %v3209
        %v3212 = vadd.s32 %v3211, %v3201
        %v3213 = vadd.s32 %v3212, %v3203
        %v3214 = vand.u32 %v3191, 65535
        %v3215 = vshrl.u32 %v3191, 16
        %v3216 = vand.u32 %v3186, 65535
        %v3217 = vshrl.u32 %v3186, 16
        %v3218 = vmul.u32 %v3214, %v3216
        %v3219 = vmul.u32 %v3214, %v3217
        %v3220 = vmul.u32 %v3215, %v3216
        %v3221 = vmul.u32 %v3215, %v3217
        %v3222 = vshll.u32 %v3219, 16
        %v3223 = vshrl.u32 %v3219, 16
        %v3224 = vshll.u32 %v3220, 16
        %v3225 = vshrl.u32 %v3220, 16
        %vm3226 = vc.u32 %v3218, %v3222
        %v3227 = vsel %vm3226, 1, 0
        %v3228 = vadd.s32 %v3218, %v3222
        %v3229 = vadd.s32 %v3221, %v3227
        %vm3230 = vc.u32 %v3228, %v3224
        %v3231 = vsel %vm3230, 1, 0
        %v3232 = vadd.s32 %v3228, %v3224
        %v3233 = vadd.s32 %v3229, %v3231
        %v3234 = vadd.s32 %v3233, %v3223
        %v3235 = vadd.s32 %v3234, %v3225
        %v3236 = vmul.u32 %v3191, %v3182
        %v3237 = vadd.s32 %v3213, %v3232
        %vm3238 = vc.u32 %v3213, %v3232
        %v3239 = vadd.s32 %v3235, 1
        %v3240 = vsel %vm3238, %v3239, %v3235
        %v3241 = vadd.s32 %v3236, %v3240
        %v3242 = vadd.s32 %v3241, 536870912
        %v3243 = vshrl.u32 %v3242, 30
        %v3244 = vshll.u32 %v3243, 30
        %v3245 = vsub.s32 %v3241, %v3244
        %vm3246 = vcmp.lt.s32.totalorder %v3245, 0
        %v3247 = vsub.s32 0, %v3245
        %v3248 = vsel %vm3246, %v3247, %v3245
        %v3249 = vclz %v3248
        %v3250 = vsub.s32 %v3249, 2
        %vm3251 = vcmp.gt.s32.totalorder 0, %v3250
        %v3252 = vsel %vm3251, 0, %v3250
        %v3253 = vsub.s32 32, %v3252
        %v3254 = vshll.u32 %v3245, %v3252
        %v3255 = vshrl.u32 %v3237, %v3253
        %v3256 = vor.u32 %v3254, %v3255
        %v3257 = vsub.s32 4294967266, %v3252
        %v3258 = vadd.s32 %v3257, 127
        %v3259 = vshll.u32 %v3258, 23
        %v3260 = vor.u32 4788187, %v3259
        %v3261 = vand.u32 2147483647, %v3260
        %v3263 = vcvt.s32.f32 %v3256
        %v3264 = vmul.f32 %v3263, %v3261
        %v3265 = vxor.u32 %v3264, 2147483648
        %v3266 = vsel %vm3145, %v3265, %v3264
        %v3267 = vsub.s32 4, %v3243
        %v3268 = vsel %vm3145, %v3267, %v3243
        %v3269 = vsel %vm3144, %v1291, %v3266
        %v3270 = vsel %vm3144, 0, %v3268
        %v3271 = vmul.f32 %v3269, %v3269
        %v3272 = vmul.f32 %v3271, -0.001358992
        %v3273 = vadd.f32 %v3272, 0.041655596
        %v3274 = vmul.f32 %v3271, %v3273
        %v3275 = vadd.f32 %v3274, -0.4999988
        %v3276 = vmul.f32 %v3271, %v3275
        %v3277 = vadd.f32 1.0, %v3276
        %v3278 = vmul.f32 %v3269, %v3269
        %v3279 = vmul.f32 %v3278, -0.00019511016
        %v3280 = vadd.f32 %v3279, 0.008332121
        %v3281 = vmul.f32 %v3278, %v3280
        %v3282 = vadd.f32 %v3281, -0.16666654
        %v3283 = vmul.f32 %v3278, %v3282
        %v3284 = vadd.f32 %v3283, 1.0
        %v3285 = vmul.f32 %v3284, %v3269
        %vm3286 = vweird.f32 %v1291
        %v3287 = vand.u32 %v3270, 3
        %vm3288 = vcmp.lt.s32.totalorder %v3287, 2
        %vm3289 = vcmp.eq.s32.totalorder %v3287, 0
        %v3290 = vxor.u32 %v3285, 2147483648
        %v3291 = vsel %vm3289, %v3277, %v3290
        %vm3292 = vcmp.eq.s32.totalorder %v3287, 2
        %v3293 = vxor.u32 %v3277, 2147483648
        %v3294 = vsel %vm3292, %v3293, %v3285
        %v3295 = vsel %vm3288, %v3291, %v3294
        %v3296 = vsel %vm3286, nan, %v3295
        %v3297 = vand.u32 2147483647, %v1292
        %vm3298 = vcmp.le.f32.partialorder %v3297, 0.7853982
        %vm3299 = vcmp.lt.s32.totalorder %v1292, 0
        %v3300 = vand.u32 %v1292, 2139095040
        %v3301 = vshrl.u32 %v3300, 23
        %v3302 = vsub.s32 %v3301, 127
        %v3303 = vand.u32 2147483647, %v1292
        %v3304 = vand.u32 %v3303, 8388607
        %v3305 = vor.u32 %v3304, 8388608
        %v3306 = vsub.s32 0, %v3305
        %v3307 = vadd.s32 %v3302, 1
        %vm3308 = vcmp.gt.s32.totalorder %v3307, 0
        %v3309 = vsel %vm3308, %v3307, 0
        %v3310 = vshrl.u32 %v3309, 5
        %v3311 = vand.u32 %v3309, 31
        %v3312 = vsub.s32 32, %v3311
        %v3313 = vshrl.u32 683565275, %v3312
        %v3314 = vshll.u32 683565275, %v3311
        %v3315 = vshrl.u32 2475754826, %v3312
        %v3316 = vor.u32 %v3314, %v3315
        %v3317 = vshll.u32 2475754826, %v3311
        %v3318 = vshrl.u32 2131351028, %v3312
        %v3319 = vor.u32 %v3317, %v3318
        %v3320 = vshll.u32 2131351028, %v3311
        %v3321 = vshrl.u32 2102212464, %v3312
        %v3322 = vor.u32 %v3320, %v3321
        %v3323 = vshll.u32 2102212464, %v3311
        %v3324 = vshrl.u32 920167782, %v3312
        %v3325 = vor.u32 %v3323, %v3324
        %v3326 = vshll.u32 920167782, %v3311
        %v3327 = vshrl.u32 1326507024, %v3312
        %v3328 = vor.u32 %v3326, %v3327
        %vm3329 = vcmp.lt.s32.totalorder %v3310, 1
        %vm3330 = vcmp.lt.s32.totalorder %v3310, 2
        %vm3331 = vcmp.lt.s32.totalorder %v3310, 3
        %vm3332 = vcmp.lt.s32.totalorder %v3310, 4
        %v3333 = vsel %vm3329, %v3313, %v3316
        %v3334 = vsel %vm3332, %v3322, 2102212464
        %v3335 = vsel %vm3331, %v3319, %v3334
        %v3336 = vsel %vm3330, %v3333, %v3335
        %v3337 = vsel %vm3329, %v3316, %v3319
        %v3338 = vsel %vm3332, %v3325, 920167782
        %v3339 = vsel %vm3331, %v3322, %v3338
        %v3340 = vsel %vm3330, %v3337, %v3339
        %v3341 = vsel %vm3329, %v3319, %v3322
        %v3342 = vsel %vm3332, %v3328, 1326507024
        %v3343 = vsel %vm3331, %v3325, %v3342
        %v3344 = vsel %vm3330, %v3341, %v3343
        %v3345 = vshll.u32 %v3305, 8
        %v3346 = vand.u32 %v3345, 65535
        %v3347 = vshrl.u32 %v3345, 16
        %v3348 = vand.u32 %v3344, 65535
        %v3349 = vshrl.u32 %v3344, 16
        %v3350 = vmul.u32 %v3346, %v3348
        %v3351 = vmul.u32 %v3346, %v3349
        %v3352 = vmul.u32 %v3347, %v3348
        %v3353 = vmul.u32 %v3347, %v3349
        %v3354 = vshll.u32 %v3351, 16
        %v3355 = vshrl.u32 %v3351, 16
        %v3356 = vshll.u32 %v3352, 16
        %v3357 = vshrl.u32 %v3352, 16
        %vm3358 = vc.u32 %v3350, %v3354
        %v3359 = vsel %vm3358, 1, 0
        %v3360 = vadd.s32 %v3350, %v3354
        %v3361 = vadd.s32 %v3353, %v3359
        %vm3362 = vc.u32 %v3360, %v3356
        %v3363 = vsel %vm3362, 1, 0
        %v3364 = vadd.s32 %v3360, %v3356
        %v3365 = vadd.s32 %v3361, %v3363
        %v3366 = vadd.s32 %v3365, %v3355
        %v3367 = vadd.s32 %v3366, %v3357
        %v3368 = vand.u32 %v3345, 65535
        %v3369 = vshrl.u32 %v3345, 16
        %v3370 = vand.u32 %v3340, 65535
        %v3371 = vshrl.u32 %v3340, 16
        %v3372 = vmul.u32 %v3368, %v3370
        %v3373 = vmul.u32 %v3368, %v3371
        %v3374 = vmul.u32 %v3369, %v3370
        %v3375 = vmul.u32 %v3369, %v3371
        %v3376 = vshll.u32 %v3373, 16
        %v3377 = vshrl.u32 %v3373, 16
        %v3378 = vshll.u32 %v3374, 16
        %v3379 = vshrl.u32 %v3374, 16
        %vm3380 = vc.u32 %v3372, %v3376
        %v3381 = vsel %vm3380, 1, 0
        %v3382 = vadd.s32 %v3372, %v3376
        %v3383 = vadd.s32 %v3375, %v3381
        %vm3384 = vc.u32 %v3382, %v3378
        %v3385 = vsel %vm3384, 1, 0
        %v3386 = vadd.s32 %v3382, %v3378
        %v3387 = vadd.s32 %v3383, %v3385
        %v3388 = vadd.s32 %v3387, %v3377
        %v3389 = vadd.s32 %v3388, %v3379
        %v3390 = vmul.u32 %v3345, %v3336
        %v3391 = vadd.s32 %v3367, %v3386
        %vm3392 = vc.u32 %v3367, %v3386
        %v3393 = vadd.s32 %v3389, 1
        %v3394 = vsel %vm3392, %v3393, %v3389
        %v3395 = vadd.s32 %v3390, %v3394
        %v3396 = vadd.s32 %v3395, 536870912
        %v3397 = vshrl.u32 %v3396, 30
        %v3398 = vshll.u32 %v3397, 30
        %v3399 = vsub.s32 %v3395, %v3398
        %vm3400 = vcmp.lt.s32.totalorder %v3399, 0
        %v3401 = vsub.s32 0, %v3399
        %v3402 = vsel %vm3400, %v3401, %v3399
        %v3403 = vclz %v3402
        %v3404 = vsub.s32 %v3403, 2
        %vm3405 = vcmp.gt.s32.totalorder 0, %v3404
        %v3406 = vsel %vm3405, 0, %v3404
        %v3407 = vsub.s32 32, %v3406
        %v3408 = vshll.u32 %v3399, %v3406
        %v3409 = vshrl.u32 %v3391, %v3407
        %v3410 = vor.u32 %v3408, %v3409
        %v3411 = vsub.s32 4294967266, %v3406
        %v3412 = vadd.s32 %v3411, 127
        %v3413 = vshll.u32 %v3412, 23
        %v3414 = vor.u32 4788187, %v3413
        %v3415 = vand.u32 2147483647, %v3414
        %v3417 = vcvt.s32.f32 %v3410
        %v3418 = vmul.f32 %v3417, %v3415
        %v3419 = vxor.u32 %v3418, 2147483648
        %v3420 = vsel %vm3299, %v3419, %v3418
        %v3421 = vsub.s32 4, %v3397
        %v3422 = vsel %vm3299, %v3421, %v3397
        %v3423 = vsel %vm3298, %v1292, %v3420
        %v3424 = vsel %vm3298, 0, %v3422
        %v3425 = vmul.f32 %v3423, %v3423
        %v3426 = vmul.f32 %v3425, -0.001358992
        %v3427 = vadd.f32 %v3426, 0.041655596
        %v3428 = vmul.f32 %v3425, %v3427
        %v3429 = vadd.f32 %v3428, -0.4999988
        %v3430 = vmul.f32 %v3425, %v3429
        %v3431 = vadd.f32 1.0, %v3430
        %v3432 = vmul.f32 %v3423, %v3423
        %v3433 = vmul.f32 %v3432, -0.00019511016
        %v3434 = vadd.f32 %v3433, 0.008332121
        %v3435 = vmul.f32 %v3432, %v3434
        %v3436 = vadd.f32 %v3435, -0.16666654
        %v3437 = vmul.f32 %v3432, %v3436
        %v3438 = vadd.f32 %v3437, 1.0
        %v3439 = vmul.f32 %v3438, %v3423
        %vm3440 = vweird.f32 %v1292
        %v3441 = vand.u32 %v3424, 3
        %vm3442 = vcmp.lt.s32.totalorder %v3441, 2
        %vm3443 = vcmp.eq.s32.totalorder %v3441, 0
        %v3444 = vxor.u32 %v3439, 2147483648
        %v3445 = vsel %vm3443, %v3431, %v3444
        %vm3446 = vcmp.eq.s32.totalorder %v3441, 2
        %v3447 = vxor.u32 %v3431, 2147483648
        %v3448 = vsel %vm3446, %v3447, %v3439
        %v3449 = vsel %vm3442, %v3445, %v3448
        %v3450 = vsel %vm3440, nan, %v3449
        %v3451 = vand.u32 2147483647, %v1293
        %vm3452 = vcmp.le.f32.partialorder %v3451, 0.7853982
        %vm3453 = vcmp.lt.s32.totalorder %v1293, 0
        %v3454 = vand.u32 %v1293, 2139095040
        %v3455 = vshrl.u32 %v3454, 23
        %v3456 = vsub.s32 %v3455, 127
        %v3457 = vand.u32 2147483647, %v1293
        %v3458 = vand.u32 %v3457, 8388607
        %v3459 = vor.u32 %v3458, 8388608
        %v3460 = vsub.s32 0, %v3459
        %v3461 = vadd.s32 %v3456, 1
        %vm3462 = vcmp.gt.s32.totalorder %v3461, 0
        %v3463 = vsel %vm3462, %v3461, 0
        %v3464 = vshrl.u32 %v3463, 5
        %v3465 = vand.u32 %v3463, 31
        %v3466 = vsub.s32 32, %v3465
        %v3467 = vshrl.u32 683565275, %v3466
        %v3468 = vshll.u32 683565275, %v3465
        %v3469 = vshrl.u32 2475754826, %v3466
        %v3470 = vor.u32 %v3468, %v3469
        %v3471 = vshll.u32 2475754826, %v3465
        %v3472 = vshrl.u32 2131351028, %v3466
        %v3473 = vor.u32 %v3471, %v3472
        %v3474 = vshll.u32 2131351028, %v3465
        %v3475 = vshrl.u32 2102212464, %v3466
        %v3476 = vor.u32 %v3474, %v3475
        %v3477 = vshll.u32 2102212464, %v3465
        %v3478 = vshrl.u32 920167782, %v3466
        %v3479 = vor.u32 %v3477, %v3478
        %v3480 = vshll.u32 920167782, %v3465
        %v3481 = vshrl.u32 1326507024, %v3466
        %v3482 = vor.u32 %v3480, %v3481
        %vm3483 = vcmp.lt.s32.totalorder %v3464, 1
        %vm3484 = vcmp.lt.s32.totalorder %v3464, 2
        %vm3485 = vcmp.lt.s32.totalorder %v3464, 3
        %vm3486 = vcmp.lt.s32.totalorder %v3464, 4
        %v3487 = vsel %vm3483, %v3467, %v3470
        %v3488 = vsel %vm3486, %v3476, 2102212464
        %v3489 = vsel %vm3485, %v3473, %v3488
        %v3490 = vsel %vm3484, %v3487, %v3489
        %v3491 = vsel %vm3483, %v3470, %v3473
        %v3492 = vsel %vm3486, %v3479, 920167782
        %v3493 = vsel %vm3485, %v3476, %v3492
        %v3494 = vsel %vm3484, %v3491, %v3493
        %v3495 = vsel %vm3483, %v3473, %v3476
        %v3496 = vsel %vm3486, %v3482, 1326507024
        %v3497 = vsel %vm3485, %v3479, %v3496
        %v3498 = vsel %vm3484, %v3495, %v3497
        %v3499 = vshll.u32 %v3459, 8
        %v3500 = vand.u32 %v3499, 65535
        %v3501 = vshrl.u32 %v3499, 16
        %v3502 = vand.u32 %v3498, 65535
        %v3503 = vshrl.u32 %v3498, 16
        %v3504 = vmul.u32 %v3500, %v3502
        %v3505 = vmul.u32 %v3500, %v3503
        %v3506 = vmul.u32 %v3501, %v3502
        %v3507 = vmul.u32 %v3501, %v3503
        %v3508 = vshll.u32 %v3505, 16
        %v3509 = vshrl.u32 %v3505, 16
        %v3510 = vshll.u32 %v3506, 16
        %v3511 = vshrl.u32 %v3506, 16
        %vm3512 = vc.u32 %v3504, %v3508
        %v3513 = vsel %vm3512, 1, 0
        %v3514 = vadd.s32 %v3504, %v3508
        %v3515 = vadd.s32 %v3507, %v3513
        %vm3516 = vc.u32 %v3514, %v3510
        %v3517 = vsel %vm3516, 1, 0
        %v3518 = vadd.s32 %v3514, %v3510
        %v3519 = vadd.s32 %v3515, %v3517
        %v3520 = vadd.s32 %v3519, %v3509
        %v3521 = vadd.s32 %v3520, %v3511
        %v3522 = vand.u32 %v3499, 65535
        %v3523 = vshrl.u32 %v3499, 16
        %v3524 = vand.u32 %v3494, 65535
        %v3525 = vshrl.u32 %v3494, 16
        %v3526 = vmul.u32 %v3522, %v3524
        %v3527 = vmul.u32 %v3522, %v3525
        %v3528 = vmul.u32 %v3523, %v3524
        %v3529 = vmul.u32 %v3523, %v3525
        %v3530 = vshll.u32 %v3527, 16
        %v3531 = vshrl.u32 %v3527, 16
        %v3532 = vshll.u32 %v3528, 16
        %v3533 = vshrl.u32 %v3528, 16
        %vm3534 = vc.u32 %v3526, %v3530
        %v3535 = vsel %vm3534, 1, 0
        %v3536 = vadd.s32 %v3526, %v3530
        %v3537 = vadd.s32 %v3529, %v3535
        %vm3538 = vc.u32 %v3536, %v3532
        %v3539 = vsel %vm3538, 1, 0
        %v3540 = vadd.s32 %v3536, %v3532
        %v3541 = vadd.s32 %v3537, %v3539
        %v3542 = vadd.s32 %v3541, %v3531
        %v3543 = vadd.s32 %v3542, %v3533
        %v3544 = vmul.u32 %v3499, %v3490
        %v3545 = vadd.s32 %v3521, %v3540
        %vm3546 = vc.u32 %v3521, %v3540
        %v3547 = vadd.s32 %v3543, 1
        %v3548 = vsel %vm3546, %v3547, %v3543
        %v3549 = vadd.s32 %v3544, %v3548
        %v3550 = vadd.s32 %v3549, 536870912
        %v3551 = vshrl.u32 %v3550, 30
        %v3552 = vshll.u32 %v3551, 30
        %v3553 = vsub.s32 %v3549, %v3552
        %vm3554 = vcmp.lt.s32.totalorder %v3553, 0
        %v3555 = vsub.s32 0, %v3553
        %v3556 = vsel %vm3554, %v3555, %v3553
        %v3557 = vclz %v3556
        %v3558 = vsub.s32 %v3557, 2
        %vm3559 = vcmp.gt.s32.totalorder 0, %v3558
        %v3560 = vsel %vm3559, 0, %v3558
        %v3561 = vsub.s32 32, %v3560
        %v3562 = vshll.u32 %v3553, %v3560
        %v3563 = vshrl.u32 %v3545, %v3561
        %v3564 = vor.u32 %v3562, %v3563
        %v3565 = vsub.s32 4294967266, %v3560
        %v3566 = vadd.s32 %v3565, 127
        %v3567 = vshll.u32 %v3566, 23
        %v3568 = vor.u32 4788187, %v3567
        %v3569 = vand.u32 2147483647, %v3568
        %v3571 = vcvt.s32.f32 %v3564
        %v3572 = vmul.f32 %v3571, %v3569
        %v3573 = vxor.u32 %v3572, 2147483648
        %v3574 = vsel %vm3453, %v3573, %v3572
        %v3575 = vsub.s32 4, %v3551
        %v3576 = vsel %vm3453, %v3575, %v3551
        %v3577 = vsel %vm3452, %v1293, %v3574
        %v3578 = vsel %vm3452, 0, %v3576
        %v3579 = vmul.f32 %v3577, %v3577
        %v3580 = vmul.f32 %v3579, -0.001358992
        %v3581 = vadd.f32 %v3580, 0.041655596
        %v3582 = vmul.f32 %v3579, %v3581
        %v3583 = vadd.f32 %v3582, -0.4999988
        %v3584 = vmul.f32 %v3579, %v3583
        %v3585 = vadd.f32 1.0, %v3584
        %v3586 = vmul.f32 %v3577, %v3577
        %v3587 = vmul.f32 %v3586, -0.00019511016
        %v3588 = vadd.f32 %v3587, 0.008332121
        %v3589 = vmul.f32 %v3586, %v3588
        %v3590 = vadd.f32 %v3589, -0.16666654
        %v3591 = vmul.f32 %v3586, %v3590
        %v3592 = vadd.f32 %v3591, 1.0
        %v3593 = vmul.f32 %v3592, %v3577
        %vm3594 = vweird.f32 %v1293
        %v3595 = vand.u32 %v3578, 3
        %vm3596 = vcmp.lt.s32.totalorder %v3595, 2
        %vm3597 = vcmp.eq.s32.totalorder %v3595, 0
        %v3598 = vxor.u32 %v3593, 2147483648
        %v3599 = vsel %vm3597, %v3585, %v3598
        %vm3600 = vcmp.eq.s32.totalorder %v3595, 2
        %v3601 = vxor.u32 %v3585, 2147483648
        %v3602 = vsel %vm3600, %v3601, %v3593
        %v3603 = vsel %vm3596, %v3599, %v3602
        %v3604 = vsel %vm3594, nan, %v3603
        %v3605 = vand.u32 2147483647, %v1294
        %vm3606 = vcmp.le.f32.partialorder %v3605, 0.7853982
        %vm3607 = vcmp.lt.s32.totalorder %v1294, 0
        %v3608 = vand.u32 %v1294, 2139095040
        %v3609 = vshrl.u32 %v3608, 23
        %v3610 = vsub.s32 %v3609, 127
        %v3611 = vand.u32 2147483647, %v1294
        %v3612 = vand.u32 %v3611, 8388607
        %v3613 = vor.u32 %v3612, 8388608
        %v3614 = vsub.s32 0, %v3613
        %v3615 = vadd.s32 %v3610, 1
        %vm3616 = vcmp.gt.s32.totalorder %v3615, 0
        %v3617 = vsel %vm3616, %v3615, 0
        %v3618 = vshrl.u32 %v3617, 5
        %v3619 = vand.u32 %v3617, 31
        %v3620 = vsub.s32 32, %v3619
        %v3621 = vshrl.u32 683565275, %v3620
        %v3622 = vshll.u32 683565275, %v3619
        %v3623 = vshrl.u32 2475754826, %v3620
        %v3624 = vor.u32 %v3622, %v3623
        %v3625 = vshll.u32 2475754826, %v3619
        %v3626 = vshrl.u32 2131351028, %v3620
        %v3627 = vor.u32 %v3625, %v3626
        %v3628 = vshll.u32 2131351028, %v3619
        %v3629 = vshrl.u32 2102212464, %v3620
        %v3630 = vor.u32 %v3628, %v3629
        %v3631 = vshll.u32 2102212464, %v3619
        %v3632 = vshrl.u32 920167782, %v3620
        %v3633 = vor.u32 %v3631, %v3632
        %v3634 = vshll.u32 920167782, %v3619
        %v3635 = vshrl.u32 1326507024, %v3620
        %v3636 = vor.u32 %v3634, %v3635
        %vm3637 = vcmp.lt.s32.totalorder %v3618, 1
        %vm3638 = vcmp.lt.s32.totalorder %v3618, 2
        %vm3639 = vcmp.lt.s32.totalorder %v3618, 3
        %vm3640 = vcmp.lt.s32.totalorder %v3618, 4
        %v3641 = vsel %vm3637, %v3621, %v3624
        %v3642 = vsel %vm3640, %v3630, 2102212464
        %v3643 = vsel %vm3639, %v3627, %v3642
        %v3644 = vsel %vm3638, %v3641, %v3643
        %v3645 = vsel %vm3637, %v3624, %v3627
        %v3646 = vsel %vm3640, %v3633, 920167782
        %v3647 = vsel %vm3639, %v3630, %v3646
        %v3648 = vsel %vm3638, %v3645, %v3647
        %v3649 = vsel %vm3637, %v3627, %v3630
        %v3650 = vsel %vm3640, %v3636, 1326507024
        %v3651 = vsel %vm3639, %v3633, %v3650
        %v3652 = vsel %vm3638, %v3649, %v3651
        %v3653 = vshll.u32 %v3613, 8
        %v3654 = vand.u32 %v3653, 65535
        %v3655 = vshrl.u32 %v3653, 16
        %v3656 = vand.u32 %v3652, 65535
        %v3657 = vshrl.u32 %v3652, 16
        %v3658 = vmul.u32 %v3654, %v3656
        %v3659 = vmul.u32 %v3654, %v3657
        %v3660 = vmul.u32 %v3655, %v3656
        %v3661 = vmul.u32 %v3655, %v3657
        %v3662 = vshll.u32 %v3659, 16
        %v3663 = vshrl.u32 %v3659, 16
        %v3664 = vshll.u32 %v3660, 16
        %v3665 = vshrl.u32 %v3660, 16
        %vm3666 = vc.u32 %v3658, %v3662
        %v3667 = vsel %vm3666, 1, 0
        %v3668 = vadd.s32 %v3658, %v3662
        %v3669 = vadd.s32 %v3661, %v3667
        %vm3670 = vc.u32 %v3668, %v3664
        %v3671 = vsel %vm3670, 1, 0
        %v3672 = vadd.s32 %v3668, %v3664
        %v3673 = vadd.s32 %v3669, %v3671
        %v3674 = vadd.s32 %v3673, %v3663
        %v3675 = vadd.s32 %v3674, %v3665
        %v3676 = vand.u32 %v3653, 65535
        %v3677 = vshrl.u32 %v3653, 16
        %v3678 = vand.u32 %v3648, 65535
        %v3679 = vshrl.u32 %v3648, 16
        %v3680 = vmul.u32 %v3676, %v3678
        %v3681 = vmul.u32 %v3676, %v3679
        %v3682 = vmul.u32 %v3677, %v3678
        %v3683 = vmul.u32 %v3677, %v3679
        %v3684 = vshll.u32 %v3681, 16
        %v3685 = vshrl.u32 %v3681, 16
        %v3686 = vshll.u32 %v3682, 16
        %v3687 = vshrl.u32 %v3682, 16
        %vm3688 = vc.u32 %v3680, %v3684
        %v3689 = vsel %vm3688, 1, 0
        %v3690 = vadd.s32 %v3680, %v3684
        %v3691 = vadd.s32 %v3683, %v3689
        %vm3692 = vc.u32 %v3690, %v3686
        %v3693 = vsel %vm3692, 1, 0
        %v3694 = vadd.s32 %v3690, %v3686
        %v3695 = vadd.s32 %v3691, %v3693
        %v3696 = vadd.s32 %v3695, %v3685
        %v3697 = vadd.s32 %v3696, %v3687
        %v3698 = vmul.u32 %v3653, %v3644
        %v3699 = vadd.s32 %v3675, %v3694
        %vm3700 = vc.u32 %v3675, %v3694
        %v3701 = vadd.s32 %v3697, 1
        %v3702 = vsel %vm3700, %v3701, %v3697
        %v3703 = vadd.s32 %v3698, %v3702
        %v3704 = vadd.s32 %v3703, 536870912
        %v3705 = vshrl.u32 %v3704, 30
        %v3706 = vshll.u32 %v3705, 30
        %v3707 = vsub.s32 %v3703, %v3706
        %vm3708 = vcmp.lt.s32.totalorder %v3707, 0
        %v3709 = vsub.s32 0, %v3707
        %v3710 = vsel %vm3708, %v3709, %v3707
        %v3711 = vclz %v3710
        %v3712 = vsub.s32 %v3711, 2
        %vm3713 = vcmp.gt.s32.totalorder 0, %v3712
        %v3714 = vsel %vm3713, 0, %v3712
        %v3715 = vsub.s32 32, %v3714
        %v3716 = vshll.u32 %v3707, %v3714
        %v3717 = vshrl.u32 %v3699, %v3715
        %v3718 = vor.u32 %v3716, %v3717
        %v3719 = vsub.s32 4294967266, %v3714
        %v3720 = vadd.s32 %v3719, 127
        %v3721 = vshll.u32 %v3720, 23
        %v3722 = vor.u32 4788187, %v3721
        %v3723 = vand.u32 2147483647, %v3722
        %v3725 = vcvt.s32.f32 %v3718
        %v3726 = vmul.f32 %v3725, %v3723
        %v3727 = vxor.u32 %v3726, 2147483648
        %v3728 = vsel %vm3607, %v3727, %v3726
        %v3729 = vsub.s32 4, %v3705
        %v3730 = vsel %vm3607, %v3729, %v3705
        %v3731 = vsel %vm3606, %v1294, %v3728
        %v3732 = vsel %vm3606, 0, %v3730
        %v3733 = vmul.f32 %v3731, %v3731
        %v3734 = vmul.f32 %v3733, -0.001358992
        %v3735 = vadd.f32 %v3734, 0.041655596
        %v3736 = vmul.f32 %v3733, %v3735
        %v3737 = vadd.f32 %v3736, -0.4999988
        %v3738 = vmul.f32 %v3733, %v3737
        %v3739 = vadd.f32 1.0, %v3738
        %v3740 = vmul.f32 %v3731, %v3731
        %v3741 = vmul.f32 %v3740, -0.00019511016
        %v3742 = vadd.f32 %v3741, 0.008332121
        %v3743 = vmul.f32 %v3740, %v3742
        %v3744 = vadd.f32 %v3743, -0.16666654
        %v3745 = vmul.f32 %v3740, %v3744
        %v3746 = vadd.f32 %v3745, 1.0
        %v3747 = vmul.f32 %v3746, %v3731
        %vm3748 = vweird.f32 %v1294
        %v3749 = vand.u32 %v3732, 3
        %vm3750 = vcmp.lt.s32.totalorder %v3749, 2
        %vm3751 = vcmp.eq.s32.totalorder %v3749, 0
        %v3752 = vxor.u32 %v3747, 2147483648
        %v3753 = vsel %vm3751, %v3739, %v3752
        %vm3754 = vcmp.eq.s32.totalorder %v3749, 2
        %v3755 = vxor.u32 %v3739, 2147483648
        %v3756 = vsel %vm3754, %v3755, %v3747
        %v3757 = vsel %vm3750, %v3753, %v3756
        %v3758 = vsel %vm3748, nan, %v3757
        %v3759 = vadd.f32 %v1448, 1.0
        %v3760 = vadd.f32 %v1602, 1.0
        %v3761 = vadd.f32 %v1756, 1.0
        %v3762 = vadd.f32 %v1910, 1.0
        %v3763 = vadd.f32 %v2064, 1.0
        %v3764 = vadd.f32 %v2218, 1.0
        %v3765 = vadd.f32 %v2372, 1.0
        %v3766 = vadd.f32 %v2526, 1.0
        %v3767 = vadd.f32 %v2680, 1.0
        %v3768 = vadd.f32 %v2834, 1.0
        %v3769 = vadd.f32 %v2988, 1.0
        %v3770 = vadd.f32 %v3142, 1.0
        %v3771 = vadd.f32 %v3296, 1.0
        %v3772 = vadd.f32 %v3450, 1.0
        %v3773 = vadd.f32 %v3604, 1.0
        %v3774 = vadd.f32 %v3758, 1.0
        %v3775 = vmul.f32 %v3759, 0.5
        %v3776 = vmul.f32 %v3760, 0.5
        %v3777 = vmul.f32 %v3761, 0.5
        %v3778 = vmul.f32 %v3762, 0.5
        %v3779 = vmul.f32 %v3763, 0.5
        %v3780 = vmul.f32 %v3764, 0.5
        %v3781 = vmul.f32 %v3765, 0.5
        %v3782 = vmul.f32 %v3766, 0.5
        %v3783 = vmul.f32 %v3767, 0.5
        %v3784 = vmul.f32 %v3768, 0.5
        %v3785 = vmul.f32 %v3769, 0.5
        %v3786 = vmul.f32 %v3770, 0.5
        %v3787 = vmul.f32 %v3771, 0.5
        %v3788 = vmul.f32 %v3772, 0.5
        %v3789 = vmul.f32 %v3773, 0.5
        %v3790 = vmul.f32 %v3774, 0.5
        %vm3791 = vcmp.lt.f32.partialorder %v1083, 5.0
        %vm3792 = vcmp.lt.f32.partialorder %v1084, 5.0
        %vm3793 = vcmp.lt.f32.partialorder %v1085, 5.0
        %vm3794 = vcmp.lt.f32.partialorder %v1086, 5.0
        %vm3795 = vcmp.lt.f32.partialorder %v1087, 5.0
        %vm3796 = vcmp.lt.f32.partialorder %v1088, 5.0
        %vm3797 = vcmp.lt.f32.partialorder %v1089, 5.0
        %vm3798 = vcmp.lt.f32.partialorder %v1090, 5.0
        %vm3799 = vcmp.lt.f32.partialorder %v1091, 5.0
        %vm3800 = vcmp.lt.f32.partialorder %v1092, 5.0
        %vm3801 = vcmp.lt.f32.partialorder %v1093, 5.0
        %vm3802 = vcmp.lt.f32.partialorder %v1094, 5.0
        %vm3803 = vcmp.lt.f32.partialorder %v1095, 5.0
        %vm3804 = vcmp.lt.f32.partialorder %v1096, 5.0
        %vm3805 = vcmp.lt.f32.partialorder %v1097, 5.0
        %vm3806 = vcmp.lt.f32.partialorder %v1098, 5.0
        %v3807 = vsel %vm3791, 1, 0
        %v3808 = vsel %vm3792, 1, 0
        %v3809 = vsel %vm3793, 1, 0
        %v3810 = vsel %vm3794, 1, 0
        %v3811 = vsel %vm3795, 1, 0
        %v3812 = vsel %vm3796, 1, 0
        %v3813 = vsel %vm3797, 1, 0
        %v3814 = vsel %vm3798, 1, 0
        %v3815 = vsel %vm3799, 1, 0
        %v3816 = vsel %vm3800, 1, 0
        %v3817 = vsel %vm3801, 1, 0
        %v3818 = vsel %vm3802, 1, 0
        %v3819 = vsel %vm3803, 1, 0
        %v3820 = vsel %vm3804, 1, 0
        %v3821 = vsel %vm3805, 1, 0
        %v3822 = vsel %vm3806, 1, 0
        %v3823 = vcvt.s32.f32 %v3807
        %v3824 = vcvt.s32.f32 %v3808
        %v3825 = vcvt.s32.f32 %v3809
        %v3826 = vcvt.s32.f32 %v3810
        %v3827 = vcvt.s32.f32 %v3811
        %v3828 = vcvt.s32.f32 %v3812
        %v3829 = vcvt.s32.f32 %v3813
        %v3830 = vcvt.s32.f32 %v3814
        %v3831 = vcvt.s32.f32 %v3815
        %v3832 = vcvt.s32.f32 %v3816
        %v3833 = vcvt.s32.f32 %v3817
        %v3834 = vcvt.s32.f32 %v3818
        %v3835 = vcvt.s32.f32 %v3819
        %v3836 = vcvt.s32.f32 %v3820
        %v3837 = vcvt.s32.f32 %v3821
        %v3838 = vcvt.s32.f32 %v3822
        %v3839 = vmul.f32 %v3775, %v3823
        %v3840 = vmul.f32 %v3776, %v3824
        %v3841 = vmul.f32 %v3777, %v3825
        %v3842 = vmul.f32 %v3778, %v3826
        %v3843 = vmul.f32 %v3779, %v3827
        %v3844 = vmul.f32 %v3780, %v3828
        %v3845 = vmul.f32 %v3781, %v3829
        %v3846 = vmul.f32 %v3782, %v3830
        %v3847 = vmul.f32 %v3783, %v3831
        %v3848 = vmul.f32 %v3784, %v3832
        %v3849 = vmul.f32 %v3785, %v3833
        %v3850 = vmul.f32 %v3786, %v3834
        %v3851 = vmul.f32 %v3787, %v3835
        %v3852 = vmul.f32 %v3788, %v3836
        %v3853 = vmul.f32 %v3789, %v3837
        %v3854 = vmul.f32 %v3790, %v3838
        %v3855 = vmul.f32 %v3839, %v1099
        %v3856 = vmul.f32 %v3840, %v1100
        %v3857 = vmul.f32 %v3841, %v1101
        %v3858 = vmul.f32 %v3842, %v1102
        %v3859 = vmul.f32 %v3843, %v1103
        %v3860 = vmul.f32 %v3844, %v1104
        %v3861 = vmul.f32 %v3845, %v1105
        %v3862 = vmul.f32 %v3846, %v1106
        %v3863 = vmul.f32 %v3847, %v1107
        %v3864 = vmul.f32 %v3848, %v1108
        %v3865 = vmul.f32 %v3849, %v1109
        %v3866 = vmul.f32 %v3850, %v1110
        %v3867 = vmul.f32 %v3851, %v1111
        %v3868 = vmul.f32 %v3852, %v1112
        %v3869 = vmul.f32 %v3853, %v1113
        %v3870 = vmul.f32 %v3854, %v1114
        %v3871 = vld [vmem:[%s689] sm:$0xff]
        %v3872 = vld [vmem:[%s689 + $0x8] sm:$0xff]
        %v3873 = vld [vmem:[%s698] sm:$0x1]
        %v3875 = vperm.slane %v3873, 0
        %vm3877 = vcmask 130048
        %v3879 = vsel %vm3877, %v1248, 0
        %v3882 = vsel %vm3877, %v1250, 0
        %v3885 = vsel %vm3877, %v1252, 0
        %v3888 = vsel %vm3877, %v1254, 0
        %v3891 = vsel %vm3877, %v1256, 0
        %v3894 = vsel %vm3877, %v1258, 0
        %v3897 = vsel %vm3877, %v1260, 0
        %v3900 = vsel %vm3877, %v1262, 0
        %v3903 = vsel %vm3877, %v1264, 0
        %v3906 = vsel %vm3877, %v1266, 0
        %v3909 = vsel %vm3877, %v1268, 0
        %v3912 = vsel %vm3877, %v1270, 0
        %v3915 = vsel %vm3877, %v1272, 0
        %v3918 = vsel %vm3877, %v1274, 0
        %v3921 = vsel %vm3877, %v1276, 0
        %v3924 = vsel %vm3877, %v1278, 0
        %3926 = vmatpush.msra.mxu0 0.0
        %3927 = vmatpush.msra.mxu0 0.0
        %3928 = vmatpush.msra.mxu0 0.0
        %3929 = vmatpush.msra.mxu0 0.0
        %3930 = vmatpush.msra.mxu0 0.0
        %3931 = vmatpush.msra.mxu0 0.0
        %3932 = vmatpush.msra.mxu0 0.0
        %3933 = vmatpush.msra.mxu0 0.0
        %3934 = vmatpush.msra.mxu0 0.0
        %3935 = vmatpush.msra.mxu0 0.0
        %3936 = vmatpush.msra.mxu0 0.0
        %3937 = vmatpush.msra.mxu0 0.0
        %3938 = vmatpush.msra.mxu0 0.0
        %3939 = vmatpush.msra.mxu0 0.0
        %3940 = vmatpush.msra.mxu0 %v3872
        %3941 = vmatpush.msra.mxu0 %v3871
        %3942 = vmatmul.f32.gmra.mxu0 %v3879
        %v3943 = vpop.f32.mrf.mxu0
        %v3944 = vadd.f32 %v3875, %v3943
        %3945 = vmatmul.f32.gmra.mxu0 %v3882
        %v3946 = vpop.f32.mrf.mxu0
        %v3947 = vadd.f32 %v3875, %v3946
        %3948 = vmatmul.f32.gmra.mxu0 %v3885
        %v3949 = vpop.f32.mrf.mxu0
        %v3950 = vadd.f32 %v3875, %v3949
        %3951 = vmatmul.f32.gmra.mxu0 %v3888
        %v3952 = vpop.f32.mrf.mxu0
        %v3953 = vadd.f32 %v3875, %v3952
        %3954 = vmatmul.f32.gmra.mxu0 %v3891
        %v3955 = vpop.f32.mrf.mxu0
        %v3956 = vadd.f32 %v3875, %v3955
        %3957 = vmatmul.f32.gmra.mxu0 %v3894
        %v3958 = vpop.f32.mrf.mxu0
        %v3959 = vadd.f32 %v3875, %v3958
        %3960 = vmatmul.f32.gmra.mxu0 %v3897
        %v3961 = vpop.f32.mrf.mxu0
        %v3962 = vadd.f32 %v3875, %v3961
        %3963 = vmatmul.f32.gmra.mxu0 %v3900
        %v3964 = vpop.f32.mrf.mxu0
        %v3965 = vadd.f32 %v3875, %v3964
        %3966 = vmatmul.f32.gmra.mxu0 %v3903
        %v3967 = vpop.f32.mrf.mxu0
        %v3968 = vadd.f32 %v3875, %v3967
        %3969 = vmatmul.f32.gmra.mxu0 %v3906
        %v3970 = vpop.f32.mrf.mxu0
        %v3971 = vadd.f32 %v3875, %v3970
        %3972 = vmatmul.f32.gmra.mxu0 %v3909
        %v3973 = vpop.f32.mrf.mxu0
        %v3974 = vadd.f32 %v3875, %v3973
        %3975 = vmatmul.f32.gmra.mxu0 %v3912
        %v3976 = vpop.f32.mrf.mxu0
        %v3977 = vadd.f32 %v3875, %v3976
        %3978 = vmatmul.f32.gmra.mxu0 %v3915
        %v3979 = vpop.f32.mrf.mxu0
        %v3980 = vadd.f32 %v3875, %v3979
        %3981 = vmatmul.f32.gmra.mxu0 %v3918
        %v3982 = vpop.f32.mrf.mxu0
        %v3983 = vadd.f32 %v3875, %v3982
        %3984 = vmatmul.f32.gmra.mxu0 %v3921
        %v3985 = vpop.f32.mrf.mxu0
        %v3986 = vadd.f32 %v3875, %v3985
        %3987 = vmatmul.f32.gmra.mxu0 %v3924
        %v3988 = vpop.f32.mrf.mxu0
        %v3989 = vadd.f32 %v3875, %v3988
        %3990 = vdwg.mxu0
        %v3991 = vmax.f32 %v3944, 0.0
        %v3992 = vmax.f32 %v3947, 0.0
        %v3993 = vmax.f32 %v3950, 0.0
        %v3994 = vmax.f32 %v3953, 0.0
        %v3995 = vmax.f32 %v3956, 0.0
        %v3996 = vmax.f32 %v3959, 0.0
        %v3997 = vmax.f32 %v3962, 0.0
        %v3998 = vmax.f32 %v3965, 0.0
        %v3999 = vmax.f32 %v3968, 0.0
        %v4000 = vmax.f32 %v3971, 0.0
        %v4001 = vmax.f32 %v3974, 0.0
        %v4002 = vmax.f32 %v3977, 0.0
        %v4003 = vmax.f32 %v3980, 0.0
        %v4004 = vmax.f32 %v3983, 0.0
        %v4005 = vmax.f32 %v3986, 0.0
        %v4006 = vmax.f32 %v3989, 0.0
        %vm4007 = vcmp.ne.f32.partialorder %v3944, %v3944
        %vm4008 = vcmp.ne.f32.partialorder %v3947, %v3947
        %vm4009 = vcmp.ne.f32.partialorder %v3950, %v3950
        %vm4010 = vcmp.ne.f32.partialorder %v3953, %v3953
        %vm4011 = vcmp.ne.f32.partialorder %v3956, %v3956
        %vm4012 = vcmp.ne.f32.partialorder %v3959, %v3959
        %vm4013 = vcmp.ne.f32.partialorder %v3962, %v3962
        %vm4014 = vcmp.ne.f32.partialorder %v3965, %v3965
        %vm4015 = vcmp.ne.f32.partialorder %v3968, %v3968
        %vm4016 = vcmp.ne.f32.partialorder %v3971, %v3971
        %vm4017 = vcmp.ne.f32.partialorder %v3974, %v3974
        %vm4018 = vcmp.ne.f32.partialorder %v3977, %v3977
        %vm4019 = vcmp.ne.f32.partialorder %v3980, %v3980
        %vm4020 = vcmp.ne.f32.partialorder %v3983, %v3983
        %vm4021 = vcmp.ne.f32.partialorder %v3986, %v3986
        %vm4022 = vcmp.ne.f32.partialorder %v3989, %v3989
        %v4023 = vadd.f32 %v3944, 0.0
        %v4024 = vadd.f32 %v3947, 0.0
        %v4025 = vadd.f32 %v3950, 0.0
        %v4026 = vadd.f32 %v3953, 0.0
        %v4027 = vadd.f32 %v3956, 0.0
        %v4028 = vadd.f32 %v3959, 0.0
        %v4029 = vadd.f32 %v3962, 0.0
        %v4030 = vadd.f32 %v3965, 0.0
        %v4031 = vadd.f32 %v3968, 0.0
        %v4032 = vadd.f32 %v3971, 0.0
        %v4033 = vadd.f32 %v3974, 0.0
        %v4034 = vadd.f32 %v3977, 0.0
        %v4035 = vadd.f32 %v3980, 0.0
        %v4036 = vadd.f32 %v3983, 0.0
        %v4037 = vadd.f32 %v3986, 0.0
        %v4038 = vadd.f32 %v3989, 0.0
        %v4039 = vand.u32 2147483647, %v3944
        %v4040 = vand.u32 2147483647, %v3947
        %v4041 = vand.u32 2147483647, %v3950
        %v4042 = vand.u32 2147483647, %v3953
        %v4043 = vand.u32 2147483647, %v3956
        %v4044 = vand.u32 2147483647, %v3959
        %v4045 = vand.u32 2147483647, %v3962
        %v4046 = vand.u32 2147483647, %v3965
        %v4047 = vand.u32 2147483647, %v3968
        %v4048 = vand.u32 2147483647, %v3971
        %v4049 = vand.u32 2147483647, %v3974
        %v4050 = vand.u32 2147483647, %v3977
        %v4051 = vand.u32 2147483647, %v3980
        %v4052 = vand.u32 2147483647, %v3983
        %v4053 = vand.u32 2147483647, %v3986
        %v4054 = vand.u32 2147483647, %v3989
        %v4055 = vsub.f32 0.0, %v4039
        %v4056 = vsub.f32 0.0, %v4040
        %v4057 = vsub.f32 0.0, %v4041
        %v4058 = vsub.f32 0.0, %v4042
        %v4059 = vsub.f32 0.0, %v4043
        %v4060 = vsub.f32 0.0, %v4044
        %v4061 = vsub.f32 0.0, %v4045
        %v4062 = vsub.f32 0.0, %v4046
        %v4063 = vsub.f32 0.0, %v4047
        %v4064 = vsub.f32 0.0, %v4048
        %v4065 = vsub.f32 0.0, %v4049
        %v4066 = vsub.f32 0.0, %v4050
        %v4067 = vsub.f32 0.0, %v4051
        %v4068 = vsub.f32 0.0, %v4052
        %v4069 = vsub.f32 0.0, %v4053
        %v4070 = vsub.f32 0.0, %v4054
        %v4071 = vmul.f32 %v4055, 1.442695
        %v4072 = vpow.pop %v4071
        %v4073 = vmul.f32 %v4056, 1.442695
        %v4074 = vpow.pop %v4073
        %v4075 = vmul.f32 %v4057, 1.442695
        %v4076 = vpow.pop %v4075
        %v4077 = vmul.f32 %v4058, 1.442695
        %v4078 = vpow.pop %v4077
        %v4079 = vmul.f32 %v4059, 1.442695
        %v4080 = vpow.pop %v4079
        %v4081 = vmul.f32 %v4060, 1.442695
        %v4082 = vpow.pop %v4081
        %v4083 = vmul.f32 %v4061, 1.442695
        %v4084 = vpow.pop %v4083
        %v4085 = vmul.f32 %v4062, 1.442695
        %v4086 = vpow.pop %v4085
        %v4087 = vmul.f32 %v4063, 1.442695
        %v4088 = vpow.pop %v4087
        %v4089 = vmul.f32 %v4064, 1.442695
        %v4090 = vpow.pop %v4089
        %v4091 = vmul.f32 %v4065, 1.442695
        %v4092 = vpow.pop %v4091
        %v4093 = vmul.f32 %v4066, 1.442695
        %v4094 = vpow.pop %v4093
        %v4095 = vmul.f32 %v4067, 1.442695
        %v4096 = vpow.pop %v4095
        %v4097 = vmul.f32 %v4068, 1.442695
        %v4098 = vpow.pop %v4097
        %v4099 = vmul.f32 %v4069, 1.442695
        %v4100 = vpow.pop %v4099
        %v4101 = vmul.f32 %v4070, 1.442695
        %v4102 = vpow.pop %v4101
        %v4103 = vadd.f32 %v4072, 1.0
        %v4104 = vlog2.pop %v4103
        %v4105 = vmul.f32 %v4104, 0.6931472
        %v4106 = vmul.f32 -0.5, %v4072
        %v4107 = vadd.f32 %v4106, 1.0
        %v4108 = vmul.f32 %v4107, %v4072
        %v4109 = vand.u32 2147483647, %v4072
        %vm4110 = vcmp.lt.f32.partialorder %v4109, 0.0004427343
        %v4111 = vsel %vm4110, %v4108, %v4105
        %v4112 = vadd.f32 %v4074, 1.0
        %v4113 = vlog2.pop %v4112
        %v4114 = vmul.f32 %v4113, 0.6931472
        %v4115 = vmul.f32 -0.5, %v4074
        %v4116 = vadd.f32 %v4115, 1.0
        %v4117 = vmul.f32 %v4116, %v4074
        %v4118 = vand.u32 2147483647, %v4074
        %vm4119 = vcmp.lt.f32.partialorder %v4118, 0.0004427343
        %v4120 = vsel %vm4119, %v4117, %v4114
        %v4121 = vadd.f32 %v4076, 1.0
        %v4122 = vlog2.pop %v4121
        %v4123 = vmul.f32 %v4122, 0.6931472
        %v4124 = vmul.f32 -0.5, %v4076
        %v4125 = vadd.f32 %v4124, 1.0
        %v4126 = vmul.f32 %v4125, %v4076
        %v4127 = vand.u32 2147483647, %v4076
        %vm4128 = vcmp.lt.f32.partialorder %v4127, 0.0004427343
        %v4129 = vsel %vm4128, %v4126, %v4123
        %v4130 = vadd.f32 %v4078, 1.0
        %v4131 = vlog2.pop %v4130
        %v4132 = vmul.f32 %v4131, 0.6931472
        %v4133 = vmul.f32 -0.5, %v4078
        %v4134 = vadd.f32 %v4133, 1.0
        %v4135 = vmul.f32 %v4134, %v4078
        %v4136 = vand.u32 2147483647, %v4078
        %vm4137 = vcmp.lt.f32.partialorder %v4136, 0.0004427343
        %v4138 = vsel %vm4137, %v4135, %v4132
        %v4139 = vadd.f32 %v4080, 1.0
        %v4140 = vlog2.pop %v4139
        %v4141 = vmul.f32 %v4140, 0.6931472
        %v4142 = vmul.f32 -0.5, %v4080
        %v4143 = vadd.f32 %v4142, 1.0
        %v4144 = vmul.f32 %v4143, %v4080
        %v4145 = vand.u32 2147483647, %v4080
        %vm4146 = vcmp.lt.f32.partialorder %v4145, 0.0004427343
        %v4147 = vsel %vm4146, %v4144, %v4141
        %v4148 = vadd.f32 %v4082, 1.0
        %v4149 = vlog2.pop %v4148
        %v4150 = vmul.f32 %v4149, 0.6931472
        %v4151 = vmul.f32 -0.5, %v4082
        %v4152 = vadd.f32 %v4151, 1.0
        %v4153 = vmul.f32 %v4152, %v4082
        %v4154 = vand.u32 2147483647, %v4082
        %vm4155 = vcmp.lt.f32.partialorder %v4154, 0.0004427343
        %v4156 = vsel %vm4155, %v4153, %v4150
        %v4157 = vadd.f32 %v4084, 1.0
        %v4158 = vlog2.pop %v4157
        %v4159 = vmul.f32 %v4158, 0.6931472
        %v4160 = vmul.f32 -0.5, %v4084
        %v4161 = vadd.f32 %v4160, 1.0
        %v4162 = vmul.f32 %v4161, %v4084
        %v4163 = vand.u32 2147483647, %v4084
        %vm4164 = vcmp.lt.f32.partialorder %v4163, 0.0004427343
        %v4165 = vsel %vm4164, %v4162, %v4159
        %v4166 = vadd.f32 %v4086, 1.0
        %v4167 = vlog2.pop %v4166
        %v4168 = vmul.f32 %v4167, 0.6931472
        %v4169 = vmul.f32 -0.5, %v4086
        %v4170 = vadd.f32 %v4169, 1.0
        %v4171 = vmul.f32 %v4170, %v4086
        %v4172 = vand.u32 2147483647, %v4086
        %vm4173 = vcmp.lt.f32.partialorder %v4172, 0.0004427343
        %v4174 = vsel %vm4173, %v4171, %v4168
        %v4175 = vadd.f32 %v4088, 1.0
        %v4176 = vlog2.pop %v4175
        %v4177 = vmul.f32 %v4176, 0.6931472
        %v4178 = vmul.f32 -0.5, %v4088
        %v4179 = vadd.f32 %v4178, 1.0
        %v4180 = vmul.f32 %v4179, %v4088
        %v4181 = vand.u32 2147483647, %v4088
        %vm4182 = vcmp.lt.f32.partialorder %v4181, 0.0004427343
        %v4183 = vsel %vm4182, %v4180, %v4177
        %v4184 = vadd.f32 %v4090, 1.0
        %v4185 = vlog2.pop %v4184
        %v4186 = vmul.f32 %v4185, 0.6931472
        %v4187 = vmul.f32 -0.5, %v4090
        %v4188 = vadd.f32 %v4187, 1.0
        %v4189 = vmul.f32 %v4188, %v4090
        %v4190 = vand.u32 2147483647, %v4090
        %vm4191 = vcmp.lt.f32.partialorder %v4190, 0.0004427343
        %v4192 = vsel %vm4191, %v4189, %v4186
        %v4193 = vadd.f32 %v4092, 1.0
        %v4194 = vlog2.pop %v4193
        %v4195 = vmul.f32 %v4194, 0.6931472
        %v4196 = vmul.f32 -0.5, %v4092
        %v4197 = vadd.f32 %v4196, 1.0
        %v4198 = vmul.f32 %v4197, %v4092
        %v4199 = vand.u32 2147483647, %v4092
        %vm4200 = vcmp.lt.f32.partialorder %v4199, 0.0004427343
        %v4201 = vsel %vm4200, %v4198, %v4195
        %v4202 = vadd.f32 %v4094, 1.0
        %v4203 = vlog2.pop %v4202
        %v4204 = vmul.f32 %v4203, 0.6931472
        %v4205 = vmul.f32 -0.5, %v4094
        %v4206 = vadd.f32 %v4205, 1.0
        %v4207 = vmul.f32 %v4206, %v4094
        %v4208 = vand.u32 2147483647, %v4094
        %vm4209 = vcmp.lt.f32.partialorder %v4208, 0.0004427343
        %v4210 = vsel %vm4209, %v4207, %v4204
        %v4211 = vadd.f32 %v4096, 1.0
        %v4212 = vlog2.pop %v4211
        %v4213 = vmul.f32 %v4212, 0.6931472
        %v4214 = vmul.f32 -0.5, %v4096
        %v4215 = vadd.f32 %v4214, 1.0
        %v4216 = vmul.f32 %v4215, %v4096
        %v4217 = vand.u32 2147483647, %v4096
        %vm4218 = vcmp.lt.f32.partialorder %v4217, 0.0004427343
        %v4219 = vsel %vm4218, %v4216, %v4213
        %v4220 = vadd.f32 %v4098, 1.0
        %v4221 = vlog2.pop %v4220
        %v4222 = vmul.f32 %v4221, 0.6931472
        %v4223 = vmul.f32 -0.5, %v4098
        %v4224 = vadd.f32 %v4223, 1.0
        %v4225 = vmul.f32 %v4224, %v4098
        %v4226 = vand.u32 2147483647, %v4098
        %vm4227 = vcmp.lt.f32.partialorder %v4226, 0.0004427343
        %v4228 = vsel %vm4227, %v4225, %v4222
        %v4229 = vadd.f32 %v4100, 1.0
        %v4230 = vlog2.pop %v4229
        %v4231 = vmul.f32 %v4230, 0.6931472
        %v4232 = vmul.f32 -0.5, %v4100
        %v4233 = vadd.f32 %v4232, 1.0
        %v4234 = vmul.f32 %v4233, %v4100
        %v4235 = vand.u32 2147483647, %v4100
        %vm4236 = vcmp.lt.f32.partialorder %v4235, 0.0004427343
        %v4237 = vsel %vm4236, %v4234, %v4231
        %v4238 = vadd.f32 %v4102, 1.0
        %v4239 = vlog2.pop %v4238
        %v4240 = vmul.f32 %v4239, 0.6931472
        %v4241 = vmul.f32 -0.5, %v4102
        %v4242 = vadd.f32 %v4241, 1.0
        %v4243 = vmul.f32 %v4242, %v4102
        %v4244 = vand.u32 2147483647, %v4102
        %vm4245 = vcmp.lt.f32.partialorder %v4244, 0.0004427343
        %v4246 = vsel %vm4245, %v4243, %v4240
        %v4247 = vadd.f32 %v3991, %v4111
        %v4248 = vadd.f32 %v3992, %v4120
        %v4249 = vadd.f32 %v3993, %v4129
        %v4250 = vadd.f32 %v3994, %v4138
        %v4251 = vadd.f32 %v3995, %v4147
        %v4252 = vadd.f32 %v3996, %v4156
        %v4253 = vadd.f32 %v3997, %v4165
        %v4254 = vadd.f32 %v3998, %v4174
        %v4255 = vadd.f32 %v3999, %v4183
        %v4256 = vadd.f32 %v4000, %v4192
        %v4257 = vadd.f32 %v4001, %v4201
        %v4258 = vadd.f32 %v4002, %v4210
        %v4259 = vadd.f32 %v4003, %v4219
        %v4260 = vadd.f32 %v4004, %v4228
        %v4261 = vadd.f32 %v4005, %v4237
        %v4262 = vadd.f32 %v4006, %v4246
        %v4263 = vsel %vm4007, %v4023, %v4247
        %v4264 = vsel %vm4008, %v4024, %v4248
        %v4265 = vsel %vm4009, %v4025, %v4249
        %v4266 = vsel %vm4010, %v4026, %v4250
        %v4267 = vsel %vm4011, %v4027, %v4251
        %v4268 = vsel %vm4012, %v4028, %v4252
        %v4269 = vsel %vm4013, %v4029, %v4253
        %v4270 = vsel %vm4014, %v4030, %v4254
        %v4271 = vsel %vm4015, %v4031, %v4255
        %v4272 = vsel %vm4016, %v4032, %v4256
        %v4273 = vsel %vm4017, %v4033, %v4257
        %v4274 = vsel %vm4018, %v4034, %v4258
        %v4275 = vsel %vm4019, %v4035, %v4259
        %v4276 = vsel %vm4020, %v4036, %v4260
        %v4277 = vsel %vm4021, %v4037, %v4261
        %v4278 = vsel %vm4022, %v4038, %v4262
        %v4279 = vsub.f32 %v4263, 0.6931472
        %v4280 = vsub.f32 %v4264, 0.6931472
        %v4281 = vsub.f32 %v4265, 0.6931472
        %v4282 = vsub.f32 %v4266, 0.6931472
        %v4283 = vsub.f32 %v4267, 0.6931472
        %v4284 = vsub.f32 %v4268, 0.6931472
        %v4285 = vsub.f32 %v4269, 0.6931472
        %v4286 = vsub.f32 %v4270, 0.6931472
        %v4287 = vsub.f32 %v4271, 0.6931472
        %v4288 = vsub.f32 %v4272, 0.6931472
        %v4289 = vsub.f32 %v4273, 0.6931472
        %v4290 = vsub.f32 %v4274, 0.6931472
        %v4291 = vsub.f32 %v4275, 0.6931472
        %v4292 = vsub.f32 %v4276, 0.6931472
        %v4293 = vsub.f32 %v4277, 0.6931472
        %v4294 = vsub.f32 %v4278, 0.6931472
        %v4295 = vld [vmem:[%s887] sm:$0xff]
        %v4296 = vld [vmem:[%s887 + $0x8] sm:$0xff]
        %v4297 = vld [vmem:[%s887 + $0x10] sm:$0xff]
        %v4298 = vld [vmem:[%s887 + $0x18] sm:$0xff]
        %v4299 = vld [vmem:[%s887 + $0x20] sm:$0xff]
        %v4300 = vld [vmem:[%s887 + $0x28] sm:$0xff]
        %v4301 = vld [vmem:[%s887 + $0x30] sm:$0xff]
        %v4302 = vld [vmem:[%s887 + $0x38] sm:$0xff]
        %v4303 = vld [vmem:[%s887 + $0x40] sm:$0xff]
        %v4304 = vld [vmem:[%s887 + $0x48] sm:$0xff]
        %v4305 = vld [vmem:[%s887 + $0x50] sm:$0xff]
        %v4306 = vld [vmem:[%s887 + $0x58] sm:$0xff]
        %v4307 = vld [vmem:[%s887 + $0x60] sm:$0xff]
        %v4308 = vld [vmem:[%s887 + $0x68] sm:$0xff]
        %v4309 = vld [vmem:[%s887 + $0x70] sm:$0xff]
        %v4310 = vld [vmem:[%s887 + $0x78] sm:$0xff]
        %v4311 = vld [vmem:[%s890] sm:$0x1]
        %v4313 = vperm.slane %v4311, 0
        %4315 = vmatpush.msra.mxu0 %v4310
        %4316 = vmatpush.msra.mxu0 %v4309
        %4317 = vmatpush.msra.mxu0 %v4308
        %4318 = vmatpush.msra.mxu0 %v4307
        %4319 = vmatpush.msra.mxu0 %v4306
        %4320 = vmatpush.msra.mxu0 %v4305
        %4321 = vmatpush.msra.mxu0 %v4304
        %4322 = vmatpush.msra.mxu0 %v4303
        %4323 = vmatpush.msra.mxu0 %v4302
        %4324 = vmatpush.msra.mxu0 %v4301
        %4325 = vmatpush.msra.mxu0 %v4300
        %4326 = vmatpush.msra.mxu0 %v4299
        %4327 = vmatpush.msra.mxu0 %v4298
        %4328 = vmatpush.msra.mxu0 %v4297
        %4329 = vmatpush.msra.mxu0 %v4296
        %4330 = vmatpush.msra.mxu0 %v4295
        %4331 = vmatmul.f32.gmra.mxu0 %v4279
        %v4332 = vpop.f32.mrf.mxu0
        %v4333 = vadd.f32 %v4313, %v4332
        %4334 = vmatmul.f32.gmra.mxu0 %v4280
        %v4335 = vpop.f32.mrf.mxu0
        %v4336 = vadd.f32 %v4313, %v4335
        %4337 = vmatmul.f32.gmra.mxu0 %v4281
        %v4338 = vpop.f32.mrf.mxu0
        %v4339 = vadd.f32 %v4313, %v4338
        %4340 = vmatmul.f32.gmra.mxu0 %v4282
        %v4341 = vpop.f32.mrf.mxu0
        %v4342 = vadd.f32 %v4313, %v4341
        %4343 = vmatmul.f32.gmra.mxu0 %v4283
        %v4344 = vpop.f32.mrf.mxu0
        %v4345 = vadd.f32 %v4313, %v4344
        %4346 = vmatmul.f32.gmra.mxu0 %v4284
        %v4347 = vpop.f32.mrf.mxu0
        %v4348 = vadd.f32 %v4313, %v4347
        %4349 = vmatmul.f32.gmra.mxu0 %v4285
        %v4350 = vpop.f32.mrf.mxu0
        %v4351 = vadd.f32 %v4313, %v4350
        %4352 = vmatmul.f32.gmra.mxu0 %v4286
        %v4353 = vpop.f32.mrf.mxu0
        %v4354 = vadd.f32 %v4313, %v4353
        %4355 = vmatmul.f32.gmra.mxu0 %v4287
        %v4356 = vpop.f32.mrf.mxu0
        %v4357 = vadd.f32 %v4313, %v4356
        %4358 = vmatmul.f32.gmra.mxu0 %v4288
        %v4359 = vpop.f32.mrf.mxu0
        %v4360 = vadd.f32 %v4313, %v4359
        %4361 = vmatmul.f32.gmra.mxu0 %v4289
        %v4362 = vpop.f32.mrf.mxu0
        %v4363 = vadd.f32 %v4313, %v4362
        %4364 = vmatmul.f32.gmra.mxu0 %v4290
        %v4365 = vpop.f32.mrf.mxu0
        %v4366 = vadd.f32 %v4313, %v4365
        %4367 = vmatmul.f32.gmra.mxu0 %v4291
        %v4368 = vpop.f32.mrf.mxu0
        %v4369 = vadd.f32 %v4313, %v4368
        %4370 = vmatmul.f32.gmra.mxu0 %v4292
        %v4371 = vpop.f32.mrf.mxu0
        %v4372 = vadd.f32 %v4313, %v4371
        %4373 = vmatmul.f32.gmra.mxu0 %v4293
        %v4374 = vpop.f32.mrf.mxu0
        %v4375 = vadd.f32 %v4313, %v4374
        %4376 = vmatmul.f32.gmra.mxu0 %v4294
        %v4377 = vpop.f32.mrf.mxu0
        %v4378 = vadd.f32 %v4313, %v4377
        %4379 = vdwg.mxu0
        %4381 = vset.pattern.permute.xlu0 0
        %4382 = vperm.xlu0 %4381, %v3855
        %v4383 = vpop.permute.xlu0 %4382
        %4386 = vset.pattern.permute.xlu0 0
        %4387 = vperm.xlu0 %4386, %v3856
        %v4388 = vpop.permute.xlu0 %4387
        %4391 = vset.pattern.permute.xlu0 0
        %4392 = vperm.xlu0 %4391, %v3857
        %v4393 = vpop.permute.xlu0 %4392
        %4396 = vset.pattern.permute.xlu0 0
        %4397 = vperm.xlu0 %4396, %v3858
        %v4398 = vpop.permute.xlu0 %4397
        %4401 = vset.pattern.permute.xlu0 0
        %4402 = vperm.xlu0 %4401, %v3859
        %v4403 = vpop.permute.xlu0 %4402
        %4406 = vset.pattern.permute.xlu0 0
        %4407 = vperm.xlu0 %4406, %v3860
        %v4408 = vpop.permute.xlu0 %4407
        %4411 = vset.pattern.permute.xlu0 0
        %4412 = vperm.xlu0 %4411, %v3861
        %v4413 = vpop.permute.xlu0 %4412
        %4416 = vset.pattern.permute.xlu0 0
        %4417 = vperm.xlu0 %4416, %v3862
        %v4418 = vpop.permute.xlu0 %4417
        %4421 = vset.pattern.permute.xlu0 0
        %4422 = vperm.xlu0 %4421, %v3863
        %v4423 = vpop.permute.xlu0 %4422
        %4426 = vset.pattern.permute.xlu0 0
        %4427 = vperm.xlu0 %4426, %v3864
        %v4428 = vpop.permute.xlu0 %4427
        %4431 = vset.pattern.permute.xlu0 0
        %4432 = vperm.xlu0 %4431, %v3865
        %v4433 = vpop.permute.xlu0 %4432
        %4436 = vset.pattern.permute.xlu0 0
        %4437 = vperm.xlu0 %4436, %v3866
        %v4438 = vpop.permute.xlu0 %4437
        %4441 = vset.pattern.permute.xlu0 0
        %4442 = vperm.xlu0 %4441, %v3867
        %v4443 = vpop.permute.xlu0 %4442
        %4446 = vset.pattern.permute.xlu0 0
        %4447 = vperm.xlu0 %4446, %v3868
        %v4448 = vpop.permute.xlu0 %4447
        %4451 = vset.pattern.permute.xlu0 0
        %4452 = vperm.xlu0 %4451, %v3869
        %v4453 = vpop.permute.xlu0 %4452
        %4456 = vset.pattern.permute.xlu0 0
        %4457 = vperm.xlu0 %4456, %v3870
        %v4458 = vpop.permute.xlu0 %4457
        %v4460 = vmul.f32 %v4333, %v4383
        %v4461 = vmul.f32 %v4336, %v4388
        %v4462 = vmul.f32 %v4339, %v4393
        %v4463 = vmul.f32 %v4342, %v4398
        %v4464 = vmul.f32 %v4345, %v4403
        %v4465 = vmul.f32 %v4348, %v4408
        %v4466 = vmul.f32 %v4351, %v4413
        %v4467 = vmul.f32 %v4354, %v4418
        %v4468 = vmul.f32 %v4357, %v4423
        %v4469 = vmul.f32 %v4360, %v4428
        %v4470 = vmul.f32 %v4363, %v4433
        %v4471 = vmul.f32 %v4366, %v4438
        %v4472 = vmul.f32 %v4369, %v4443
        %v4473 = vmul.f32 %v4372, %v4448
        %v4474 = vmul.f32 %v4375, %v4453
        %v4475 = vmul.f32 %v4378, %v4458
        %v4476 = vld [vmem:[%s876] sm:$0xff]
        %v4477 = vld [vmem:[%s876 + $0x8] sm:$0xff]
        %v4478 = vld [vmem:[%s876 + $0x10] sm:$0xff]
        %v4479 = vld [vmem:[%s876 + $0x18] sm:$0xff]
        %v4480 = vld [vmem:[%s876 + $0x20] sm:$0xff]
        %v4481 = vld [vmem:[%s876 + $0x28] sm:$0xff]
        %v4482 = vld [vmem:[%s876 + $0x30] sm:$0xff]
        %v4483 = vld [vmem:[%s876 + $0x38] sm:$0xff]
        %v4484 = vld [vmem:[%s876 + $0x40] sm:$0xff]
        %v4485 = vld [vmem:[%s876 + $0x48] sm:$0xff]
        %v4486 = vld [vmem:[%s876 + $0x50] sm:$0xff]
        %v4487 = vld [vmem:[%s876 + $0x58] sm:$0xff]
        %v4488 = vld [vmem:[%s876 + $0x60] sm:$0xff]
        %v4489 = vld [vmem:[%s876 + $0x68] sm:$0xff]
        %v4490 = vld [vmem:[%s876 + $0x70] sm:$0xff]
        %v4491 = vld [vmem:[%s876 + $0x78] sm:$0xff]
        %v4492 = vlaneseq
        %v4493 = vand.u32 %v4492, 127
        %4494 = vset.pattern.permute.xlu0 0
        %4495 = vperm.xlu0 %4494, %v4476
        %v4496 = vpop.permute.xlu0 %4495
        %4497 = vset.pattern.permute.xlu0 0
        %4498 = vperm.xlu0 %4497, %v4477
        %v4499 = vpop.permute.xlu0 %4498
        %4500 = vset.pattern.permute.xlu0 0
        %4501 = vperm.xlu0 %4500, %v4478
        %v4502 = vpop.permute.xlu0 %4501
        %4503 = vset.pattern.permute.xlu0 0
        %4504 = vperm.xlu0 %4503, %v4479
        %v4505 = vpop.permute.xlu0 %4504
        %4506 = vset.pattern.permute.xlu0 0
        %4507 = vperm.xlu0 %4506, %v4480
        %v4508 = vpop.permute.xlu0 %4507
        %4509 = vset.pattern.permute.xlu0 0
        %4510 = vperm.xlu0 %4509, %v4481
        %v4511 = vpop.permute.xlu0 %4510
        %4512 = vset.pattern.permute.xlu0 0
        %4513 = vperm.xlu0 %4512, %v4482
        %v4514 = vpop.permute.xlu0 %4513
        %4515 = vset.pattern.permute.xlu0 0
        %4516 = vperm.xlu0 %4515, %v4483
        %v4517 = vpop.permute.xlu0 %4516
        %4518 = vset.pattern.permute.xlu0 0
        %4519 = vperm.xlu0 %4518, %v4484
        %v4520 = vpop.permute.xlu0 %4519
        %4521 = vset.pattern.permute.xlu0 0
        %4522 = vperm.xlu0 %4521, %v4485
        %v4523 = vpop.permute.xlu0 %4522
        %4524 = vset.pattern.permute.xlu0 0
        %4525 = vperm.xlu0 %4524, %v4486
        %v4526 = vpop.permute.xlu0 %4525
        %4527 = vset.pattern.permute.xlu0 0
        %4528 = vperm.xlu0 %4527, %v4487
        %v4529 = vpop.permute.xlu0 %4528
        %4530 = vset.pattern.permute.xlu0 0
        %4531 = vperm.xlu0 %4530, %v4488
        %v4532 = vpop.permute.xlu0 %4531
        %4533 = vset.pattern.permute.xlu0 0
        %4534 = vperm.xlu0 %4533, %v4489
        %v4535 = vpop.permute.xlu0 %4534
        %4536 = vset.pattern.permute.xlu0 0
        %4537 = vperm.xlu0 %4536, %v4490
        %v4538 = vpop.permute.xlu0 %4537
        %4539 = vset.pattern.permute.xlu0 0
        %4540 = vperm.xlu0 %4539, %v4491
        %v4541 = vpop.permute.xlu0 %4540
        %vm4542 = vcmp.eq.s32.totalorder %v4493, %v4496
        %vm4543 = vcmp.eq.s32.totalorder %v4493, %v4499
        %vm4544 = vcmp.eq.s32.totalorder %v4493, %v4502
        %vm4545 = vcmp.eq.s32.totalorder %v4493, %v4505
        %vm4546 = vcmp.eq.s32.totalorder %v4493, %v4508
        %vm4547 = vcmp.eq.s32.totalorder %v4493, %v4511
        %vm4548 = vcmp.eq.s32.totalorder %v4493, %v4514
        %vm4549 = vcmp.eq.s32.totalorder %v4493, %v4517
        %vm4550 = vcmp.eq.s32.totalorder %v4493, %v4520
        %vm4551 = vcmp.eq.s32.totalorder %v4493, %v4523
        %vm4552 = vcmp.eq.s32.totalorder %v4493, %v4526
        %vm4553 = vcmp.eq.s32.totalorder %v4493, %v4529
        %vm4554 = vcmp.eq.s32.totalorder %v4493, %v4532
        %vm4555 = vcmp.eq.s32.totalorder %v4493, %v4535
        %vm4556 = vcmp.eq.s32.totalorder %v4493, %v4538
        %vm4557 = vcmp.eq.s32.totalorder %v4493, %v4541
        %v4558 = vsel %vm4542, 1, 0
        %v4559 = vsel %vm4543, 1, 0
        %v4560 = vsel %vm4544, 1, 0
        %v4561 = vsel %vm4545, 1, 0
        %v4562 = vsel %vm4546, 1, 0
        %v4563 = vsel %vm4547, 1, 0
        %v4564 = vsel %vm4548, 1, 0
        %v4565 = vsel %vm4549, 1, 0
        %v4566 = vsel %vm4550, 1, 0
        %v4567 = vsel %vm4551, 1, 0
        %v4568 = vsel %vm4552, 1, 0
        %v4569 = vsel %vm4553, 1, 0
        %v4570 = vsel %vm4554, 1, 0
        %v4571 = vsel %vm4555, 1, 0
        %v4572 = vsel %vm4556, 1, 0
        %v4573 = vsel %vm4557, 1, 0
        %v4574 = vcvt.s32.f32 %v4558
        %v4575 = vcvt.s32.f32 %v4559
        %v4576 = vcvt.s32.f32 %v4560
        %v4577 = vcvt.s32.f32 %v4561
        %v4578 = vcvt.s32.f32 %v4562
        %v4579 = vcvt.s32.f32 %v4563
        %v4580 = vcvt.s32.f32 %v4564
        %v4581 = vcvt.s32.f32 %v4565
        %v4582 = vcvt.s32.f32 %v4566
        %v4583 = vcvt.s32.f32 %v4567
        %v4584 = vcvt.s32.f32 %v4568
        %v4585 = vcvt.s32.f32 %v4569
        %v4586 = vcvt.s32.f32 %v4570
        %v4587 = vcvt.s32.f32 %v4571
        %v4588 = vcvt.s32.f32 %v4572
        %v4589 = vcvt.s32.f32 %v4573
        %v4590 = vpack.c.bf16 %v4575, %v4574
        %v4591 = vpack.c.bf16 %v4577, %v4576
        %v4592 = vpack.c.bf16 %v4579, %v4578
        %v4593 = vpack.c.bf16 %v4581, %v4580
        %v4594 = vpack.c.bf16 %v4583, %v4582
        %v4595 = vpack.c.bf16 %v4585, %v4584
        %v4596 = vpack.c.bf16 %v4587, %v4586
        %v4597 = vpack.c.bf16 %v4589, %v4588
        %v4598 = vld [vmem:[#allocation2] sm:$0xf]
        %v4599 = vld [vmem:[#allocation2 + $0x4] sm:$0xf]
        %v4600 = vld [vmem:[#allocation2 + $0x8] sm:$0xf]
        %v4601 = vld [vmem:[#allocation2 + $0xc] sm:$0xf]
        %v4602 = vld [vmem:[#allocation2 + $0x10] sm:$0xf]
        %v4603 = vld [vmem:[#allocation2 + $0x14] sm:$0xf]
        %v4604 = vld [vmem:[#allocation2 + $0x18] sm:$0xf]
        %v4605 = vld [vmem:[#allocation2 + $0x1c] sm:$0xf]
        %v4606 = vld [vmem:[#allocation2 + $0x20] sm:$0xf]
        %v4607 = vld [vmem:[#allocation2 + $0x24] sm:$0xf]
        %v4608 = vld [vmem:[#allocation2 + $0x28] sm:$0xf]
        %v4609 = vld [vmem:[#allocation2 + $0x2c] sm:$0xf]
        %v4610 = vld [vmem:[#allocation2 + $0x30] sm:$0xf]
        %v4611 = vld [vmem:[#allocation2 + $0x34] sm:$0xf]
        %v4612 = vld [vmem:[#allocation2 + $0x38] sm:$0xf]
        %v4613 = vld [vmem:[#allocation2 + $0x3c] sm:$0xf]
        %v4630 = vunpack.c.l.b16 %v4598
        %v4631 = vunpack.c.l.b16 %v4599
        %v4632 = vunpack.c.l.b16 %v4600
        %v4633 = vunpack.c.l.b16 %v4601
        %v4634 = vunpack.c.l.b16 %v4602
        %v4635 = vunpack.c.l.b16 %v4603
        %v4636 = vunpack.c.l.b16 %v4604
        %v4637 = vunpack.c.l.b16 %v4605
        %v4638 = vunpack.c.l.b16 %v4606
        %v4639 = vunpack.c.l.b16 %v4607
        %v4640 = vunpack.c.l.b16 %v4608
        %v4641 = vunpack.c.l.b16 %v4609
        %v4642 = vunpack.c.l.b16 %v4610
        %v4643 = vunpack.c.l.b16 %v4611
        %v4644 = vunpack.c.l.b16 %v4612
        %v4645 = vunpack.c.l.b16 %v4613
        %v4646 = vpack.c.b16 %v4631, %v4630
        %v4647 = vpack.c.b16 %v4633, %v4632
        %v4648 = vpack.c.b16 %v4635, %v4634
        %v4649 = vpack.c.b16 %v4637, %v4636
        %v4650 = vpack.c.b16 %v4639, %v4638
        %v4651 = vpack.c.b16 %v4641, %v4640
        %v4652 = vpack.c.b16 %v4643, %v4642
        %v4653 = vpack.c.b16 %v4645, %v4644
        %4662 = vmatpush.bf16.msra.mxu0 %v4653
        %4663 = vmatpush.bf16.msra.mxu0 %v4652
        %4664 = vmatpush.bf16.msra.mxu0 %v4651
        %4665 = vmatpush.bf16.msra.mxu0 %v4650
        %4666 = vmatpush.bf16.msra.mxu0 %v4649
        %4667 = vmatpush.bf16.msra.mxu0 %v4648
        %4668 = vmatpush.bf16.msra.mxu0 %v4647
        %4669 = vmatpush.bf16.msra.mxu0 %v4646
        %4670 = vmatmul.bf16.gmra.mxu0 %v4590
        %v4671 = vpop.f32.mrf.mxu0
        %v4672 = vadd.f32 0.0, %v4671
        %v4673 = vpop.f32.mrf.mxu0
        %v4674 = vadd.f32 0.0, %v4673
        %4675 = vmatmul.bf16.gmra.mxu0 %v4591
        %v4676 = vpop.f32.mrf.mxu0
        %v4677 = vadd.f32 0.0, %v4676
        %v4678 = vpop.f32.mrf.mxu0
        %v4679 = vadd.f32 0.0, %v4678
        %4680 = vmatmul.bf16.gmra.mxu0 %v4592
        %v4681 = vpop.f32.mrf.mxu0
        %v4682 = vadd.f32 0.0, %v4681
        %v4683 = vpop.f32.mrf.mxu0
        %v4684 = vadd.f32 0.0, %v4683
        %4685 = vmatmul.bf16.gmra.mxu0 %v4593
        %v4686 = vpop.f32.mrf.mxu0
        %v4687 = vadd.f32 0.0, %v4686
        %v4688 = vpop.f32.mrf.mxu0
        %v4689 = vadd.f32 0.0, %v4688
        %4690 = vmatmul.bf16.gmra.mxu0 %v4594
        %v4691 = vpop.f32.mrf.mxu0
        %v4692 = vadd.f32 0.0, %v4691
        %v4693 = vpop.f32.mrf.mxu0
        %v4694 = vadd.f32 0.0, %v4693
        %4695 = vmatmul.bf16.gmra.mxu0 %v4595
        %v4696 = vpop.f32.mrf.mxu0
        %v4697 = vadd.f32 0.0, %v4696
        %v4698 = vpop.f32.mrf.mxu0
        %v4699 = vadd.f32 0.0, %v4698
        %4700 = vmatmul.bf16.gmra.mxu0 %v4596
        %v4701 = vpop.f32.mrf.mxu0
        %v4702 = vadd.f32 0.0, %v4701
        %v4703 = vpop.f32.mrf.mxu0
        %v4704 = vadd.f32 0.0, %v4703
        %4705 = vmatmul.bf16.gmra.mxu0 %v4597
        %v4706 = vpop.f32.mrf.mxu0
        %v4707 = vadd.f32 0.0, %v4706
        %v4708 = vpop.f32.mrf.mxu0
        %v4709 = vadd.f32 0.0, %v4708
        %4710 = vdwg.mxu0
        %v4711 = vmul.f32 %v4672, %v4460
        %v4712 = vmul.f32 %v4674, %v4461
        %v4713 = vmul.f32 %v4677, %v4462
        %v4714 = vmul.f32 %v4679, %v4463
        %v4715 = vmul.f32 %v4682, %v4464
        %v4716 = vmul.f32 %v4684, %v4465
        %v4717 = vmul.f32 %v4687, %v4466
        %v4718 = vmul.f32 %v4689, %v4467
        %v4719 = vmul.f32 %v4692, %v4468
        %v4720 = vmul.f32 %v4694, %v4469
        %v4721 = vmul.f32 %v4697, %v4470
        %v4722 = vmul.f32 %v4699, %v4471
        %v4723 = vmul.f32 %v4702, %v4472
        %v4724 = vmul.f32 %v4704, %v4473
        %v4725 = vmul.f32 %v4707, %v4474
        %v4726 = vmul.f32 %v4709, %v4475
        %v4727 = vlaneseq
        %v4728 = vshrl.u32 %v4727, 7
        %v4729 = vadd.s32 %v4728, 8
        %v4730 = vadd.s32 %v4728, 16
        %v4731 = vadd.s32 %v4728, 24
        %v4732 = vadd.s32 %v4728, 32
        %v4733 = vadd.s32 %v4728, 40
        %v4734 = vadd.s32 %v4728, 48
        %v4735 = vadd.s32 %v4728, 56
        %v4736 = vadd.s32 %v4728, 64
        %v4737 = vadd.s32 %v4728, 72
        %v4738 = vadd.s32 %v4728, 80
        %v4739 = vadd.s32 %v4728, 88
        %v4740 = vadd.s32 %v4728, 96
        %v4741 = vadd.s32 %v4728, 104
        %v4742 = vadd.s32 %v4728, 112
        %v4743 = vadd.s32 %v4728, 120
        %v4744 = vld [vmem:[%s867] sm:$0x1]
        %v4745 = vperm.slane %v4744, 0
        %vm4746 = vcmp.eq.s32.totalorder %v4728, %v4745
        %vm4747 = vcmp.eq.s32.totalorder %v4729, %v4745
        %vm4748 = vcmp.eq.s32.totalorder %v4730, %v4745
        %vm4749 = vcmp.eq.s32.totalorder %v4731, %v4745
        %vm4750 = vcmp.eq.s32.totalorder %v4732, %v4745
        %vm4751 = vcmp.eq.s32.totalorder %v4733, %v4745
        %vm4752 = vcmp.eq.s32.totalorder %v4734, %v4745
        %vm4753 = vcmp.eq.s32.totalorder %v4735, %v4745
        %vm4754 = vcmp.eq.s32.totalorder %v4736, %v4745
        %vm4755 = vcmp.eq.s32.totalorder %v4737, %v4745
        %vm4756 = vcmp.eq.s32.totalorder %v4738, %v4745
        %vm4757 = vcmp.eq.s32.totalorder %v4739, %v4745
        %vm4758 = vcmp.eq.s32.totalorder %v4740, %v4745
        %vm4759 = vcmp.eq.s32.totalorder %v4741, %v4745
        %vm4760 = vcmp.eq.s32.totalorder %v4742, %v4745
        %vm4761 = vcmp.eq.s32.totalorder %v4743, %v4745
        %v4762 = vsel %vm4746, 1, 0
        %v4763 = vsel %vm4747, 1, 0
        %v4764 = vsel %vm4748, 1, 0
        %v4765 = vsel %vm4749, 1, 0
        %v4766 = vsel %vm4750, 1, 0
        %v4767 = vsel %vm4751, 1, 0
        %v4768 = vsel %vm4752, 1, 0
        %v4769 = vsel %vm4753, 1, 0
        %v4770 = vsel %vm4754, 1, 0
        %v4771 = vsel %vm4755, 1, 0
        %v4772 = vsel %vm4756, 1, 0
        %v4773 = vsel %vm4757, 1, 0
        %v4774 = vsel %vm4758, 1, 0
        %v4775 = vsel %vm4759, 1, 0
        %v4776 = vsel %vm4760, 1, 0
        %v4777 = vsel %vm4761, 1, 0
        %v4778 = vcvt.s32.f32 %v4762
        %v4779 = vcvt.s32.f32 %v4763
        %v4780 = vcvt.s32.f32 %v4764
        %v4781 = vcvt.s32.f32 %v4765
        %v4782 = vcvt.s32.f32 %v4766
        %v4783 = vcvt.s32.f32 %v4767
        %v4784 = vcvt.s32.f32 %v4768
        %v4785 = vcvt.s32.f32 %v4769
        %v4786 = vcvt.s32.f32 %v4770
        %v4787 = vcvt.s32.f32 %v4771
        %v4788 = vcvt.s32.f32 %v4772
        %v4789 = vcvt.s32.f32 %v4773
        %v4790 = vcvt.s32.f32 %v4774
        %v4791 = vcvt.s32.f32 %v4775
        %v4792 = vcvt.s32.f32 %v4776
        %v4793 = vcvt.s32.f32 %v4777
        %v4794 = vpack.c.bf16 %v4779, %v4778
        %v4795 = vpack.c.bf16 %v4781, %v4780
        %v4796 = vpack.c.bf16 %v4783, %v4782
        %v4797 = vpack.c.bf16 %v4785, %v4784
        %v4798 = vpack.c.bf16 %v4787, %v4786
        %v4799 = vpack.c.bf16 %v4789, %v4788
        %v4800 = vpack.c.bf16 %v4791, %v4790
        %v4801 = vpack.c.bf16 %v4793, %v4792
        %v4802 = vld [vmem:[#allocation3] sm:$0xff]
        %v4803 = vld [vmem:[#allocation3 + $0x8] sm:$0xff]
        %v4804 = vld [vmem:[#allocation3 + $0x10] sm:$0xff]
        %v4805 = vld [vmem:[#allocation3 + $0x18] sm:$0xff]
        %v4806 = vld [vmem:[#allocation3 + $0x20] sm:$0xff]
        %v4807 = vld [vmem:[#allocation3 + $0x28] sm:$0xff]
        %v4808 = vld [vmem:[#allocation3 + $0x30] sm:$0xff]
        %v4809 = vld [vmem:[#allocation3 + $0x38] sm:$0xff]
        %v4810 = vld [vmem:[#allocation3 + $0x40] sm:$0xff]
        %v4811 = vld [vmem:[#allocation3 + $0x48] sm:$0xff]
        %v4812 = vld [vmem:[#allocation3 + $0x50] sm:$0xff]
        %v4813 = vld [vmem:[#allocation3 + $0x58] sm:$0xff]
        %v4814 = vld [vmem:[#allocation3 + $0x60] sm:$0xff]
        %v4815 = vld [vmem:[#allocation3 + $0x68] sm:$0xff]
        %v4816 = vld [vmem:[#allocation3 + $0x70] sm:$0xff]
        %v4817 = vld [vmem:[#allocation3 + $0x78] sm:$0xff]
        %v4818 = vpack.c.bf16 %v4712, %v4711
        %v4819 = vpack.c.bf16 %v4714, %v4713
        %v4820 = vpack.c.bf16 %v4716, %v4715
        %v4821 = vpack.c.bf16 %v4718, %v4717
        %v4822 = vpack.c.bf16 %v4720, %v4719
        %v4823 = vpack.c.bf16 %v4722, %v4721
        %v4824 = vpack.c.bf16 %v4724, %v4723
        %v4825 = vpack.c.bf16 %v4726, %v4725
        %4826 = vmatpush.bf16.msra.mxu0 %v4825
        %4827 = vmatpush.bf16.msra.mxu0 %v4824
        %4828 = vmatpush.bf16.msra.mxu0 %v4823
        %4829 = vmatpush.bf16.msra.mxu0 %v4822
        %4830 = vmatpush.bf16.msra.mxu0 %v4821
        %4831 = vmatpush.bf16.msra.mxu0 %v4820
        %4832 = vmatpush.bf16.msra.mxu0 %v4819
        %4833 = vmatpush.bf16.msra.mxu0 %v4818
        %4834 = vmatmul.bf16.gmra.mxu0 %v4794
        %v4835 = vpop.f32.mrf.mxu0
        %v4836 = vadd.f32 0.0, %v4835
        %v4837 = vpop.f32.mrf.mxu0
        %v4838 = vadd.f32 0.0, %v4837
        %4839 = vmatmul.bf16.gmra.mxu0 %v4795
        %v4840 = vpop.f32.mrf.mxu0
        %v4841 = vadd.f32 0.0, %v4840
        %v4842 = vpop.f32.mrf.mxu0
        %v4843 = vadd.f32 0.0, %v4842
        %4844 = vmatmul.bf16.gmra.mxu0 %v4796
        %v4845 = vpop.f32.mrf.mxu0
        %v4846 = vadd.f32 0.0, %v4845
        %v4847 = vpop.f32.mrf.mxu0
        %v4848 = vadd.f32 0.0, %v4847
        %4849 = vmatmul.bf16.gmra.mxu0 %v4797
        %v4850 = vpop.f32.mrf.mxu0
        %v4851 = vadd.f32 0.0, %v4850
        %v4852 = vpop.f32.mrf.mxu0
        %v4853 = vadd.f32 0.0, %v4852
        %4854 = vmatmul.bf16.gmra.mxu0 %v4798
        %v4855 = vpop.f32.mrf.mxu0
        %v4856 = vadd.f32 0.0, %v4855
        %v4857 = vpop.f32.mrf.mxu0
        %v4858 = vadd.f32 0.0, %v4857
        %4859 = vmatmul.bf16.gmra.mxu0 %v4799
        %v4860 = vpop.f32.mrf.mxu0
        %v4861 = vadd.f32 0.0, %v4860
        %v4862 = vpop.f32.mrf.mxu0
        %v4863 = vadd.f32 0.0, %v4862
        %4864 = vmatmul.bf16.gmra.mxu0 %v4800
        %v4865 = vpop.f32.mrf.mxu0
        %v4866 = vadd.f32 0.0, %v4865
        %v4867 = vpop.f32.mrf.mxu0
        %v4868 = vadd.f32 0.0, %v4867
        %4869 = vmatmul.bf16.gmra.mxu0 %v4801
        %v4870 = vpop.f32.mrf.mxu0
        %v4871 = vadd.f32 0.0, %v4870
        %v4872 = vpop.f32.mrf.mxu0
        %v4873 = vadd.f32 0.0, %v4872
        %4874 = vdwg.mxu0
        %v4875 = vadd.f32 %v4802, %v4836
        %v4876 = vadd.f32 %v4803, %v4838
        %v4877 = vadd.f32 %v4804, %v4841
        %v4878 = vadd.f32 %v4805, %v4843
        %v4879 = vadd.f32 %v4806, %v4846
        %v4880 = vadd.f32 %v4807, %v4848
        %v4881 = vadd.f32 %v4808, %v4851
        %v4882 = vadd.f32 %v4809, %v4853
        %v4883 = vadd.f32 %v4810, %v4856
        %v4884 = vadd.f32 %v4811, %v4858
        %v4885 = vadd.f32 %v4812, %v4861
        %v4886 = vadd.f32 %v4813, %v4863
        %v4887 = vadd.f32 %v4814, %v4866
        %v4888 = vadd.f32 %v4815, %v4868
        %v4889 = vadd.f32 %v4816, %v4871
        %v4890 = vadd.f32 %v4817, %v4873
        %4891 = vst [vmem:[#allocation3] sm:$0xff] %v4875
        %4892 = vst [vmem:[#allocation3 + $0x8] sm:$0xff] %v4876
        %4893 = vst [vmem:[#allocation3 + $0x10] sm:$0xff] %v4877
        %4894 = vst [vmem:[#allocation3 + $0x18] sm:$0xff] %v4878
        %4895 = vst [vmem:[#allocation3 + $0x20] sm:$0xff] %v4879
        %4896 = vst [vmem:[#allocation3 + $0x28] sm:$0xff] %v4880
        %4897 = vst [vmem:[#allocation3 + $0x30] sm:$0xff] %v4881
        %4898 = vst [vmem:[#allocation3 + $0x38] sm:$0xff] %v4882
        %4899 = vst [vmem:[#allocation3 + $0x40] sm:$0xff] %v4883
        %4900 = vst [vmem:[#allocation3 + $0x48] sm:$0xff] %v4884
        %4901 = vst [vmem:[#allocation3 + $0x50] sm:$0xff] %v4885
        %4902 = vst [vmem:[#allocation3 + $0x58] sm:$0xff] %v4886
        %4903 = vst [vmem:[#allocation3 + $0x60] sm:$0xff] %v4887
        %4904 = vst [vmem:[#allocation3 + $0x68] sm:$0xff] %v4888
        %4905 = vst [vmem:[#allocation3 + $0x70] sm:$0xff] %v4889
        %4906 = vst [vmem:[#allocation3 + $0x78] sm:$0xff] %v4890
        // Predicated region
        $region109: #{tpu_custom_call.1} parent=79 // pred_check
          %p4907 = pneg %p898
        $region110: #{tpu_custom_call.1} parent=79 // pred_check_branch
          %4909 = sbr.rel (%p4907) target = $region112
        $region111: #{tpu_custom_call.1} parent=79 // pred_region
          %v4910 = vld [vmem:[#allocation3] sm:$0xff]
          %v4911 = vld [vmem:[#allocation3 + $0x8] sm:$0xff]
          %v4912 = vld [vmem:[#allocation3 + $0x10] sm:$0xff]
          %v4913 = vld [vmem:[#allocation3 + $0x18] sm:$0xff]
          %v4914 = vld [vmem:[#allocation3 + $0x20] sm:$0xff]
          %v4915 = vld [vmem:[#allocation3 + $0x28] sm:$0xff]
          %v4916 = vld [vmem:[#allocation3 + $0x30] sm:$0xff]
          %v4917 = vld [vmem:[#allocation3 + $0x38] sm:$0xff]
          %v4918 = vld [vmem:[#allocation3 + $0x40] sm:$0xff]
          %v4919 = vld [vmem:[#allocation3 + $0x48] sm:$0xff]
          %v4920 = vld [vmem:[#allocation3 + $0x50] sm:$0xff]
          %v4921 = vld [vmem:[#allocation3 + $0x58] sm:$0xff]
          %v4922 = vld [vmem:[#allocation3 + $0x60] sm:$0xff]
          %v4923 = vld [vmem:[#allocation3 + $0x68] sm:$0xff]
          %v4924 = vld [vmem:[#allocation3 + $0x70] sm:$0xff]
          %v4925 = vld [vmem:[#allocation3 + $0x78] sm:$0xff]
          %v4926 = vld [vmem:[%s708] sm:$0xff]
          %v4927 = vld [vmem:[%s708 + $0x8] sm:$0xff]
          %v4928 = vld [vmem:[%s708 + $0x10] sm:$0xff]
          %v4929 = vld [vmem:[%s708 + $0x18] sm:$0xff]
          %v4930 = vld [vmem:[%s708 + $0x20] sm:$0xff]
          %v4931 = vld [vmem:[%s708 + $0x28] sm:$0xff]
          %v4932 = vld [vmem:[%s708 + $0x30] sm:$0xff]
          %v4933 = vld [vmem:[%s708 + $0x38] sm:$0xff]
          %v4934 = vld [vmem:[%s708 + $0x40] sm:$0xff]
          %v4935 = vld [vmem:[%s708 + $0x48] sm:$0xff]
          %v4936 = vld [vmem:[%s708 + $0x50] sm:$0xff]
          %v4937 = vld [vmem:[%s708 + $0x58] sm:$0xff]
          %v4938 = vld [vmem:[%s708 + $0x60] sm:$0xff]
          %v4939 = vld [vmem:[%s708 + $0x68] sm:$0xff]
          %v4940 = vld [vmem:[%s708 + $0x70] sm:$0xff]
          %v4941 = vld [vmem:[%s708 + $0x78] sm:$0xff]
          %v4942 = vld [vmem:[%s893] sm:$0x1]
          %v4944 = vperm.slane %v4942, 0
          %4946 = vmatpush.msra.mxu0 %v4941
          %4947 = vmatpush.msra.mxu0 %v4940
          %4948 = vmatpush.msra.mxu0 %v4939
          %4949 = vmatpush.msra.mxu0 %v4938
          %4950 = vmatpush.msra.mxu0 %v4937
          %4951 = vmatpush.msra.mxu0 %v4936
          %4952 = vmatpush.msra.mxu0 %v4935
          %4953 = vmatpush.msra.mxu0 %v4934
          %4954 = vmatpush.msra.mxu0 %v4933
          %4955 = vmatpush.msra.mxu0 %v4932
          %4956 = vmatpush.msra.mxu0 %v4931
          %4957 = vmatpush.msra.mxu0 %v4930
          %4958 = vmatpush.msra.mxu0 %v4929
          %4959 = vmatpush.msra.mxu0 %v4928
          %4960 = vmatpush.msra.mxu0 %v4927
          %4961 = vmatpush.msra.mxu0 %v4926
          %4962 = vmatmul.f32.gmra.mxu0 %v4910
          %v4963 = vpop.f32.mrf.mxu0
          %v4964 = vadd.f32 %v4944, %v4963
          %4965 = vmatmul.f32.gmra.mxu0 %v4911
          %v4966 = vpop.f32.mrf.mxu0
          %v4967 = vadd.f32 %v4944, %v4966
          %4968 = vmatmul.f32.gmra.mxu0 %v4912
          %v4969 = vpop.f32.mrf.mxu0
          %v4970 = vadd.f32 %v4944, %v4969
          %4971 = vmatmul.f32.gmra.mxu0 %v4913
          %v4972 = vpop.f32.mrf.mxu0
          %v4973 = vadd.f32 %v4944, %v4972
          %4974 = vmatmul.f32.gmra.mxu0 %v4914
          %v4975 = vpop.f32.mrf.mxu0
          %v4976 = vadd.f32 %v4944, %v4975
          %4977 = vmatmul.f32.gmra.mxu0 %v4915
          %v4978 = vpop.f32.mrf.mxu0
          %v4979 = vadd.f32 %v4944, %v4978
          %4980 = vmatmul.f32.gmra.mxu0 %v4916
          %v4981 = vpop.f32.mrf.mxu0
          %v4982 = vadd.f32 %v4944, %v4981
          %4983 = vmatmul.f32.gmra.mxu0 %v4917
          %v4984 = vpop.f32.mrf.mxu0
          %v4985 = vadd.f32 %v4944, %v4984
          %4986 = vmatmul.f32.gmra.mxu0 %v4918
          %v4987 = vpop.f32.mrf.mxu0
          %v4988 = vadd.f32 %v4944, %v4987
          %4989 = vmatmul.f32.gmra.mxu0 %v4919
          %v4990 = vpop.f32.mrf.mxu0
          %v4991 = vadd.f32 %v4944, %v4990
          %4992 = vmatmul.f32.gmra.mxu0 %v4920
          %v4993 = vpop.f32.mrf.mxu0
          %v4994 = vadd.f32 %v4944, %v4993
          %4995 = vmatmul.f32.gmra.mxu0 %v4921
          %v4996 = vpop.f32.mrf.mxu0
          %v4997 = vadd.f32 %v4944, %v4996
          %4998 = vmatmul.f32.gmra.mxu0 %v4922
          %v4999 = vpop.f32.mrf.mxu0
          %v5000 = vadd.f32 %v4944, %v4999
          %5001 = vmatmul.f32.gmra.mxu0 %v4923
          %v5002 = vpop.f32.mrf.mxu0
          %v5003 = vadd.f32 %v4944, %v5002
          %5004 = vmatmul.f32.gmra.mxu0 %v4924
          %v5005 = vpop.f32.mrf.mxu0
          %v5006 = vadd.f32 %v4944, %v5005
          %5007 = vmatmul.f32.gmra.mxu0 %v4925
          %v5008 = vpop.f32.mrf.mxu0
          %v5009 = vadd.f32 %v4944, %v5008
          %5010 = vdwg.mxu0
          %v5011 = vmax.f32 %v4964, 0.0
          %v5012 = vmax.f32 %v4967, 0.0
          %v5013 = vmax.f32 %v4970, 0.0
          %v5014 = vmax.f32 %v4973, 0.0
          %v5015 = vmax.f32 %v4976, 0.0
          %v5016 = vmax.f32 %v4979, 0.0
          %v5017 = vmax.f32 %v4982, 0.0
          %v5018 = vmax.f32 %v4985, 0.0
          %v5019 = vmax.f32 %v4988, 0.0
          %v5020 = vmax.f32 %v4991, 0.0
          %v5021 = vmax.f32 %v4994, 0.0
          %v5022 = vmax.f32 %v4997, 0.0
          %v5023 = vmax.f32 %v5000, 0.0
          %v5024 = vmax.f32 %v5003, 0.0
          %v5025 = vmax.f32 %v5006, 0.0
          %v5026 = vmax.f32 %v5009, 0.0
          %vm5027 = vcmp.ne.f32.partialorder %v4964, %v4964
          %vm5028 = vcmp.ne.f32.partialorder %v4967, %v4967
          %vm5029 = vcmp.ne.f32.partialorder %v4970, %v4970
          %vm5030 = vcmp.ne.f32.partialorder %v4973, %v4973
          %vm5031 = vcmp.ne.f32.partialorder %v4976, %v4976
          %vm5032 = vcmp.ne.f32.partialorder %v4979, %v4979
          %vm5033 = vcmp.ne.f32.partialorder %v4982, %v4982
          %vm5034 = vcmp.ne.f32.partialorder %v4985, %v4985
          %vm5035 = vcmp.ne.f32.partialorder %v4988, %v4988
          %vm5036 = vcmp.ne.f32.partialorder %v4991, %v4991
          %vm5037 = vcmp.ne.f32.partialorder %v4994, %v4994
          %vm5038 = vcmp.ne.f32.partialorder %v4997, %v4997
          %vm5039 = vcmp.ne.f32.partialorder %v5000, %v5000
          %vm5040 = vcmp.ne.f32.partialorder %v5003, %v5003
          %vm5041 = vcmp.ne.f32.partialorder %v5006, %v5006
          %vm5042 = vcmp.ne.f32.partialorder %v5009, %v5009
          %v5043 = vadd.f32 %v4964, 0.0
          %v5044 = vadd.f32 %v4967, 0.0
          %v5045 = vadd.f32 %v4970, 0.0
          %v5046 = vadd.f32 %v4973, 0.0
          %v5047 = vadd.f32 %v4976, 0.0
          %v5048 = vadd.f32 %v4979, 0.0
          %v5049 = vadd.f32 %v4982, 0.0
          %v5050 = vadd.f32 %v4985, 0.0
          %v5051 = vadd.f32 %v4988, 0.0
          %v5052 = vadd.f32 %v4991, 0.0
          %v5053 = vadd.f32 %v4994, 0.0
          %v5054 = vadd.f32 %v4997, 0.0
          %v5055 = vadd.f32 %v5000, 0.0
          %v5056 = vadd.f32 %v5003, 0.0
          %v5057 = vadd.f32 %v5006, 0.0
          %v5058 = vadd.f32 %v5009, 0.0
          %v5059 = vand.u32 2147483647, %v4964
          %v5060 = vand.u32 2147483647, %v4967
          %v5061 = vand.u32 2147483647, %v4970
          %v5062 = vand.u32 2147483647, %v4973
          %v5063 = vand.u32 2147483647, %v4976
          %v5064 = vand.u32 2147483647, %v4979
          %v5065 = vand.u32 2147483647, %v4982
          %v5066 = vand.u32 2147483647, %v4985
          %v5067 = vand.u32 2147483647, %v4988
          %v5068 = vand.u32 2147483647, %v4991
          %v5069 = vand.u32 2147483647, %v4994
          %v5070 = vand.u32 2147483647, %v4997
          %v5071 = vand.u32 2147483647, %v5000
          %v5072 = vand.u32 2147483647, %v5003
          %v5073 = vand.u32 2147483647, %v5006
          %v5074 = vand.u32 2147483647, %v5009
          %v5075 = vsub.f32 0.0, %v5059
          %v5076 = vsub.f32 0.0, %v5060
          %v5077 = vsub.f32 0.0, %v5061
          %v5078 = vsub.f32 0.0, %v5062
          %v5079 = vsub.f32 0.0, %v5063
          %v5080 = vsub.f32 0.0, %v5064
          %v5081 = vsub.f32 0.0, %v5065
          %v5082 = vsub.f32 0.0, %v5066
          %v5083 = vsub.f32 0.0, %v5067
          %v5084 = vsub.f32 0.0, %v5068
          %v5085 = vsub.f32 0.0, %v5069
          %v5086 = vsub.f32 0.0, %v5070
          %v5087 = vsub.f32 0.0, %v5071
          %v5088 = vsub.f32 0.0, %v5072
          %v5089 = vsub.f32 0.0, %v5073
          %v5090 = vsub.f32 0.0, %v5074
          %v5091 = vmul.f32 %v5075, 1.442695
          %v5092 = vpow.pop %v5091
          %v5093 = vmul.f32 %v5076, 1.442695
          %v5094 = vpow.pop %v5093
          %v5095 = vmul.f32 %v5077, 1.442695
          %v5096 = vpow.pop %v5095
          %v5097 = vmul.f32 %v5078, 1.442695
          %v5098 = vpow.pop %v5097
          %v5099 = vmul.f32 %v5079, 1.442695
          %v5100 = vpow.pop %v5099
          %v5101 = vmul.f32 %v5080, 1.442695
          %v5102 = vpow.pop %v5101
          %v5103 = vmul.f32 %v5081, 1.442695
          %v5104 = vpow.pop %v5103
          %v5105 = vmul.f32 %v5082, 1.442695
          %v5106 = vpow.pop %v5105
          %v5107 = vmul.f32 %v5083, 1.442695
          %v5108 = vpow.pop %v5107
          %v5109 = vmul.f32 %v5084, 1.442695
          %v5110 = vpow.pop %v5109
          %v5111 = vmul.f32 %v5085, 1.442695
          %v5112 = vpow.pop %v5111
          %v5113 = vmul.f32 %v5086, 1.442695
          %v5114 = vpow.pop %v5113
          %v5115 = vmul.f32 %v5087, 1.442695
          %v5116 = vpow.pop %v5115
          %v5117 = vmul.f32 %v5088, 1.442695
          %v5118 = vpow.pop %v5117
          %v5119 = vmul.f32 %v5089, 1.442695
          %v5120 = vpow.pop %v5119
          %v5121 = vmul.f32 %v5090, 1.442695
          %v5122 = vpow.pop %v5121
          %v5123 = vadd.f32 %v5092, 1.0
          %v5124 = vlog2.pop %v5123
          %v5125 = vmul.f32 %v5124, 0.6931472
          %v5126 = vmul.f32 -0.5, %v5092
          %v5127 = vadd.f32 %v5126, 1.0
          %v5128 = vmul.f32 %v5127, %v5092
          %v5129 = vand.u32 2147483647, %v5092
          %vm5130 = vcmp.lt.f32.partialorder %v5129, 0.0004427343
          %v5131 = vsel %vm5130, %v5128, %v5125
          %v5132 = vadd.f32 %v5094, 1.0
          %v5133 = vlog2.pop %v5132
          %v5134 = vmul.f32 %v5133, 0.6931472
          %v5135 = vmul.f32 -0.5, %v5094
          %v5136 = vadd.f32 %v5135, 1.0
          %v5137 = vmul.f32 %v5136, %v5094
          %v5138 = vand.u32 2147483647, %v5094
          %vm5139 = vcmp.lt.f32.partialorder %v5138, 0.0004427343
          %v5140 = vsel %vm5139, %v5137, %v5134
          %v5141 = vadd.f32 %v5096, 1.0
          %v5142 = vlog2.pop %v5141
          %v5143 = vmul.f32 %v5142, 0.6931472
          %v5144 = vmul.f32 -0.5, %v5096
          %v5145 = vadd.f32 %v5144, 1.0
          %v5146 = vmul.f32 %v5145, %v5096
          %v5147 = vand.u32 2147483647, %v5096
          %vm5148 = vcmp.lt.f32.partialorder %v5147, 0.0004427343
          %v5149 = vsel %vm5148, %v5146, %v5143
          %v5150 = vadd.f32 %v5098, 1.0
          %v5151 = vlog2.pop %v5150
          %v5152 = vmul.f32 %v5151, 0.6931472
          %v5153 = vmul.f32 -0.5, %v5098
          %v5154 = vadd.f32 %v5153, 1.0
          %v5155 = vmul.f32 %v5154, %v5098
          %v5156 = vand.u32 2147483647, %v5098
          %vm5157 = vcmp.lt.f32.partialorder %v5156, 0.0004427343
          %v5158 = vsel %vm5157, %v5155, %v5152
          %v5159 = vadd.f32 %v5100, 1.0
          %v5160 = vlog2.pop %v5159
          %v5161 = vmul.f32 %v5160, 0.6931472
          %v5162 = vmul.f32 -0.5, %v5100
          %v5163 = vadd.f32 %v5162, 1.0
          %v5164 = vmul.f32 %v5163, %v5100
          %v5165 = vand.u32 2147483647, %v5100
          %vm5166 = vcmp.lt.f32.partialorder %v5165, 0.0004427343
          %v5167 = vsel %vm5166, %v5164, %v5161
          %v5168 = vadd.f32 %v5102, 1.0
          %v5169 = vlog2.pop %v5168
          %v5170 = vmul.f32 %v5169, 0.6931472
          %v5171 = vmul.f32 -0.5, %v5102
          %v5172 = vadd.f32 %v5171, 1.0
          %v5173 = vmul.f32 %v5172, %v5102
          %v5174 = vand.u32 2147483647, %v5102
          %vm5175 = vcmp.lt.f32.partialorder %v5174, 0.0004427343
          %v5176 = vsel %vm5175, %v5173, %v5170
          %v5177 = vadd.f32 %v5104, 1.0
          %v5178 = vlog2.pop %v5177
          %v5179 = vmul.f32 %v5178, 0.6931472
          %v5180 = vmul.f32 -0.5, %v5104
          %v5181 = vadd.f32 %v5180, 1.0
          %v5182 = vmul.f32 %v5181, %v5104
          %v5183 = vand.u32 2147483647, %v5104
          %vm5184 = vcmp.lt.f32.partialorder %v5183, 0.0004427343
          %v5185 = vsel %vm5184, %v5182, %v5179
          %v5186 = vadd.f32 %v5106, 1.0
          %v5187 = vlog2.pop %v5186
          %v5188 = vmul.f32 %v5187, 0.6931472
          %v5189 = vmul.f32 -0.5, %v5106
          %v5190 = vadd.f32 %v5189, 1.0
          %v5191 = vmul.f32 %v5190, %v5106
          %v5192 = vand.u32 2147483647, %v5106
          %vm5193 = vcmp.lt.f32.partialorder %v5192, 0.0004427343
          %v5194 = vsel %vm5193, %v5191, %v5188
          %v5195 = vadd.f32 %v5108, 1.0
          %v5196 = vlog2.pop %v5195
          %v5197 = vmul.f32 %v5196, 0.6931472
          %v5198 = vmul.f32 -0.5, %v5108
          %v5199 = vadd.f32 %v5198, 1.0
          %v5200 = vmul.f32 %v5199, %v5108
          %v5201 = vand.u32 2147483647, %v5108
          %vm5202 = vcmp.lt.f32.partialorder %v5201, 0.0004427343
          %v5203 = vsel %vm5202, %v5200, %v5197
          %v5204 = vadd.f32 %v5110, 1.0
          %v5205 = vlog2.pop %v5204
          %v5206 = vmul.f32 %v5205, 0.6931472
          %v5207 = vmul.f32 -0.5, %v5110
          %v5208 = vadd.f32 %v5207, 1.0
          %v5209 = vmul.f32 %v5208, %v5110
          %v5210 = vand.u32 2147483647, %v5110
          %vm5211 = vcmp.lt.f32.partialorder %v5210, 0.0004427343
          %v5212 = vsel %vm5211, %v5209, %v5206
          %v5213 = vadd.f32 %v5112, 1.0
          %v5214 = vlog2.pop %v5213
          %v5215 = vmul.f32 %v5214, 0.6931472
          %v5216 = vmul.f32 -0.5, %v5112
          %v5217 = vadd.f32 %v5216, 1.0
          %v5218 = vmul.f32 %v5217, %v5112
          %v5219 = vand.u32 2147483647, %v5112
          %vm5220 = vcmp.lt.f32.partialorder %v5219, 0.0004427343
          %v5221 = vsel %vm5220, %v5218, %v5215
          %v5222 = vadd.f32 %v5114, 1.0
          %v5223 = vlog2.pop %v5222
          %v5224 = vmul.f32 %v5223, 0.6931472
          %v5225 = vmul.f32 -0.5, %v5114
          %v5226 = vadd.f32 %v5225, 1.0
          %v5227 = vmul.f32 %v5226, %v5114
          %v5228 = vand.u32 2147483647, %v5114
          %vm5229 = vcmp.lt.f32.partialorder %v5228, 0.0004427343
          %v5230 = vsel %vm5229, %v5227, %v5224
          %v5231 = vadd.f32 %v5116, 1.0
          %v5232 = vlog2.pop %v5231
          %v5233 = vmul.f32 %v5232, 0.6931472
          %v5234 = vmul.f32 -0.5, %v5116
          %v5235 = vadd.f32 %v5234, 1.0
          %v5236 = vmul.f32 %v5235, %v5116
          %v5237 = vand.u32 2147483647, %v5116
          %vm5238 = vcmp.lt.f32.partialorder %v5237, 0.0004427343
          %v5239 = vsel %vm5238, %v5236, %v5233
          %v5240 = vadd.f32 %v5118, 1.0
          %v5241 = vlog2.pop %v5240
          %v5242 = vmul.f32 %v5241, 0.6931472
          %v5243 = vmul.f32 -0.5, %v5118
          %v5244 = vadd.f32 %v5243, 1.0
          %v5245 = vmul.f32 %v5244, %v5118
          %v5246 = vand.u32 2147483647, %v5118
          %vm5247 = vcmp.lt.f32.partialorder %v5246, 0.0004427343
          %v5248 = vsel %vm5247, %v5245, %v5242
          %v5249 = vadd.f32 %v5120, 1.0
          %v5250 = vlog2.pop %v5249
          %v5251 = vmul.f32 %v5250, 0.6931472
          %v5252 = vmul.f32 -0.5, %v5120
          %v5253 = vadd.f32 %v5252, 1.0
          %v5254 = vmul.f32 %v5253, %v5120
          %v5255 = vand.u32 2147483647, %v5120
          %vm5256 = vcmp.lt.f32.partialorder %v5255, 0.0004427343
          %v5257 = vsel %vm5256, %v5254, %v5251
          %v5258 = vadd.f32 %v5122, 1.0
          %v5259 = vlog2.pop %v5258
          %v5260 = vmul.f32 %v5259, 0.6931472
          %v5261 = vmul.f32 -0.5, %v5122
          %v5262 = vadd.f32 %v5261, 1.0
          %v5263 = vmul.f32 %v5262, %v5122
          %v5264 = vand.u32 2147483647, %v5122
          %vm5265 = vcmp.lt.f32.partialorder %v5264, 0.0004427343
          %v5266 = vsel %vm5265, %v5263, %v5260
          %v5267 = vadd.f32 %v5011, %v5131
          %v5268 = vadd.f32 %v5012, %v5140
          %v5269 = vadd.f32 %v5013, %v5149
          %v5270 = vadd.f32 %v5014, %v5158
          %v5271 = vadd.f32 %v5015, %v5167
          %v5272 = vadd.f32 %v5016, %v5176
          %v5273 = vadd.f32 %v5017, %v5185
          %v5274 = vadd.f32 %v5018, %v5194
          %v5275 = vadd.f32 %v5019, %v5203
          %v5276 = vadd.f32 %v5020, %v5212
          %v5277 = vadd.f32 %v5021, %v5221
          %v5278 = vadd.f32 %v5022, %v5230
          %v5279 = vadd.f32 %v5023, %v5239
          %v5280 = vadd.f32 %v5024, %v5248
          %v5281 = vadd.f32 %v5025, %v5257
          %v5282 = vadd.f32 %v5026, %v5266
          %v5283 = vsel %vm5027, %v5043, %v5267
          %v5284 = vsel %vm5028, %v5044, %v5268
          %v5285 = vsel %vm5029, %v5045, %v5269
          %v5286 = vsel %vm5030, %v5046, %v5270
          %v5287 = vsel %vm5031, %v5047, %v5271
          %v5288 = vsel %vm5032, %v5048, %v5272
          %v5289 = vsel %vm5033, %v5049, %v5273
          %v5290 = vsel %vm5034, %v5050, %v5274
          %v5291 = vsel %vm5035, %v5051, %v5275
          %v5292 = vsel %vm5036, %v5052, %v5276
          %v5293 = vsel %vm5037, %v5053, %v5277
          %v5294 = vsel %vm5038, %v5054, %v5278
          %v5295 = vsel %vm5039, %v5055, %v5279
          %v5296 = vsel %vm5040, %v5056, %v5280
          %v5297 = vsel %vm5041, %v5057, %v5281
          %v5298 = vsel %vm5042, %v5058, %v5282
          %v5299 = vsub.f32 %v5283, 0.6931472
          %v5300 = vsub.f32 %v5284, 0.6931472
          %v5301 = vsub.f32 %v5285, 0.6931472
          %v5302 = vsub.f32 %v5286, 0.6931472
          %v5303 = vsub.f32 %v5287, 0.6931472
          %v5304 = vsub.f32 %v5288, 0.6931472
          %v5305 = vsub.f32 %v5289, 0.6931472
          %v5306 = vsub.f32 %v5290, 0.6931472
          %v5307 = vsub.f32 %v5291, 0.6931472
          %v5308 = vsub.f32 %v5292, 0.6931472
          %v5309 = vsub.f32 %v5293, 0.6931472
          %v5310 = vsub.f32 %v5294, 0.6931472
          %v5311 = vsub.f32 %v5295, 0.6931472
          %v5312 = vsub.f32 %v5296, 0.6931472
          %v5313 = vsub.f32 %v5297, 0.6931472
          %v5314 = vsub.f32 %v5298, 0.6931472
          %v5315 = vld [vmem:[%s718] sm:$0xff]
          %v5316 = vld [vmem:[%s718 + $0x8] sm:$0xff]
          %v5317 = vld [vmem:[%s718 + $0x10] sm:$0xff]
          %v5318 = vld [vmem:[%s718 + $0x18] sm:$0xff]
          %v5319 = vld [vmem:[%s718 + $0x20] sm:$0xff]
          %v5320 = vld [vmem:[%s718 + $0x28] sm:$0xff]
          %v5321 = vld [vmem:[%s718 + $0x30] sm:$0xff]
          %v5322 = vld [vmem:[%s718 + $0x38] sm:$0xff]
          %v5323 = vld [vmem:[%s718 + $0x40] sm:$0xff]
          %v5324 = vld [vmem:[%s718 + $0x48] sm:$0xff]
          %v5325 = vld [vmem:[%s718 + $0x50] sm:$0xff]
          %v5326 = vld [vmem:[%s718 + $0x58] sm:$0xff]
          %v5327 = vld [vmem:[%s718 + $0x60] sm:$0xff]
          %v5328 = vld [vmem:[%s718 + $0x68] sm:$0xff]
          %v5329 = vld [vmem:[%s718 + $0x70] sm:$0xff]
          %v5330 = vld [vmem:[%s718 + $0x78] sm:$0xff]
          %v5331 = vld [vmem:[%s896] sm:$0x1]
          %v5333 = vperm.slane %v5331, 0
          %5335 = vmatpush.msra.mxu0 %v5330
          %5336 = vmatpush.msra.mxu0 %v5329
          %5337 = vmatpush.msra.mxu0 %v5328
          %5338 = vmatpush.msra.mxu0 %v5327
          %5339 = vmatpush.msra.mxu0 %v5326
          %5340 = vmatpush.msra.mxu0 %v5325
          %5341 = vmatpush.msra.mxu0 %v5324
          %5342 = vmatpush.msra.mxu0 %v5323
          %5343 = vmatpush.msra.mxu0 %v5322
          %5344 = vmatpush.msra.mxu0 %v5321
          %5345 = vmatpush.msra.mxu0 %v5320
          %5346 = vmatpush.msra.mxu0 %v5319
          %5347 = vmatpush.msra.mxu0 %v5318
          %5348 = vmatpush.msra.mxu0 %v5317
          %5349 = vmatpush.msra.mxu0 %v5316
          %5350 = vmatpush.msra.mxu0 %v5315
          %5351 = vmatmul.f32.gmra.mxu0 %v5299
          %v5352 = vpop.f32.mrf.mxu0
          %v5353 = vadd.f32 %v5333, %v5352
          %5354 = vmatmul.f32.gmra.mxu0 %v5300
          %v5355 = vpop.f32.mrf.mxu0
          %v5356 = vadd.f32 %v5333, %v5355
          %5357 = vmatmul.f32.gmra.mxu0 %v5301
          %v5358 = vpop.f32.mrf.mxu0
          %v5359 = vadd.f32 %v5333, %v5358
          %5360 = vmatmul.f32.gmra.mxu0 %v5302
          %v5361 = vpop.f32.mrf.mxu0
          %v5362 = vadd.f32 %v5333, %v5361
          %5363 = vmatmul.f32.gmra.mxu0 %v5303
          %v5364 = vpop.f32.mrf.mxu0
          %v5365 = vadd.f32 %v5333, %v5364
          %5366 = vmatmul.f32.gmra.mxu0 %v5304
          %v5367 = vpop.f32.mrf.mxu0
          %v5368 = vadd.f32 %v5333, %v5367
          %5369 = vmatmul.f32.gmra.mxu0 %v5305
          %v5370 = vpop.f32.mrf.mxu0
          %v5371 = vadd.f32 %v5333, %v5370
          %5372 = vmatmul.f32.gmra.mxu0 %v5306
          %v5373 = vpop.f32.mrf.mxu0
          %v5374 = vadd.f32 %v5333, %v5373
          %5375 = vmatmul.f32.gmra.mxu0 %v5307
          %v5376 = vpop.f32.mrf.mxu0
          %v5377 = vadd.f32 %v5333, %v5376
          %5378 = vmatmul.f32.gmra.mxu0 %v5308
          %v5379 = vpop.f32.mrf.mxu0
          %v5380 = vadd.f32 %v5333, %v5379
          %5381 = vmatmul.f32.gmra.mxu0 %v5309
          %v5382 = vpop.f32.mrf.mxu0
          %v5383 = vadd.f32 %v5333, %v5382
          %5384 = vmatmul.f32.gmra.mxu0 %v5310
          %v5385 = vpop.f32.mrf.mxu0
          %v5386 = vadd.f32 %v5333, %v5385
          %5387 = vmatmul.f32.gmra.mxu0 %v5311
          %v5388 = vpop.f32.mrf.mxu0
          %v5389 = vadd.f32 %v5333, %v5388
          %5390 = vmatmul.f32.gmra.mxu0 %v5312
          %v5391 = vpop.f32.mrf.mxu0
          %v5392 = vadd.f32 %v5333, %v5391
          %5393 = vmatmul.f32.gmra.mxu0 %v5313
          %v5394 = vpop.f32.mrf.mxu0
          %v5395 = vadd.f32 %v5333, %v5394
          %5396 = vmatmul.f32.gmra.mxu0 %v5314
          %v5397 = vpop.f32.mrf.mxu0
          %v5398 = vadd.f32 %v5333, %v5397
          %5399 = vdwg.mxu0
          %v5400 = vld [vmem:[%s836] sm:$0xff]
          %v5401 = vld [vmem:[%s836 + $0x8] sm:$0xff]
          %v5402 = vld [vmem:[%s836 + $0x10] sm:$0xff]
          %v5403 = vld [vmem:[%s836 + $0x18] sm:$0xff]
          %v5404 = vld [vmem:[%s836 + $0x20] sm:$0xff]
          %v5405 = vld [vmem:[%s836 + $0x28] sm:$0xff]
          %v5406 = vld [vmem:[%s836 + $0x30] sm:$0xff]
          %v5407 = vld [vmem:[%s836 + $0x38] sm:$0xff]
          %v5408 = vld [vmem:[%s836 + $0x40] sm:$0xff]
          %v5409 = vld [vmem:[%s836 + $0x48] sm:$0xff]
          %v5410 = vld [vmem:[%s836 + $0x50] sm:$0xff]
          %v5411 = vld [vmem:[%s836 + $0x58] sm:$0xff]
          %v5412 = vld [vmem:[%s836 + $0x60] sm:$0xff]
          %v5413 = vld [vmem:[%s836 + $0x68] sm:$0xff]
          %v5414 = vld [vmem:[%s836 + $0x70] sm:$0xff]
          %v5415 = vld [vmem:[%s836 + $0x78] sm:$0xff]
          %v5416 = vadd.f32 %v5400, %v5353
          %v5417 = vadd.f32 %v5401, %v5356
          %v5418 = vadd.f32 %v5402, %v5359
          %v5419 = vadd.f32 %v5403, %v5362
          %v5420 = vadd.f32 %v5404, %v5365
          %v5421 = vadd.f32 %v5405, %v5368
          %v5422 = vadd.f32 %v5406, %v5371
          %v5423 = vadd.f32 %v5407, %v5374
          %v5424 = vadd.f32 %v5408, %v5377
          %v5425 = vadd.f32 %v5409, %v5380
          %v5426 = vadd.f32 %v5410, %v5383
          %v5427 = vadd.f32 %v5411, %v5386
          %v5428 = vadd.f32 %v5412, %v5389
          %v5429 = vadd.f32 %v5413, %v5392
          %v5430 = vadd.f32 %v5414, %v5395
          %v5431 = vadd.f32 %v5415, %v5398
          %5432 = vst [vmem:[%s836] sm:$0xff] %v5416
          %5433 = vst [vmem:[%s836 + $0x8] sm:$0xff] %v5417
          %5434 = vst [vmem:[%s836 + $0x10] sm:$0xff] %v5418
          %5435 = vst [vmem:[%s836 + $0x18] sm:$0xff] %v5419
          %5436 = vst [vmem:[%s836 + $0x20] sm:$0xff] %v5420
          %5437 = vst [vmem:[%s836 + $0x28] sm:$0xff] %v5421
          %5438 = vst [vmem:[%s836 + $0x30] sm:$0xff] %v5422
          %5439 = vst [vmem:[%s836 + $0x38] sm:$0xff] %v5423
          %5440 = vst [vmem:[%s836 + $0x40] sm:$0xff] %v5424
          %5441 = vst [vmem:[%s836 + $0x48] sm:$0xff] %v5425
          %5442 = vst [vmem:[%s836 + $0x50] sm:$0xff] %v5426
          %5443 = vst [vmem:[%s836 + $0x58] sm:$0xff] %v5427
          %5444 = vst [vmem:[%s836 + $0x60] sm:$0xff] %v5428
          %5445 = vst [vmem:[%s836 + $0x68] sm:$0xff] %v5429
          %5446 = vst [vmem:[%s836 + $0x70] sm:$0xff] %v5430
          %5447 = vst [vmem:[%s836 + $0x78] sm:$0xff] %v5431
        $region112: #{tpu_custom_call.1} parent=79 // pred_fallthru
          _
        %s5448 = sand.u32 %s456, 1
        %s5449 = scalar_lea.sflag [#allocation6], %s5448
        %s5450 = sand.u32 %s456, 1
        %s5451 = smul.addr %s5450, 128
        %s5452 = scalar_lea.vmem [#allocation13], %s5451
        // Predicated region
        $region113: #{tpu_custom_call.1} parent=79 // pred_check
          %p5453 = pneg %p466
        $region114: #{tpu_custom_call.1} parent=79 // pred_check_branch
          %5455 = sbr.rel (%p5453) target = $region116
        $region115: #{tpu_custom_call.1} parent=79 // pred_region
          %5457 = vsyncadd %s5449, 0
          %s5458 = smul.addr %s41, 16
          %s5459 = smul.addr %s5458, 8
          %s5460 = scalar_lea.hbm %s15, %s5459
          %s5461 = sshll.u32 %s5452, 4
          %s5462 = int_to_ptr.vmem [resolvable:$true] %s5461
          %s5463 = sshll.u32 %s5460, 4
          %s5464 = int_to_ptr.hbm [resolvable:$true] %s5463
          %5469 = dma.vmem_to_hbm [thread:$0]  %s5462, 2048, %s5464, %s5449, 128, 128, 8
        $region116: #{tpu_custom_call.1} parent=79 // pred_fallthru
          _
      $region80: #{tpu_custom_call.1} parent=5 // pred_fallthru
        _
      %p5470 = scmp.le.s32.totalorder 2, %s31
      // Predicated region
      $region117: #{tpu_custom_call.1} parent=5 // pred_check
        %p5471 = pneg %p5470
      $region118: #{tpu_custom_call.1} parent=5 // pred_check_branch
        %5473 = sbr.rel (%p5471) target = $region120
      $region119: #{tpu_custom_call.1} parent=5 // pred_region
        %s5474 = ssub.s32 %s31, 2
        // Predicated region
        $region121: #{tpu_custom_call.1} parent=119 // pred_check
          %p5475 = pneg %p472
        $region122: #{tpu_custom_call.1} parent=119 // pred_check_branch
          %5477 = sbr.rel (%p5475) target = $region124
        $region123: #{tpu_custom_call.1} parent=119 // pred_region
          %s5478 = sand.u32 %s457, 1
          %s5479 = scalar_lea.sflag [#allocation6], %s5478
          %s5480 = sand.u32 %s457, 1
          %s5481 = smul.addr %s5480, 128
          %s5482 = scalar_lea.vmem [#allocation13], %s5481
          %5484 = dma.done %s5479, 2048
        $region124: #{tpu_custom_call.1} parent=119 // pred_fallthru
          _
      $region120: #{tpu_custom_call.1} parent=5 // pred_fallthru
        _
    $region6: #{tpu_custom_call.1} parent=1 // loop_footer
      %s35 = sadd.s32 1, %s31
    $region7: #{tpu_custom_call.1} parent=1 // loop_footer_branch
      %30 = sbr.rel target = $region3
    $region8: #{tpu_custom_call.1} parent=1 // loop_exit
      _
    %5485 = vsyncpa [#allocation5], 1
    %s5486 = scalar_lea.sflag [#allocation5], 1
    %5487 = vsyncpa %s5486, 1
    %5488 = vsyncpa [#allocation8], 1
    %s5489 = scalar_lea.sflag [#allocation8], 1
    %5490 = vsyncpa %s5489, 1
    %5491 = vsyncpa [#allocation11], 1
    %s5492 = scalar_lea.sflag [#allocation11], 1
    %5493 = vsyncpa %s5492, 1
    %5494 = vsyncpa [#allocation6], 1
    %s5495 = scalar_lea.sflag [#allocation6], 1
    %5496 = vsyncpa %s5495, 1

</llo_original>
